<compile_context>
chip_gen: v6e
topology: v6e:2x2x1
jax: 0.10.0
libtpu: 0.0.40
codegen_flags: <defaults>
</compile_context>

<pallas_src>
import numpy as np
import jax
import jax.numpy as jnp
from jax.experimental import pallas as pl
from jax.experimental.pallas import tpu as pltpu


KH = KW = 4          # conv kernel size used by make_crit_block
STRIDE = 2
BN_EPS = 1e-5
LEAK = 0.2


# ----------------------------------------------------------------------------
# Fused kernel
# ----------------------------------------------------------------------------
def _leaky(y):
    return jnp.where(y >= 0.0, y, LEAK * y)


def _conv_layer(a_bf16, s_ref, bd_ref, sh_ref):
    """Conv2d(k=4,s=2,pad folded)+BatchNorm(eval)+LeakyReLU on a row-major act.

    a_bf16 : (H, W*Cin) bf16 interior (un-padded) input rows.
    s_ref  : (KH, OH, H)  bf16 0/1 row-gather matrices; rows that would read a
             zero-pad image row are all-zero.
    bd_ref : (KH, W*Cin, OW*OC) bf16 banded conv-along-width weights with the
             BatchNorm scale folded in; taps that fall on zero-pad columns are
             simply absent.
    sh_ref : (1, OW*OC) f32 folded BatchNorm / conv-bias shift, tiled over OW.
    Returns (OH, OW*OC) f32 activation, column index = ow*OC + oc.
    """
    oh = s_ref.shape[1]
    owoc = bd_ref.shape[2]
    acc = jnp.zeros((oh, owoc), jnp.float32)
    for i in range(KH):
        rows = jnp.dot(s_ref[i], a_bf16, preferred_element_type=jnp.float32)
        acc = acc + jnp.dot(rows.astype(jnp.bfloat16), bd_ref[i],
                            preferred_element_type=jnp.float32)
    return _leaky(acc + sh_ref[...])


def _multidisc_kernel(a1_ref,
                      s1_ref, bd1_ref, sh1_ref,
                      s2_ref, bd2_ref, sh2_ref,
                      s3_ref, bd3_ref, sh3_ref,
                      s4_ref, bd4_ref, sh4_ref,
                      feat_ref,
                      wf1_ref, bf1_ref, wf2_ref, bf2_ref,
                      wh1o_ref, wh1f_ref, bh1_ref,
                      wh2_ref, bh2_ref, wh3_ref, bh3_ref,
                      out_ref):
    # ---- observation_critic: 4x (Conv2d + BatchNorm(eval) + LeakyReLU) ----
    y1 = _conv_layer(a1_ref[0], s1_ref, bd1_ref, sh1_ref)                 # (32,256)
    y2 = _conv_layer(y1.astype(jnp.bfloat16), s2_ref, bd2_ref, sh2_ref)   # (16,256)
    y3 = _conv_layer(y2.astype(jnp.bfloat16), s3_ref, bd3_ref, sh3_ref)   # ( 8,256)
    y4 = _conv_layer(y3.astype(jnp.bfloat16), s4_ref, bd4_ref, sh4_ref)   # ( 3, 96)

    # ---- feature_critic: (Linear + LReLU [+ Dropout = identity]) x 2 ----
    f = feat_ref[0]                                                       # (1, A+2)
    f = _leaky(jnp.dot(f, wf1_ref[...],
                       preferred_element_type=jnp.float32) + bf1_ref[...])
    f = _leaky(jnp.dot(f.astype(jnp.bfloat16), wf2_ref[...],
                       preferred_element_type=jnp.float32) + bf2_ref[...])

    # ---- combined_head ----
    # h1 = LReLU([obs_feat, feat] @ W1 + b1).  The obs half of W1 was
    # pre-permuted to NHWC order, so the conv features are consumed directly
    # row-by-row (3 tiny matmuls) -- no in-kernel flatten/transpose needed.
    h = jnp.dot(f.astype(jnp.bfloat16), wh1f_ref[...],
                preferred_element_type=jnp.float32) + bh1_ref[...]
    for oh in range(y4.shape[0]):
        h = h + jnp.dot(y4[oh:oh + 1, :].astype(jnp.bfloat16), wh1o_ref[oh],
                        preferred_element_type=jnp.float32)
    h = _leaky(h)
    h = _leaky(jnp.dot(h.astype(jnp.bfloat16), wh2_ref[...],
                       preferred_element_type=jnp.float32) + bh2_ref[...])
    o = jnp.dot(h.astype(jnp.bfloat16), wh3_ref[...],
                preferred_element_type=jnp.float32) + bh3_ref[...]
    out_ref[0] = 1.0 / (1.0 + jnp.exp(-o))                                # Sigmoid


# ----------------------------------------------------------------------------
# One-time parameter preparation (host side, outside the hot path)
# ----------------------------------------------------------------------------
def _conv_constants(w, b, gamma, beta, mean, var, H, W, pad, eps):
    """Constants so that Conv2d(k=4,s=2,pad)+BN(eval) == sum_i (S[i] @ A) @ BD[i].

    A is the interior (un-padded) activation (H, W*Cin); zero-padding is folded
    into S (all-zero rows) and BD (missing bands)."""
    OC, IC, KHt, KWt = w.shape
    OH = (H + 2 * pad - KHt) // STRIDE + 1
    OW = (W + 2 * pad - KWt) // STRIDE + 1

    scale = gamma / np.sqrt(var + eps)                 # BatchNorm eval fold
    shift = (b - mean) * scale + beta

    S = np.zeros((KHt, OH, H), np.float32)
    for i in range(KHt):
        for oh in range(OH):
            r = STRIDE * oh + i - pad
            if 0 <= r < H:
                S[i, oh, r] = 1.0                      # pad rows -> zero row

    wsc = w * scale[:, None, None, None]               # fold BN scale into weights
    BD = np.zeros((KHt, W * IC, OW * OC), np.float32)
    for i in range(KHt):
        for ow in range(OW):
            for j in range(KWt):
                q = STRIDE * ow + j - pad
                if 0 <= q < W:                         # pad cols -> band omitted
                    BD[i, q * IC:(q + 1) * IC, ow * OC:(ow + 1) * OC] = \
                        wsc[:, :, i, j].T

    sh = np.tile(shift, OW)[None, :].astype(np.float32)   # (1, OW*OC)
    return S, BD, sh, OH, OW


def prepare_kernel_params(params, H, W, eps=BN_EPS):
    """Rebuild every weight, once, in the layout the fused kernel consumes."""
    f32 = lambda a: np.asarray(a, np.float32)
    kp = {}
    h, w = H, W
    oc = None
    for idx, (name, pad) in enumerate([("conv1", 1), ("conv2", 1),
                                       ("conv3", 1), ("conv4", 0)], start=1):
        c = params[name]
        s, bd, sh, h, w = _conv_constants(f32(c["w"]), f32(c["b"]),
                                          f32(c["gamma"]), f32(c["beta"]),
                                          f32(c["mean"]), f32(c["var"]),
                                          h, w, pad, eps)
        kp[f"s{idx}"] = jnp.asarray(s, jnp.bfloat16)
        kp[f"bd{idx}"] = jnp.asarray(bd, jnp.bfloat16)
        kp[f"sh{idx}"] = jnp.asarray(sh, jnp.float32)
        oc = c["w"].shape[0]

    # feature_critic linears: stored as (in, out), bias as (1, out)
    kp["wf1"] = jnp.asarray(f32(params["fc1_w"]).T, jnp.bfloat16)
    kp["bf1"] = jnp.asarray(f32(params["fc1_b"])[None, :], jnp.float32)
    kp["wf2"] = jnp.asarray(f32(params["fc2_w"]).T, jnp.bfloat16)
    kp["bf2"] = jnp.asarray(f32(params["fc2_b"])[None, :], jnp.float32)

    # combined_head first linear: split into conv-feature half (permuted from
    # PyTorch's NCHW-flatten order (oc, oh, ow) to the kernel's (oh, ow, oc)
    # order) and the feature_critic half.
    h1w = f32(params["h1_w"])                       # (128, 9*oc + 64)
    obs_dim = oc * h * w
    w_obs = h1w[:, :obs_dim].reshape(-1, oc, h, w)  # (128, oc, oh, ow)
    w_obs = np.transpose(w_obs, (2, 3, 1, 0)).reshape(h, w * oc, -1)
    kp["wh1o"] = jnp.asarray(w_obs, jnp.bfloat16)   # (oh, ow*oc, 128)
    kp["wh1f"] = jnp.asarray(h1w[:, obs_dim:].T, jnp.bfloat16)
    kp["bh1"] = jnp.asarray(f32(params["h1_b"])[None, :], jnp.float32)
    kp["wh2"] = jnp.asarray(f32(params["h2_w"]).T, jnp.bfloat16)
    kp["bh2"] = jnp.asarray(f32(params["h2_b"])[None, :], jnp.float32)
    kp["wh3"] = jnp.asarray(f32(params["h3_w"]).T, jnp.bfloat16)
    kp["bh3"] = jnp.asarray(f32(params["h3_b"])[None, :], jnp.float32)
    return kp


# ----------------------------------------------------------------------------
# Forward pass wrapper (single pallas_call)
# ----------------------------------------------------------------------------
def multi_disc_forward(kp, observation, action, reward, done):
    B, C, H, W = observation.shape
    # NCHW -> row-major interior activation matrix (B, H, W*C); padding is
    # folded into the kernel's constant gather / banded-weight matrices.
    x = jnp.transpose(observation, (0, 2, 3, 1)).reshape(B, H, W * C)
    a1 = x.astype(jnp.bfloat16)
    feat = jnp.concatenate([action, reward, done], axis=1)
    feat = feat.astype(jnp.bfloat16)[:, None, :]                 # (B, 1, A+2)

    inputs = [a1,
              kp["s1"], kp["bd1"], kp["sh1"],
              kp["s2"], kp["bd2"], kp["sh2"],
              kp["s3"], kp["bd3"], kp["sh3"],
              kp["s4"], kp["bd4"], kp["sh4"],
              feat,
              kp["wf1"], kp["bf1"], kp["wf2"], kp["bf2"],
              kp["wh1o"], kp["wh1f"], kp["bh1"],
              kp["wh2"], kp["bh2"], kp["wh3"], kp["bh3"]]
    batched = (0, 13)      # a1 and feat are blocked over the batch grid axis

    def _const_map(nd):
        def index_map(b):
            return (0,) * nd
        return index_map

    def _batch_map(nd):
        def index_map(b):
            return (b,) + (0,) * (nd - 1)
        return index_map

    in_specs = []
    for idx, arr in enumerate(inputs):
        if idx in batched:
            in_specs.append(pl.BlockSpec((1,) + arr.shape[1:],
                                         _batch_map(arr.ndim)))
        else:
            in_specs.append(pl.BlockSpec(arr.shape, _const_map(arr.ndim)))

    out = pl.pallas_call(
        _multidisc_kernel,
        out_shape=jax.ShapeDtypeStruct((B, 1, 1), jnp.float32),
        grid_spec=pltpu.PrefetchScalarGridSpec(
            num_scalar_prefetch=0,
            grid=(B,),
            in_specs=in_specs,
            out_specs=pl.BlockSpec((1, 1, 1), _batch_map(3))),
        compiler_params=pltpu.CompilerParams(
            dimension_semantics=("parallel",)),
    )(*inputs)
    return out.reshape(B, 1)


# ----------------------------------------------------------------------------
# Pure-JAX reference (for in-script validation)
# ----------------------------------------------------------------------------
def _reference_forward(params, observation, action, reward, done):
    hp = jax.lax.Precision.HIGHEST

    def conv_block(x, p, pad):
        y = jax.lax.conv_general_dilated(
            x, p["w"].astype(jnp.float32), window_strides=(2, 2),
            padding=[(pad, pad), (pad, pad)],
            dimension_numbers=("NCHW", "OIHW", "NCHW"), precision=hp)
        y = y + p["b"][None, :, None, None]
        s = p["gamma"] / jnp.sqrt(p["var"] + BN_EPS)
        y = ((y - p["mean"][None, :, None, None]) * s[None, :, None, None]
             + p["beta"][None, :, None, None])
        return jnp.where(y >= 0, y, LEAK * y)

    def lin(v, w, b):
        return jnp.dot(v, w.T, precision=hp) + b

    def lrelu(v):
        return jnp.where(v >= 0, v, LEAK * v)

    x = observation.astype(jnp.float32)
    x = conv_block(x, params["conv1"], 1)
    x = conv_block(x, params["conv2"], 1)
    x = conv_block(x, params["conv3"], 1)
    x = conv_block(x, params["conv4"], 0)
    obs = x.reshape(x.shape[0], -1)

    f = jnp.concatenate([action, reward, done], axis=1).astype(jnp.float32)
    f = lrelu(lin(f, params["fc1_w"], params["fc1_b"]))
    f = lrelu(lin(f, params["fc2_w"], params["fc2_b"]))

    h = jnp.concatenate([obs, f], axis=1)
    h = lrelu(lin(h, params["h1_w"], params["h1_b"]))
    h = lrelu(lin(h, params["h2_w"], params["h2_b"]))
    return jax.nn.sigmoid(lin(h, params["h3_w"], params["h3_b"]))


# ----------------------------------------------------------------------------
# Deterministic synthetic parameters (matches MultiDisc.__init__ shapes)
# ----------------------------------------------------------------------------
def init_params(key, im_chan=4, hidden_dim=8, action_size=2):
    ks = jax.random.split(key, 9)

    def conv_p(k, ic, oc, ksz=4):
        k1, k2, k3, k4 = jax.random.split(k, 4)
        return dict(
            w=0.2 * jax.random.normal(k1, (oc, ic, ksz, ksz), jnp.float32),
            b=0.01 * jax.random.normal(k2, (oc,), jnp.float32),
            gamma=1.0 + 0.1 * jax.random.normal(k3, (oc,), jnp.float32),
            beta=0.01 * jax.random.normal(k4, (oc,), jnp.float32),
            mean=jnp.zeros((oc,), jnp.float32),   # BN eval running stats
            var=jnp.ones((oc,), jnp.float32),
        )

    def lin_p(k, fin, fout):
        k1, k2 = jax.random.split(k, 2)
        lim = 1.0 / (fin ** 0.5)
        return (jax.random.uniform(k1, (fout, fin), jnp.float32, -lim, lim),
                jax.random.uniform(k2, (fout,), jnp.float32, -lim, lim))

    hd = hidden_dim
    observation_shape = 9 * hd * 4       # 3x3 spatial * (hidden_dim*4) channels
    p = {}
    p["conv1"] = conv_p(ks[0], im_chan, hd)
    p["conv2"] = conv_p(ks[1], hd, hd * 2)
    p["conv3"] = conv_p(ks[2], hd * 2, hd * 4)
    p["conv4"] = conv_p(ks[3], hd * 4, hd * 4)
    p["fc1_w"], p["fc1_b"] = lin_p(ks[4], action_size + 2, 128)
    p["fc2_w"], p["fc2_b"] = lin_p(ks[5], 128, 64)
    p["h1_w"], p["h1_b"] = lin_p(ks[6], observation_shape + 64, 128)
    p["h2_w"], p["h2_b"] = lin_p(ks[7], 128, 32)
    p["h3_w"], p["h3_b"] = lin_p(ks[8], 32, 1)
    return p


if __name__ == "__main__":
    key = jax.random.PRNGKey(0)
    kpar, ko, ka, kr, kd = jax.random.split(key, 5)

    # 64x64 visual observations (ram=False, full_size=False), im_chan=4,
    # hidden_dim=8, action_size=2, batch=2.
    B, im_chan, H, W = 2, 4, 64, 64
    hidden_dim, action_size = 8, 2

    params = init_params(kpar, im_chan, hidden_dim, action_size)
    kparams = prepare_kernel_params(params, H, W)

    observation = jax.random.normal(ko, (B, im_chan, H, W), jnp.float32)
    action = jax.random.normal(ka, (B, action_size), jnp.float32)
    reward = jax.random.normal(kr, (B, 1), jnp.float32)
    done = (jax.random.uniform(kd, (B, 1)) > 0.5).astype(jnp.float32)

    fwd = jax.jit(multi_disc_forward)
    out = jax.block_until_ready(fwd(kparams, observation, action, reward, done))

    assert out.shape == (B, 1)
    assert bool(jnp.all(jnp.isfinite(out)))
    assert bool(jnp.all((out >= 0.0) & (out <= 1.0)))       # sigmoid output

    ref = _reference_forward(params, observation, action, reward, done)
    err = float(jnp.max(jnp.abs(out - ref)))
    assert err < 3e-2, f"kernel/reference mismatch: max abs err = {err}"

    print("KERNEL_OK")
</pallas_src>

<mosaic_0001>
module attributes {stable_mosaic.version = 11 : i64} {
  func.func @_multidisc_kernel(%arg0: i32, %arg1: memref<1x64x256xbf16, #tpu.memory_space<vmem>>, %arg2: memref<4x32x64xbf16, #tpu.memory_space<vmem>>, %arg3: memref<4x256x256xbf16, #tpu.memory_space<vmem>>, %arg4: memref<1x256xf32, #tpu.memory_space<vmem>>, %arg5: memref<4x16x32xbf16, #tpu.memory_space<vmem>>, %arg6: memref<4x256x256xbf16, #tpu.memory_space<vmem>>, %arg7: memref<1x256xf32, #tpu.memory_space<vmem>>, %arg8: memref<4x8x16xbf16, #tpu.memory_space<vmem>>, %arg9: memref<4x256x256xbf16, #tpu.memory_space<vmem>>, %arg10: memref<1x256xf32, #tpu.memory_space<vmem>>, %arg11: memref<4x3x8xbf16, #tpu.memory_space<vmem>>, %arg12: memref<4x256x96xbf16, #tpu.memory_space<vmem>>, %arg13: memref<1x96xf32, #tpu.memory_space<vmem>>, %arg14: memref<1x1x4xbf16, #tpu.memory_space<vmem>>, %arg15: memref<4x128xbf16, #tpu.memory_space<vmem>>, %arg16: memref<1x128xf32, #tpu.memory_space<vmem>>, %arg17: memref<128x64xbf16, #tpu.memory_space<vmem>>, %arg18: memref<1x64xf32, #tpu.memory_space<vmem>>, %arg19: memref<3x96x128xbf16, #tpu.memory_space<vmem>>, %arg20: memref<64x128xbf16, #tpu.memory_space<vmem>>, %arg21: memref<1x128xf32, #tpu.memory_space<vmem>>, %arg22: memref<128x32xbf16, #tpu.memory_space<vmem>>, %arg23: memref<1x32xf32, #tpu.memory_space<vmem>>, %arg24: memref<32x1xbf16, #tpu.memory_space<vmem>>, %arg25: memref<1x1xf32, #tpu.memory_space<vmem>>, %arg26: memref<1x1x1xf32, #tpu.memory_space<vmem>>) attributes {dimension_semantics = [#tpu.dimension_semantics<parallel>], iteration_bounds = array<i64: 2>, scalar_prefetch = 0 : i64, scratch_operands = 0 : i64, tpu.core_type = #tpu.core_type<tc>, window_params = [{transform_indices = @transform_0, window_bounds = array<i64: 1, 64, 256>}, {pipeline_mode = #tpu.pipeline_mode<synchronous>, transform_indices = @transform_1, window_bounds = array<i64: 4, 32, 64>}, {pipeline_mode = #tpu.pipeline_mode<synchronous>, transform_indices = @transform_2, window_bounds = array<i64: 4, 256, 256>}, {pipeline_mode = #tpu.pipeline_mode<synchronous>, transform_indices = @transform_3, window_bounds = array<i64: 1, 256>}, {pipeline_mode = #tpu.pipeline_mode<synchronous>, transform_indices = @transform_4, window_bounds = array<i64: 4, 16, 32>}, {pipeline_mode = #tpu.pipeline_mode<synchronous>, transform_indices = @transform_5, window_bounds = array<i64: 4, 256, 256>}, {pipeline_mode = #tpu.pipeline_mode<synchronous>, transform_indices = @transform_6, window_bounds = array<i64: 1, 256>}, {pipeline_mode = #tpu.pipeline_mode<synchronous>, transform_indices = @transform_7, window_bounds = array<i64: 4, 8, 16>}, {pipeline_mode = #tpu.pipeline_mode<synchronous>, transform_indices = @transform_8, window_bounds = array<i64: 4, 256, 256>}, {pipeline_mode = #tpu.pipeline_mode<synchronous>, transform_indices = @transform_9, window_bounds = array<i64: 1, 256>}, {pipeline_mode = #tpu.pipeline_mode<synchronous>, transform_indices = @transform_10, window_bounds = array<i64: 4, 3, 8>}, {pipeline_mode = #tpu.pipeline_mode<synchronous>, transform_indices = @transform_11, window_bounds = array<i64: 4, 256, 96>}, {pipeline_mode = #tpu.pipeline_mode<synchronous>, transform_indices = @transform_12, window_bounds = array<i64: 1, 96>}, {transform_indices = @transform_13, window_bounds = array<i64: 1, 1, 4>}, {pipeline_mode = #tpu.pipeline_mode<synchronous>, transform_indices = @transform_14, window_bounds = array<i64: 4, 128>}, {pipeline_mode = #tpu.pipeline_mode<synchronous>, transform_indices = @transform_15, window_bounds = array<i64: 1, 128>}, {pipeline_mode = #tpu.pipeline_mode<synchronous>, transform_indices = @transform_16, window_bounds = array<i64: 128, 64>}, {pipeline_mode = #tpu.pipeline_mode<synchronous>, transform_indices = @transform_17, window_bounds = array<i64: 1, 64>}, {pipeline_mode = #tpu.pipeline_mode<synchronous>, transform_indices = @transform_18, window_bounds = array<i64: 3, 96, 128>}, {pipeline_mode = #tpu.pipeline_mode<synchronous>, transform_indices = @transform_19, window_bounds = array<i64: 64, 128>}, {pipeline_mode = #tpu.pipeline_mode<synchronous>, transform_indices = @transform_20, window_bounds = array<i64: 1, 128>}, {pipeline_mode = #tpu.pipeline_mode<synchronous>, transform_indices = @transform_21, window_bounds = array<i64: 128, 32>}, {pipeline_mode = #tpu.pipeline_mode<synchronous>, transform_indices = @transform_22, window_bounds = array<i64: 1, 32>}, {pipeline_mode = #tpu.pipeline_mode<synchronous>, transform_indices = @transform_23, window_bounds = array<i64: 32, 1>}, {pipeline_mode = #tpu.pipeline_mode<synchronous>, transform_indices = @transform_24, window_bounds = array<i64: 1, 1>}, {transform_indices = @transform_25, window_bounds = array<i64: 1, 1, 1>}]} {
    %c0 = arith.constant 0 : index
    %c0_0 = arith.constant 0 : index
    %c0_1 = arith.constant 0 : index
    %0 = vector.load %arg1[%c0, %c0_0, %c0_1] : memref<1x64x256xbf16, #tpu.memory_space<vmem>>, vector<1x64x256xbf16>
    %1 = vector.shape_cast %0 : vector<1x64x256xbf16> to vector<64x256xbf16>
    %cst = arith.constant 0.000000e+00 : f32
    %2 = vector.broadcast %cst : f32 to vector<32x256xf32>
    %c0_2 = arith.constant 0 : index
    %c0_3 = arith.constant 0 : index
    %c0_4 = arith.constant 0 : index
    %3 = vector.load %arg2[%c0_2, %c0_3, %c0_4] : memref<4x32x64xbf16, #tpu.memory_space<vmem>>, vector<1x32x64xbf16>
    %4 = vector.shape_cast %3 : vector<1x32x64xbf16> to vector<32x64xbf16>
    %cst_5 = arith.constant dense<0.000000e+00> : vector<32x256xf32>
    %5 = tpu.matmul %4, %1, %cst_5 {dimension_numbers = #tpu.dot_dimension_numbers<[1], [0], [0], [1], [0, 0, 1, 1], [], []>} : vector<32x64xbf16>, vector<64x256xbf16>, vector<32x256xf32> -> vector<32x256xf32>
    %6 = arith.truncf %5 : vector<32x256xf32> to vector<32x256xbf16>
    %c0_6 = arith.constant 0 : index
    %c0_7 = arith.constant 0 : index
    %c0_8 = arith.constant 0 : index
    %7 = vector.load %arg3[%c0_6, %c0_7, %c0_8] : memref<4x256x256xbf16, #tpu.memory_space<vmem>>, vector<1x256x256xbf16>
    %8 = vector.shape_cast %7 : vector<1x256x256xbf16> to vector<256x256xbf16>
    %cst_9 = arith.constant dense<0.000000e+00> : vector<32x256xf32>
    %9 = tpu.matmul %6, %8, %cst_9 {dimension_numbers = #tpu.dot_dimension_numbers<[1], [0], [0], [1], [0, 0, 1, 1], [], []>} : vector<32x256xbf16>, vector<256x256xbf16>, vector<32x256xf32> -> vector<32x256xf32>
    %10 = arith.addf %2, %9 : vector<32x256xf32>
    %c1 = arith.constant 1 : index
    %c0_10 = arith.constant 0 : index
    %c0_11 = arith.constant 0 : index
    %11 = vector.load %arg2[%c1, %c0_10, %c0_11] : memref<4x32x64xbf16, #tpu.memory_space<vmem>>, vector<1x32x64xbf16>
    %12 = vector.shape_cast %11 : vector<1x32x64xbf16> to vector<32x64xbf16>
    %cst_12 = arith.constant dense<0.000000e+00> : vector<32x256xf32>
    %13 = tpu.matmul %12, %1, %cst_12 {dimension_numbers = #tpu.dot_dimension_numbers<[1], [0], [0], [1], [0, 0, 1, 1], [], []>} : vector<32x64xbf16>, vector<64x256xbf16>, vector<32x256xf32> -> vector<32x256xf32>
    %14 = arith.truncf %13 : vector<32x256xf32> to vector<32x256xbf16>
    %c1_13 = arith.constant 1 : index
    %c0_14 = arith.constant 0 : index
    %c0_15 = arith.constant 0 : index
    %15 = vector.load %arg3[%c1_13, %c0_14, %c0_15] : memref<4x256x256xbf16, #tpu.memory_space<vmem>>, vector<1x256x256xbf16>
    %16 = vector.shape_cast %15 : vector<1x256x256xbf16> to vector<256x256xbf16>
    %cst_16 = arith.constant dense<0.000000e+00> : vector<32x256xf32>
    %17 = tpu.matmul %14, %16, %cst_16 {dimension_numbers = #tpu.dot_dimension_numbers<[1], [0], [0], [1], [0, 0, 1, 1], [], []>} : vector<32x256xbf16>, vector<256x256xbf16>, vector<32x256xf32> -> vector<32x256xf32>
    %18 = arith.addf %10, %17 : vector<32x256xf32>
    %c2 = arith.constant 2 : index
    %c0_17 = arith.constant 0 : index
    %c0_18 = arith.constant 0 : index
    %19 = vector.load %arg2[%c2, %c0_17, %c0_18] : memref<4x32x64xbf16, #tpu.memory_space<vmem>>, vector<1x32x64xbf16>
    %20 = vector.shape_cast %19 : vector<1x32x64xbf16> to vector<32x64xbf16>
    %cst_19 = arith.constant dense<0.000000e+00> : vector<32x256xf32>
    %21 = tpu.matmul %20, %1, %cst_19 {dimension_numbers = #tpu.dot_dimension_numbers<[1], [0], [0], [1], [0, 0, 1, 1], [], []>} : vector<32x64xbf16>, vector<64x256xbf16>, vector<32x256xf32> -> vector<32x256xf32>
    %22 = arith.truncf %21 : vector<32x256xf32> to vector<32x256xbf16>
    %c2_20 = arith.constant 2 : index
    %c0_21 = arith.constant 0 : index
    %c0_22 = arith.constant 0 : index
    %23 = vector.load %arg3[%c2_20, %c0_21, %c0_22] : memref<4x256x256xbf16, #tpu.memory_space<vmem>>, vector<1x256x256xbf16>
    %24 = vector.shape_cast %23 : vector<1x256x256xbf16> to vector<256x256xbf16>
    %cst_23 = arith.constant dense<0.000000e+00> : vector<32x256xf32>
    %25 = tpu.matmul %22, %24, %cst_23 {dimension_numbers = #tpu.dot_dimension_numbers<[1], [0], [0], [1], [0, 0, 1, 1], [], []>} : vector<32x256xbf16>, vector<256x256xbf16>, vector<32x256xf32> -> vector<32x256xf32>
    %26 = arith.addf %18, %25 : vector<32x256xf32>
    %c3 = arith.constant 3 : index
    %c0_24 = arith.constant 0 : index
    %c0_25 = arith.constant 0 : index
    %27 = vector.load %arg2[%c3, %c0_24, %c0_25] : memref<4x32x64xbf16, #tpu.memory_space<vmem>>, vector<1x32x64xbf16>
    %28 = vector.shape_cast %27 : vector<1x32x64xbf16> to vector<32x64xbf16>
    %cst_26 = arith.constant dense<0.000000e+00> : vector<32x256xf32>
    %29 = tpu.matmul %28, %1, %cst_26 {dimension_numbers = #tpu.dot_dimension_numbers<[1], [0], [0], [1], [0, 0, 1, 1], [], []>} : vector<32x64xbf16>, vector<64x256xbf16>, vector<32x256xf32> -> vector<32x256xf32>
    %30 = arith.truncf %29 : vector<32x256xf32> to vector<32x256xbf16>
    %c3_27 = arith.constant 3 : index
    %c0_28 = arith.constant 0 : index
    %c0_29 = arith.constant 0 : index
    %31 = vector.load %arg3[%c3_27, %c0_28, %c0_29] : memref<4x256x256xbf16, #tpu.memory_space<vmem>>, vector<1x256x256xbf16>
    %32 = vector.shape_cast %31 : vector<1x256x256xbf16> to vector<256x256xbf16>
    %cst_30 = arith.constant dense<0.000000e+00> : vector<32x256xf32>
    %33 = tpu.matmul %30, %32, %cst_30 {dimension_numbers = #tpu.dot_dimension_numbers<[1], [0], [0], [1], [0, 0, 1, 1], [], []>} : vector<32x256xbf16>, vector<256x256xbf16>, vector<32x256xf32> -> vector<32x256xf32>
    %34 = arith.addf %26, %33 : vector<32x256xf32>
    %c0_31 = arith.constant 0 : index
    %c0_32 = arith.constant 0 : index
    %35 = vector.load %arg4[%c0_31, %c0_32] : memref<1x256xf32, #tpu.memory_space<vmem>>, vector<1x256xf32>
    %36 = vector.broadcast %35 : vector<1x256xf32> to vector<32x256xf32>
    %37 = arith.addf %34, %36 : vector<32x256xf32>
    %cst_33 = arith.constant 0.000000e+00 : f32
    %38 = vector.broadcast %cst_33 : f32 to vector<32x256xf32>
    %39 = arith.cmpf oge, %37, %38 : vector<32x256xf32>
    %cst_34 = arith.constant 2.000000e-01 : f32
    %40 = vector.broadcast %cst_34 : f32 to vector<32x256xf32>
    %41 = arith.mulf %40, %37 : vector<32x256xf32>
    %42 = arith.select %39, %37, %41 : vector<32x256xi1>, vector<32x256xf32>
    %43 = arith.truncf %42 : vector<32x256xf32> to vector<32x256xbf16>
    %cst_35 = arith.constant 0.000000e+00 : f32
    %44 = vector.broadcast %cst_35 : f32 to vector<16x256xf32>
    %c0_36 = arith.constant 0 : index
    %c0_37 = arith.constant 0 : index
    %c0_38 = arith.constant 0 : index
    %45 = vector.load %arg5[%c0_36, %c0_37, %c0_38] : memref<4x16x32xbf16, #tpu.memory_space<vmem>>, vector<1x16x32xbf16>
    %46 = vector.shape_cast %45 : vector<1x16x32xbf16> to vector<16x32xbf16>
    %cst_39 = arith.constant dense<0.000000e+00> : vector<16x256xf32>
    %47 = tpu.matmul %46, %43, %cst_39 {dimension_numbers = #tpu.dot_dimension_numbers<[1], [0], [0], [1], [0, 0, 1, 1], [], []>} : vector<16x32xbf16>, vector<32x256xbf16>, vector<16x256xf32> -> vector<16x256xf32>
    %48 = arith.truncf %47 : vector<16x256xf32> to vector<16x256xbf16>
    %c0_40 = arith.constant 0 : index
    %c0_41 = arith.constant 0 : index
    %c0_42 = arith.constant 0 : index
    %49 = vector.load %arg6[%c0_40, %c0_41, %c0_42] : memref<4x256x256xbf16, #tpu.memory_space<vmem>>, vector<1x256x256xbf16>
    %50 = vector.shape_cast %49 : vector<1x256x256xbf16> to vector<256x256xbf16>
    %cst_43 = arith.constant dense<0.000000e+00> : vector<16x256xf32>
    %51 = tpu.matmul %48, %50, %cst_43 {dimension_numbers = #tpu.dot_dimension_numbers<[1], [0], [0], [1], [0, 0, 1, 1], [], []>} : vector<16x256xbf16>, vector<256x256xbf16>, vector<16x256xf32> -> vector<16x256xf32>
    %52 = arith.addf %44, %51 : vector<16x256xf32>
    %c1_44 = arith.constant 1 : index
    %c0_45 = arith.constant 0 : index
    %c0_46 = arith.constant 0 : index
    %53 = vector.load %arg5[%c1_44, %c0_45, %c0_46] : memref<4x16x32xbf16, #tpu.memory_space<vmem>>, vector<1x16x32xbf16>
    %54 = vector.shape_cast %53 : vector<1x16x32xbf16> to vector<16x32xbf16>
    %cst_47 = arith.constant dense<0.000000e+00> : vector<16x256xf32>
    %55 = tpu.matmul %54, %43, %cst_47 {dimension_numbers = #tpu.dot_dimension_numbers<[1], [0], [0], [1], [0, 0, 1, 1], [], []>} : vector<16x32xbf16>, vector<32x256xbf16>, vector<16x256xf32> -> vector<16x256xf32>
    %56 = arith.truncf %55 : vector<16x256xf32> to vector<16x256xbf16>
    %c1_48 = arith.constant 1 : index
    %c0_49 = arith.constant 0 : index
    %c0_50 = arith.constant 0 : index
    %57 = vector.load %arg6[%c1_48, %c0_49, %c0_50] : memref<4x256x256xbf16, #tpu.memory_space<vmem>>, vector<1x256x256xbf16>
    %58 = vector.shape_cast %57 : vector<1x256x256xbf16> to vector<256x256xbf16>
    %cst_51 = arith.constant dense<0.000000e+00> : vector<16x256xf32>
    %59 = tpu.matmul %56, %58, %cst_51 {dimension_numbers = #tpu.dot_dimension_numbers<[1], [0], [0], [1], [0, 0, 1, 1], [], []>} : vector<16x256xbf16>, vector<256x256xbf16>, vector<16x256xf32> -> vector<16x256xf32>
    %60 = arith.addf %52, %59 : vector<16x256xf32>
    %c2_52 = arith.constant 2 : index
    %c0_53 = arith.constant 0 : index
    %c0_54 = arith.constant 0 : index
    %61 = vector.load %arg5[%c2_52, %c0_53, %c0_54] : memref<4x16x32xbf16, #tpu.memory_space<vmem>>, vector<1x16x32xbf16>
    %62 = vector.shape_cast %61 : vector<1x16x32xbf16> to vector<16x32xbf16>
    %cst_55 = arith.constant dense<0.000000e+00> : vector<16x256xf32>
    %63 = tpu.matmul %62, %43, %cst_55 {dimension_numbers = #tpu.dot_dimension_numbers<[1], [0], [0], [1], [0, 0, 1, 1], [], []>} : vector<16x32xbf16>, vector<32x256xbf16>, vector<16x256xf32> -> vector<16x256xf32>
    %64 = arith.truncf %63 : vector<16x256xf32> to vector<16x256xbf16>
    %c2_56 = arith.constant 2 : index
    %c0_57 = arith.constant 0 : index
    %c0_58 = arith.constant 0 : index
    %65 = vector.load %arg6[%c2_56, %c0_57, %c0_58] : memref<4x256x256xbf16, #tpu.memory_space<vmem>>, vector<1x256x256xbf16>
    %66 = vector.shape_cast %65 : vector<1x256x256xbf16> to vector<256x256xbf16>
    %cst_59 = arith.constant dense<0.000000e+00> : vector<16x256xf32>
    %67 = tpu.matmul %64, %66, %cst_59 {dimension_numbers = #tpu.dot_dimension_numbers<[1], [0], [0], [1], [0, 0, 1, 1], [], []>} : vector<16x256xbf16>, vector<256x256xbf16>, vector<16x256xf32> -> vector<16x256xf32>
    %68 = arith.addf %60, %67 : vector<16x256xf32>
    %c3_60 = arith.constant 3 : index
    %c0_61 = arith.constant 0 : index
    %c0_62 = arith.constant 0 : index
    %69 = vector.load %arg5[%c3_60, %c0_61, %c0_62] : memref<4x16x32xbf16, #tpu.memory_space<vmem>>, vector<1x16x32xbf16>
    %70 = vector.shape_cast %69 : vector<1x16x32xbf16> to vector<16x32xbf16>
    %cst_63 = arith.constant dense<0.000000e+00> : vector<16x256xf32>
    %71 = tpu.matmul %70, %43, %cst_63 {dimension_numbers = #tpu.dot_dimension_numbers<[1], [0], [0], [1], [0, 0, 1, 1], [], []>} : vector<16x32xbf16>, vector<32x256xbf16>, vector<16x256xf32> -> vector<16x256xf32>
    %72 = arith.truncf %71 : vector<16x256xf32> to vector<16x256xbf16>
    %c3_64 = arith.constant 3 : index
    %c0_65 = arith.constant 0 : index
    %c0_66 = arith.constant 0 : index
    %73 = vector.load %arg6[%c3_64, %c0_65, %c0_66] : memref<4x256x256xbf16, #tpu.memory_space<vmem>>, vector<1x256x256xbf16>
    %74 = vector.shape_cast %73 : vector<1x256x256xbf16> to vector<256x256xbf16>
    %cst_67 = arith.constant dense<0.000000e+00> : vector<16x256xf32>
    %75 = tpu.matmul %72, %74, %cst_67 {dimension_numbers = #tpu.dot_dimension_numbers<[1], [0], [0], [1], [0, 0, 1, 1], [], []>} : vector<16x256xbf16>, vector<256x256xbf16>, vector<16x256xf32> -> vector<16x256xf32>
    %76 = arith.addf %68, %75 : vector<16x256xf32>
    %c0_68 = arith.constant 0 : index
    %c0_69 = arith.constant 0 : index
    %77 = vector.load %arg7[%c0_68, %c0_69] : memref<1x256xf32, #tpu.memory_space<vmem>>, vector<1x256xf32>
    %78 = vector.broadcast %77 : vector<1x256xf32> to vector<16x256xf32>
    %79 = arith.addf %76, %78 : vector<16x256xf32>
    %cst_70 = arith.constant 0.000000e+00 : f32
    %80 = vector.broadcast %cst_70 : f32 to vector<16x256xf32>
    %81 = arith.cmpf oge, %79, %80 : vector<16x256xf32>
    %cst_71 = arith.constant 2.000000e-01 : f32
    %82 = vector.broadcast %cst_71 : f32 to vector<16x256xf32>
    %83 = arith.mulf %82, %79 : vector<16x256xf32>
    %84 = arith.select %81, %79, %83 : vector<16x256xi1>, vector<16x256xf32>
    %85 = arith.truncf %84 : vector<16x256xf32> to vector<16x256xbf16>
    %cst_72 = arith.constant 0.000000e+00 : f32
    %86 = vector.broadcast %cst_72 : f32 to vector<8x256xf32>
    %c0_73 = arith.constant 0 : index
    %c0_74 = arith.constant 0 : index
    %c0_75 = arith.constant 0 : index
    %87 = vector.load %arg8[%c0_73, %c0_74, %c0_75] : memref<4x8x16xbf16, #tpu.memory_space<vmem>>, vector<1x8x16xbf16>
    %88 = vector.shape_cast %87 : vector<1x8x16xbf16> to vector<8x16xbf16>
    %cst_76 = arith.constant dense<0.000000e+00> : vector<8x256xf32>
    %89 = tpu.matmul %88, %85, %cst_76 {dimension_numbers = #tpu.dot_dimension_numbers<[1], [0], [0], [1], [0, 0, 1, 1], [], []>} : vector<8x16xbf16>, vector<16x256xbf16>, vector<8x256xf32> -> vector<8x256xf32>
    %90 = arith.truncf %89 : vector<8x256xf32> to vector<8x256xbf16>
    %c0_77 = arith.constant 0 : index
    %c0_78 = arith.constant 0 : index
    %c0_79 = arith.constant 0 : index
    %91 = vector.load %arg9[%c0_77, %c0_78, %c0_79] : memref<4x256x256xbf16, #tpu.memory_space<vmem>>, vector<1x256x256xbf16>
    %92 = vector.shape_cast %91 : vector<1x256x256xbf16> to vector<256x256xbf16>
    %cst_80 = arith.constant dense<0.000000e+00> : vector<8x256xf32>
    %93 = tpu.matmul %90, %92, %cst_80 {dimension_numbers = #tpu.dot_dimension_numbers<[1], [0], [0], [1], [0, 0, 1, 1], [], []>} : vector<8x256xbf16>, vector<256x256xbf16>, vector<8x256xf32> -> vector<8x256xf32>
    %94 = arith.addf %86, %93 : vector<8x256xf32>
    %c1_81 = arith.constant 1 : index
    %c0_82 = arith.constant 0 : index
    %c0_83 = arith.constant 0 : index
    %95 = vector.load %arg8[%c1_81, %c0_82, %c0_83] : memref<4x8x16xbf16, #tpu.memory_space<vmem>>, vector<1x8x16xbf16>
    %96 = vector.shape_cast %95 : vector<1x8x16xbf16> to vector<8x16xbf16>
    %cst_84 = arith.constant dense<0.000000e+00> : vector<8x256xf32>
    %97 = tpu.matmul %96, %85, %cst_84 {dimension_numbers = #tpu.dot_dimension_numbers<[1], [0], [0], [1], [0, 0, 1, 1], [], []>} : vector<8x16xbf16>, vector<16x256xbf16>, vector<8x256xf32> -> vector<8x256xf32>
    %98 = arith.truncf %97 : vector<8x256xf32> to vector<8x256xbf16>
    %c1_85 = arith.constant 1 : index
    %c0_86 = arith.constant 0 : index
    %c0_87 = arith.constant 0 : index
    %99 = vector.load %arg9[%c1_85, %c0_86, %c0_87] : memref<4x256x256xbf16, #tpu.memory_space<vmem>>, vector<1x256x256xbf16>
    %100 = vector.shape_cast %99 : vector<1x256x256xbf16> to vector<256x256xbf16>
    %cst_88 = arith.constant dense<0.000000e+00> : vector<8x256xf32>
    %101 = tpu.matmul %98, %100, %cst_88 {dimension_numbers = #tpu.dot_dimension_numbers<[1], [0], [0], [1], [0, 0, 1, 1], [], []>} : vector<8x256xbf16>, vector<256x256xbf16>, vector<8x256xf32> -> vector<8x256xf32>
    %102 = arith.addf %94, %101 : vector<8x256xf32>
    %c2_89 = arith.constant 2 : index
    %c0_90 = arith.constant 0 : index
    %c0_91 = arith.constant 0 : index
    %103 = vector.load %arg8[%c2_89, %c0_90, %c0_91] : memref<4x8x16xbf16, #tpu.memory_space<vmem>>, vector<1x8x16xbf16>
    %104 = vector.shape_cast %103 : vector<1x8x16xbf16> to vector<8x16xbf16>
    %cst_92 = arith.constant dense<0.000000e+00> : vector<8x256xf32>
    %105 = tpu.matmul %104, %85, %cst_92 {dimension_numbers = #tpu.dot_dimension_numbers<[1], [0], [0], [1], [0, 0, 1, 1], [], []>} : vector<8x16xbf16>, vector<16x256xbf16>, vector<8x256xf32> -> vector<8x256xf32>
    %106 = arith.truncf %105 : vector<8x256xf32> to vector<8x256xbf16>
    %c2_93 = arith.constant 2 : index
    %c0_94 = arith.constant 0 : index
    %c0_95 = arith.constant 0 : index
    %107 = vector.load %arg9[%c2_93, %c0_94, %c0_95] : memref<4x256x256xbf16, #tpu.memory_space<vmem>>, vector<1x256x256xbf16>
    %108 = vector.shape_cast %107 : vector<1x256x256xbf16> to vector<256x256xbf16>
    %cst_96 = arith.constant dense<0.000000e+00> : vector<8x256xf32>
    %109 = tpu.matmul %106, %108, %cst_96 {dimension_numbers = #tpu.dot_dimension_numbers<[1], [0], [0], [1], [0, 0, 1, 1], [], []>} : vector<8x256xbf16>, vector<256x256xbf16>, vector<8x256xf32> -> vector<8x256xf32>
    %110 = arith.addf %102, %109 : vector<8x256xf32>
    %c3_97 = arith.constant 3 : index
    %c0_98 = arith.constant 0 : index
    %c0_99 = arith.constant 0 : index
    %111 = vector.load %arg8[%c3_97, %c0_98, %c0_99] : memref<4x8x16xbf16, #tpu.memory_space<vmem>>, vector<1x8x16xbf16>
    %112 = vector.shape_cast %111 : vector<1x8x16xbf16> to vector<8x16xbf16>
    %cst_100 = arith.constant dense<0.000000e+00> : vector<8x256xf32>
    %113 = tpu.matmul %112, %85, %cst_100 {dimension_numbers = #tpu.dot_dimension_numbers<[1], [0], [0], [1], [0, 0, 1, 1], [], []>} : vector<8x16xbf16>, vector<16x256xbf16>, vector<8x256xf32> -> vector<8x256xf32>
    %114 = arith.truncf %113 : vector<8x256xf32> to vector<8x256xbf16>
    %c3_101 = arith.constant 3 : index
    %c0_102 = arith.constant 0 : index
    %c0_103 = arith.constant 0 : index
    %115 = vector.load %arg9[%c3_101, %c0_102, %c0_103] : memref<4x256x256xbf16, #tpu.memory_space<vmem>>, vector<1x256x256xbf16>
    %116 = vector.shape_cast %115 : vector<1x256x256xbf16> to vector<256x256xbf16>
    %cst_104 = arith.constant dense<0.000000e+00> : vector<8x256xf32>
    %117 = tpu.matmul %114, %116, %cst_104 {dimension_numbers = #tpu.dot_dimension_numbers<[1], [0], [0], [1], [0, 0, 1, 1], [], []>} : vector<8x256xbf16>, vector<256x256xbf16>, vector<8x256xf32> -> vector<8x256xf32>
    %118 = arith.addf %110, %117 : vector<8x256xf32>
    %c0_105 = arith.constant 0 : index
    %c0_106 = arith.constant 0 : index
    %119 = vector.load %arg10[%c0_105, %c0_106] : memref<1x256xf32, #tpu.memory_space<vmem>>, vector<1x256xf32>
    %120 = vector.broadcast %119 : vector<1x256xf32> to vector<8x256xf32>
    %121 = arith.addf %118, %120 : vector<8x256xf32>
    %cst_107 = arith.constant 0.000000e+00 : f32
    %122 = vector.broadcast %cst_107 : f32 to vector<8x256xf32>
    %123 = arith.cmpf oge, %121, %122 : vector<8x256xf32>
    %cst_108 = arith.constant 2.000000e-01 : f32
    %124 = vector.broadcast %cst_108 : f32 to vector<8x256xf32>
    %125 = arith.mulf %124, %121 : vector<8x256xf32>
    %126 = arith.select %123, %121, %125 : vector<8x256xi1>, vector<8x256xf32>
    %127 = arith.truncf %126 : vector<8x256xf32> to vector<8x256xbf16>
    %cst_109 = arith.constant 0.000000e+00 : f32
    %128 = vector.broadcast %cst_109 : f32 to vector<3x96xf32>
    %c0_110 = arith.constant 0 : index
    %c0_111 = arith.constant 0 : index
    %c0_112 = arith.constant 0 : index
    %129 = vector.load %arg11[%c0_110, %c0_111, %c0_112] : memref<4x3x8xbf16, #tpu.memory_space<vmem>>, vector<1x3x8xbf16>
    %130 = vector.shape_cast %129 : vector<1x3x8xbf16> to vector<3x8xbf16>
    %cst_113 = arith.constant dense<0.000000e+00> : vector<3x256xf32>
    %131 = tpu.matmul %130, %127, %cst_113 {dimension_numbers = #tpu.dot_dimension_numbers<[1], [0], [0], [1], [0, 0, 1, 1], [], []>} : vector<3x8xbf16>, vector<8x256xbf16>, vector<3x256xf32> -> vector<3x256xf32>
    %132 = arith.truncf %131 : vector<3x256xf32> to vector<3x256xbf16>
    %c0_114 = arith.constant 0 : index
    %c0_115 = arith.constant 0 : index
    %c0_116 = arith.constant 0 : index
    %133 = vector.load %arg12[%c0_114, %c0_115, %c0_116] : memref<4x256x96xbf16, #tpu.memory_space<vmem>>, vector<1x256x96xbf16>
    %134 = vector.shape_cast %133 : vector<1x256x96xbf16> to vector<256x96xbf16>
    %cst_117 = arith.constant dense<0.000000e+00> : vector<3x96xf32>
    %135 = tpu.matmul %132, %134, %cst_117 {dimension_numbers = #tpu.dot_dimension_numbers<[1], [0], [0], [1], [0, 0, 1, 1], [], []>} : vector<3x256xbf16>, vector<256x96xbf16>, vector<3x96xf32> -> vector<3x96xf32>
    %136 = arith.addf %128, %135 : vector<3x96xf32>
    %c1_118 = arith.constant 1 : index
    %c0_119 = arith.constant 0 : index
    %c0_120 = arith.constant 0 : index
    %137 = vector.load %arg11[%c1_118, %c0_119, %c0_120] : memref<4x3x8xbf16, #tpu.memory_space<vmem>>, vector<1x3x8xbf16>
    %138 = vector.shape_cast %137 : vector<1x3x8xbf16> to vector<3x8xbf16>
    %cst_121 = arith.constant dense<0.000000e+00> : vector<3x256xf32>
    %139 = tpu.matmul %138, %127, %cst_121 {dimension_numbers = #tpu.dot_dimension_numbers<[1], [0], [0], [1], [0, 0, 1, 1], [], []>} : vector<3x8xbf16>, vector<8x256xbf16>, vector<3x256xf32> -> vector<3x256xf32>
    %140 = arith.truncf %139 : vector<3x256xf32> to vector<3x256xbf16>
    %c1_122 = arith.constant 1 : index
    %c0_123 = arith.constant 0 : index
    %c0_124 = arith.constant 0 : index
    %141 = vector.load %arg12[%c1_122, %c0_123, %c0_124] : memref<4x256x96xbf16, #tpu.memory_space<vmem>>, vector<1x256x96xbf16>
    %142 = vector.shape_cast %141 : vector<1x256x96xbf16> to vector<256x96xbf16>
    %cst_125 = arith.constant dense<0.000000e+00> : vector<3x96xf32>
    %143 = tpu.matmul %140, %142, %cst_125 {dimension_numbers = #tpu.dot_dimension_numbers<[1], [0], [0], [1], [0, 0, 1, 1], [], []>} : vector<3x256xbf16>, vector<256x96xbf16>, vector<3x96xf32> -> vector<3x96xf32>
    %144 = arith.addf %136, %143 : vector<3x96xf32>
    %c2_126 = arith.constant 2 : index
    %c0_127 = arith.constant 0 : index
    %c0_128 = arith.constant 0 : index
    %145 = vector.load %arg11[%c2_126, %c0_127, %c0_128] : memref<4x3x8xbf16, #tpu.memory_space<vmem>>, vector<1x3x8xbf16>
    %146 = vector.shape_cast %145 : vector<1x3x8xbf16> to vector<3x8xbf16>
    %cst_129 = arith.constant dense<0.000000e+00> : vector<3x256xf32>
    %147 = tpu.matmul %146, %127, %cst_129 {dimension_numbers = #tpu.dot_dimension_numbers<[1], [0], [0], [1], [0, 0, 1, 1], [], []>} : vector<3x8xbf16>, vector<8x256xbf16>, vector<3x256xf32> -> vector<3x256xf32>
    %148 = arith.truncf %147 : vector<3x256xf32> to vector<3x256xbf16>
    %c2_130 = arith.constant 2 : index
    %c0_131 = arith.constant 0 : index
    %c0_132 = arith.constant 0 : index
    %149 = vector.load %arg12[%c2_130, %c0_131, %c0_132] : memref<4x256x96xbf16, #tpu.memory_space<vmem>>, vector<1x256x96xbf16>
    %150 = vector.shape_cast %149 : vector<1x256x96xbf16> to vector<256x96xbf16>
    %cst_133 = arith.constant dense<0.000000e+00> : vector<3x96xf32>
    %151 = tpu.matmul %148, %150, %cst_133 {dimension_numbers = #tpu.dot_dimension_numbers<[1], [0], [0], [1], [0, 0, 1, 1], [], []>} : vector<3x256xbf16>, vector<256x96xbf16>, vector<3x96xf32> -> vector<3x96xf32>
    %152 = arith.addf %144, %151 : vector<3x96xf32>
    %c3_134 = arith.constant 3 : index
    %c0_135 = arith.constant 0 : index
    %c0_136 = arith.constant 0 : index
    %153 = vector.load %arg11[%c3_134, %c0_135, %c0_136] : memref<4x3x8xbf16, #tpu.memory_space<vmem>>, vector<1x3x8xbf16>
    %154 = vector.shape_cast %153 : vector<1x3x8xbf16> to vector<3x8xbf16>
    %cst_137 = arith.constant dense<0.000000e+00> : vector<3x256xf32>
    %155 = tpu.matmul %154, %127, %cst_137 {dimension_numbers = #tpu.dot_dimension_numbers<[1], [0], [0], [1], [0, 0, 1, 1], [], []>} : vector<3x8xbf16>, vector<8x256xbf16>, vector<3x256xf32> -> vector<3x256xf32>
    %156 = arith.truncf %155 : vector<3x256xf32> to vector<3x256xbf16>
    %c3_138 = arith.constant 3 : index
    %c0_139 = arith.constant 0 : index
    %c0_140 = arith.constant 0 : index
    %157 = vector.load %arg12[%c3_138, %c0_139, %c0_140] : memref<4x256x96xbf16, #tpu.memory_space<vmem>>, vector<1x256x96xbf16>
    %158 = vector.shape_cast %157 : vector<1x256x96xbf16> to vector<256x96xbf16>
    %cst_141 = arith.constant dense<0.000000e+00> : vector<3x96xf32>
    %159 = tpu.matmul %156, %158, %cst_141 {dimension_numbers = #tpu.dot_dimension_numbers<[1], [0], [0], [1], [0, 0, 1, 1], [], []>} : vector<3x256xbf16>, vector<256x96xbf16>, vector<3x96xf32> -> vector<3x96xf32>
    %160 = arith.addf %152, %159 : vector<3x96xf32>
    %c0_142 = arith.constant 0 : index
    %c0_143 = arith.constant 0 : index
    %161 = vector.load %arg13[%c0_142, %c0_143] : memref<1x96xf32, #tpu.memory_space<vmem>>, vector<1x96xf32>
    %162 = vector.broadcast %161 : vector<1x96xf32> to vector<3x96xf32>
    %163 = arith.addf %160, %162 : vector<3x96xf32>
    %cst_144 = arith.constant 0.000000e+00 : f32
    %164 = vector.broadcast %cst_144 : f32 to vector<3x96xf32>
    %165 = arith.cmpf oge, %163, %164 : vector<3x96xf32>
    %cst_145 = arith.constant 2.000000e-01 : f32
    %166 = vector.broadcast %cst_145 : f32 to vector<3x96xf32>
    %167 = arith.mulf %166, %163 : vector<3x96xf32>
    %168 = arith.select %165, %163, %167 : vector<3x96xi1>, vector<3x96xf32>
    %c0_146 = arith.constant 0 : index
    %c0_147 = arith.constant 0 : index
    %c0_148 = arith.constant 0 : index
    %169 = vector.load %arg14[%c0_146, %c0_147, %c0_148] : memref<1x1x4xbf16, #tpu.memory_space<vmem>>, vector<1x1x4xbf16>
    %170 = vector.shape_cast %169 : vector<1x1x4xbf16> to vector<1x4xbf16>
    %c0_149 = arith.constant 0 : index
    %c0_150 = arith.constant 0 : index
    %171 = vector.load %arg15[%c0_149, %c0_150] : memref<4x128xbf16, #tpu.memory_space<vmem>>, vector<4x128xbf16>
    %cst_151 = arith.constant dense<0.000000e+00> : vector<1x128xf32>
    %172 = tpu.matmul %170, %171, %cst_151 {dimension_numbers = #tpu.dot_dimension_numbers<[1], [0], [0], [1], [0, 0, 1, 1], [], []>} : vector<1x4xbf16>, vector<4x128xbf16>, vector<1x128xf32> -> vector<1x128xf32>
    %c0_152 = arith.constant 0 : index
    %c0_153 = arith.constant 0 : index
    %173 = vector.load %arg16[%c0_152, %c0_153] : memref<1x128xf32, #tpu.memory_space<vmem>>, vector<1x128xf32>
    %174 = arith.addf %172, %173 : vector<1x128xf32>
    %cst_154 = arith.constant 0.000000e+00 : f32
    %175 = vector.broadcast %cst_154 : f32 to vector<1x128xf32>
    %176 = arith.cmpf oge, %174, %175 : vector<1x128xf32>
    %cst_155 = arith.constant 2.000000e-01 : f32
    %177 = vector.broadcast %cst_155 : f32 to vector<1x128xf32>
    %178 = arith.mulf %177, %174 : vector<1x128xf32>
    %179 = arith.select %176, %174, %178 : vector<1x128xi1>, vector<1x128xf32>
    %180 = arith.truncf %179 : vector<1x128xf32> to vector<1x128xbf16>
    %c0_156 = arith.constant 0 : index
    %c0_157 = arith.constant 0 : index
    %181 = vector.load %arg17[%c0_156, %c0_157] : memref<128x64xbf16, #tpu.memory_space<vmem>>, vector<128x64xbf16>
    %cst_158 = arith.constant dense<0.000000e+00> : vector<1x64xf32>
    %182 = tpu.matmul %180, %181, %cst_158 {dimension_numbers = #tpu.dot_dimension_numbers<[1], [0], [0], [1], [0, 0, 1, 1], [], []>} : vector<1x128xbf16>, vector<128x64xbf16>, vector<1x64xf32> -> vector<1x64xf32>
    %c0_159 = arith.constant 0 : index
    %c0_160 = arith.constant 0 : index
    %183 = vector.load %arg18[%c0_159, %c0_160] : memref<1x64xf32, #tpu.memory_space<vmem>>, vector<1x64xf32>
    %184 = arith.addf %182, %183 : vector<1x64xf32>
    %cst_161 = arith.constant 0.000000e+00 : f32
    %185 = vector.broadcast %cst_161 : f32 to vector<1x64xf32>
    %186 = arith.cmpf oge, %184, %185 : vector<1x64xf32>
    %cst_162 = arith.constant 2.000000e-01 : f32
    %187 = vector.broadcast %cst_162 : f32 to vector<1x64xf32>
    %188 = arith.mulf %187, %184 : vector<1x64xf32>
    %189 = arith.select %186, %184, %188 : vector<1x64xi1>, vector<1x64xf32>
    %190 = arith.truncf %189 : vector<1x64xf32> to vector<1x64xbf16>
    %c0_163 = arith.constant 0 : index
    %c0_164 = arith.constant 0 : index
    %191 = vector.load %arg20[%c0_163, %c0_164] : memref<64x128xbf16, #tpu.memory_space<vmem>>, vector<64x128xbf16>
    %cst_165 = arith.constant dense<0.000000e+00> : vector<1x128xf32>
    %192 = tpu.matmul %190, %191, %cst_165 {dimension_numbers = #tpu.dot_dimension_numbers<[1], [0], [0], [1], [0, 0, 1, 1], [], []>} : vector<1x64xbf16>, vector<64x128xbf16>, vector<1x128xf32> -> vector<1x128xf32>
    %c0_166 = arith.constant 0 : index
    %c0_167 = arith.constant 0 : index
    %193 = vector.load %arg21[%c0_166, %c0_167] : memref<1x128xf32, #tpu.memory_space<vmem>>, vector<1x128xf32>
    %194 = arith.addf %192, %193 : vector<1x128xf32>
    %195 = vector.extract_strided_slice %168 {offsets = [0, 0], sizes = [1, 96], strides = [1, 1]} : vector<3x96xf32> to vector<1x96xf32>
    %196 = arith.truncf %195 : vector<1x96xf32> to vector<1x96xbf16>
    %c0_168 = arith.constant 0 : index
    %c0_169 = arith.constant 0 : index
    %c0_170 = arith.constant 0 : index
    %197 = vector.load %arg19[%c0_168, %c0_169, %c0_170] : memref<3x96x128xbf16, #tpu.memory_space<vmem>>, vector<1x96x128xbf16>
    %198 = vector.shape_cast %197 : vector<1x96x128xbf16> to vector<96x128xbf16>
    %cst_171 = arith.constant dense<0.000000e+00> : vector<1x128xf32>
    %199 = tpu.matmul %196, %198, %cst_171 {dimension_numbers = #tpu.dot_dimension_numbers<[1], [0], [0], [1], [0, 0, 1, 1], [], []>} : vector<1x96xbf16>, vector<96x128xbf16>, vector<1x128xf32> -> vector<1x128xf32>
    %200 = arith.addf %194, %199 : vector<1x128xf32>
    %201 = vector.extract_strided_slice %168 {offsets = [1, 0], sizes = [1, 96], strides = [1, 1]} : vector<3x96xf32> to vector<1x96xf32>
    %202 = arith.truncf %201 : vector<1x96xf32> to vector<1x96xbf16>
    %c1_172 = arith.constant 1 : index
    %c0_173 = arith.constant 0 : index
    %c0_174 = arith.constant 0 : index
    %203 = vector.load %arg19[%c1_172, %c0_173, %c0_174] : memref<3x96x128xbf16, #tpu.memory_space<vmem>>, vector<1x96x128xbf16>
    %204 = vector.shape_cast %203 : vector<1x96x128xbf16> to vector<96x128xbf16>
    %cst_175 = arith.constant dense<0.000000e+00> : vector<1x128xf32>
    %205 = tpu.matmul %202, %204, %cst_175 {dimension_numbers = #tpu.dot_dimension_numbers<[1], [0], [0], [1], [0, 0, 1, 1], [], []>} : vector<1x96xbf16>, vector<96x128xbf16>, vector<1x128xf32> -> vector<1x128xf32>
    %206 = arith.addf %200, %205 : vector<1x128xf32>
    %207 = vector.extract_strided_slice %168 {offsets = [2, 0], sizes = [1, 96], strides = [1, 1]} : vector<3x96xf32> to vector<1x96xf32>
    %208 = arith.truncf %207 : vector<1x96xf32> to vector<1x96xbf16>
    %c2_176 = arith.constant 2 : index
    %c0_177 = arith.constant 0 : index
    %c0_178 = arith.constant 0 : index
    %209 = vector.load %arg19[%c2_176, %c0_177, %c0_178] : memref<3x96x128xbf16, #tpu.memory_space<vmem>>, vector<1x96x128xbf16>
    %210 = vector.shape_cast %209 : vector<1x96x128xbf16> to vector<96x128xbf16>
    %cst_179 = arith.constant dense<0.000000e+00> : vector<1x128xf32>
    %211 = tpu.matmul %208, %210, %cst_179 {dimension_numbers = #tpu.dot_dimension_numbers<[1], [0], [0], [1], [0, 0, 1, 1], [], []>} : vector<1x96xbf16>, vector<96x128xbf16>, vector<1x128xf32> -> vector<1x128xf32>
    %212 = arith.addf %206, %211 : vector<1x128xf32>
    %cst_180 = arith.constant 0.000000e+00 : f32
    %213 = vector.broadcast %cst_180 : f32 to vector<1x128xf32>
    %214 = arith.cmpf oge, %212, %213 : vector<1x128xf32>
    %cst_181 = arith.constant 2.000000e-01 : f32
    %215 = vector.broadcast %cst_181 : f32 to vector<1x128xf32>
    %216 = arith.mulf %215, %212 : vector<1x128xf32>
    %217 = arith.select %214, %212, %216 : vector<1x128xi1>, vector<1x128xf32>
    %218 = arith.truncf %217 : vector<1x128xf32> to vector<1x128xbf16>
    %c0_182 = arith.constant 0 : index
    %c0_183 = arith.constant 0 : index
    %219 = vector.load %arg22[%c0_182, %c0_183] : memref<128x32xbf16, #tpu.memory_space<vmem>>, vector<128x32xbf16>
    %cst_184 = arith.constant dense<0.000000e+00> : vector<1x32xf32>
    %220 = tpu.matmul %218, %219, %cst_184 {dimension_numbers = #tpu.dot_dimension_numbers<[1], [0], [0], [1], [0, 0, 1, 1], [], []>} : vector<1x128xbf16>, vector<128x32xbf16>, vector<1x32xf32> -> vector<1x32xf32>
    %c0_185 = arith.constant 0 : index
    %c0_186 = arith.constant 0 : index
    %221 = vector.load %arg23[%c0_185, %c0_186] : memref<1x32xf32, #tpu.memory_space<vmem>>, vector<1x32xf32>
    %222 = arith.addf %220, %221 : vector<1x32xf32>
    %cst_187 = arith.constant 0.000000e+00 : f32
    %223 = vector.broadcast %cst_187 : f32 to vector<1x32xf32>
    %224 = arith.cmpf oge, %222, %223 : vector<1x32xf32>
    %cst_188 = arith.constant 2.000000e-01 : f32
    %225 = vector.broadcast %cst_188 : f32 to vector<1x32xf32>
    %226 = arith.mulf %225, %222 : vector<1x32xf32>
    %227 = arith.select %224, %222, %226 : vector<1x32xi1>, vector<1x32xf32>
    %228 = arith.truncf %227 : vector<1x32xf32> to vector<1x32xbf16>
    %c0_189 = arith.constant 0 : index
    %c0_190 = arith.constant 0 : index
    %229 = vector.load %arg24[%c0_189, %c0_190] : memref<32x1xbf16, #tpu.memory_space<vmem>>, vector<32x1xbf16>
    %cst_191 = arith.constant dense<0.000000e+00> : vector<1x1xf32>
    %230 = tpu.matmul %228, %229, %cst_191 {dimension_numbers = #tpu.dot_dimension_numbers<[1], [0], [0], [1], [0, 0, 1, 1], [], []>} : vector<1x32xbf16>, vector<32x1xbf16>, vector<1x1xf32> -> vector<1x1xf32>
    %c0_192 = arith.constant 0 : index
    %c0_193 = arith.constant 0 : index
    %231 = vector.load %arg25[%c0_192, %c0_193] : memref<1x1xf32, #tpu.memory_space<vmem>>, vector<1x1xf32>
    %232 = arith.addf %230, %231 : vector<1x1xf32>
    %cst_194 = arith.constant 0.000000e+00 : f32
    %233 = vector.broadcast %cst_194 : f32 to vector<1x1xf32>
    %234 = arith.subf %233, %232 : vector<1x1xf32>
    %235 = math.exp %234 : vector<1x1xf32>
    %cst_195 = arith.constant 1.000000e+00 : f32
    %236 = vector.broadcast %cst_195 : f32 to vector<1x1xf32>
    %237 = arith.addf %236, %235 : vector<1x1xf32>
    %cst_196 = arith.constant 1.000000e+00 : f32
    %238 = vector.broadcast %cst_196 : f32 to vector<1x1xf32>
    %239 = arith.divf %238, %237 : vector<1x1xf32>
    %c0_197 = arith.constant 0 : index
    %c0_198 = arith.constant 0 : index
    %c0_199 = arith.constant 0 : index
    %240 = vector.load %arg26[%c0_197, %c0_198, %c0_199] : memref<1x1x1xf32, #tpu.memory_space<vmem>>, vector<1x1x1xf32>
    %241 = vector.shape_cast %240 : vector<1x1x1xf32> to vector<1x1xf32>
    %242 = vector.shape_cast %239 : vector<1x1xf32> to vector<1x1x1xf32>
    tpu.vector_store %arg26[%c0_197, %c0_198, %c0_199], %242 {strides = array<i32>} : memref<1x1x1xf32, #tpu.memory_space<vmem>>, vector<1x1x1xf32>,
    return
  }
  func.func @transform_0(%arg0: i32) -> (i32, i32, i32) {
    %c0_i32 = arith.constant 0 : i32
    %c0_i32_0 = arith.constant 0 : i32
    %c0_i32_1 = arith.constant 0 : i32
    return %arg0, %c0_i32, %c0_i32_0 : i32, i32, i32
  }
  func.func @transform_1(%arg0: i32) -> (i32, i32, i32) {
    %c0_i32 = arith.constant 0 : i32
    %c0_i32_0 = arith.constant 0 : i32
    %c0_i32_1 = arith.constant 0 : i32
    %c0_i32_2 = arith.constant 0 : i32
    return %c0_i32, %c0_i32_0, %c0_i32_1 : i32, i32, i32
  }
  func.func @transform_2(%arg0: i32) -> (i32, i32, i32) {
    %c0_i32 = arith.constant 0 : i32
    %c0_i32_0 = arith.constant 0 : i32
    %c0_i32_1 = arith.constant 0 : i32
    %c0_i32_2 = arith.constant 0 : i32
    return %c0_i32, %c0_i32_0, %c0_i32_1 : i32, i32, i32
  }
  func.func @transform_3(%arg0: i32) -> (i32, i32) {
    %c0_i32 = arith.constant 0 : i32
    %c0_i32_0 = arith.constant 0 : i32
    %c0_i32_1 = arith.constant 0 : i32
    return %c0_i32, %c0_i32_0 : i32, i32
  }
  func.func @transform_4(%arg0: i32) -> (i32, i32, i32) {
    %c0_i32 = arith.constant 0 : i32
    %c0_i32_0 = arith.constant 0 : i32
    %c0_i32_1 = arith.constant 0 : i32
    %c0_i32_2 = arith.constant 0 : i32
    return %c0_i32, %c0_i32_0, %c0_i32_1 : i32, i32, i32
  }
  func.func @transform_5(%arg0: i32) -> (i32, i32, i32) {
    %c0_i32 = arith.constant 0 : i32
    %c0_i32_0 = arith.constant 0 : i32
    %c0_i32_1 = arith.constant 0 : i32
    %c0_i32_2 = arith.constant 0 : i32
    return %c0_i32, %c0_i32_0, %c0_i32_1 : i32, i32, i32
  }
  func.func @transform_6(%arg0: i32) -> (i32, i32) {
    %c0_i32 = arith.constant 0 : i32
    %c0_i32_0 = arith.constant 0 : i32
    %c0_i32_1 = arith.constant 0 : i32
    return %c0_i32, %c0_i32_0 : i32, i32
  }
  func.func @transform_7(%arg0: i32) -> (i32, i32, i32) {
    %c0_i32 = arith.constant 0 : i32
    %c0_i32_0 = arith.constant 0 : i32
    %c0_i32_1 = arith.constant 0 : i32
    %c0_i32_2 = arith.constant 0 : i32
    return %c0_i32, %c0_i32_0, %c0_i32_1 : i32, i32, i32
  }
  func.func @transform_8(%arg0: i32) -> (i32, i32, i32) {
    %c0_i32 = arith.constant 0 : i32
    %c0_i32_0 = arith.constant 0 : i32
    %c0_i32_1 = arith.constant 0 : i32
    %c0_i32_2 = arith.constant 0 : i32
    return %c0_i32, %c0_i32_0, %c0_i32_1 : i32, i32, i32
  }
  func.func @transform_9(%arg0: i32) -> (i32, i32) {
    %c0_i32 = arith.constant 0 : i32
    %c0_i32_0 = arith.constant 0 : i32
    %c0_i32_1 = arith.constant 0 : i32
    return %c0_i32, %c0_i32_0 : i32, i32
  }
  func.func @transform_10(%arg0: i32) -> (i32, i32, i32) {
    %c0_i32 = arith.constant 0 : i32
    %c0_i32_0 = arith.constant 0 : i32
    %c0_i32_1 = arith.constant 0 : i32
    %c0_i32_2 = arith.constant 0 : i32
    return %c0_i32, %c0_i32_0, %c0_i32_1 : i32, i32, i32
  }
  func.func @transform_11(%arg0: i32) -> (i32, i32, i32) {
    %c0_i32 = arith.constant 0 : i32
    %c0_i32_0 = arith.constant 0 : i32
    %c0_i32_1 = arith.constant 0 : i32
    %c0_i32_2 = arith.constant 0 : i32
    return %c0_i32, %c0_i32_0, %c0_i32_1 : i32, i32, i32
  }
  func.func @transform_12(%arg0: i32) -> (i32, i32) {
    %c0_i32 = arith.constant 0 : i32
    %c0_i32_0 = arith.constant 0 : i32
    %c0_i32_1 = arith.constant 0 : i32
    return %c0_i32, %c0_i32_0 : i32, i32
  }
  func.func @transform_13(%arg0: i32) -> (i32, i32, i32) {
    %c0_i32 = arith.constant 0 : i32
    %c0_i32_0 = arith.constant 0 : i32
    %c0_i32_1 = arith.constant 0 : i32
    return %arg0, %c0_i32, %c0_i32_0 : i32, i32, i32
  }
  func.func @transform_14(%arg0: i32) -> (i32, i32) {
    %c0_i32 = arith.constant 0 : i32
    %c0_i32_0 = arith.constant 0 : i32
    %c0_i32_1 = arith.constant 0 : i32
    return %c0_i32, %c0_i32_0 : i32, i32
  }
  func.func @transform_15(%arg0: i32) -> (i32, i32) {
    %c0_i32 = arith.constant 0 : i32
    %c0_i32_0 = arith.constant 0 : i32
    %c0_i32_1 = arith.constant 0 : i32
    return %c0_i32, %c0_i32_0 : i32, i32
  }
  func.func @transform_16(%arg0: i32) -> (i32, i32) {
    %c0_i32 = arith.constant 0 : i32
    %c0_i32_0 = arith.constant 0 : i32
    %c0_i32_1 = arith.constant 0 : i32
    return %c0_i32, %c0_i32_0 : i32, i32
  }
  func.func @transform_17(%arg0: i32) -> (i32, i32) {
    %c0_i32 = arith.constant 0 : i32
    %c0_i32_0 = arith.constant 0 : i32
    %c0_i32_1 = arith.constant 0 : i32
    return %c0_i32, %c0_i32_0 : i32, i32
  }
  func.func @transform_18(%arg0: i32) -> (i32, i32, i32) {
    %c0_i32 = arith.constant 0 : i32
    %c0_i32_0 = arith.constant 0 : i32
    %c0_i32_1 = arith.constant 0 : i32
    %c0_i32_2 = arith.constant 0 : i32
    return %c0_i32, %c0_i32_0, %c0_i32_1 : i32, i32, i32
  }
  func.func @transform_19(%arg0: i32) -> (i32, i32) {
    %c0_i32 = arith.constant 0 : i32
    %c0_i32_0 = arith.constant 0 : i32
    %c0_i32_1 = arith.constant 0 : i32
    return %c0_i32, %c0_i32_0 : i32, i32
  }
  func.func @transform_20(%arg0: i32) -> (i32, i32) {
    %c0_i32 = arith.constant 0 : i32
    %c0_i32_0 = arith.constant 0 : i32
    %c0_i32_1 = arith.constant 0 : i32
    return %c0_i32, %c0_i32_0 : i32, i32
  }
  func.func @transform_21(%arg0: i32) -> (i32, i32) {
    %c0_i32 = arith.constant 0 : i32
    %c0_i32_0 = arith.constant 0 : i32
    %c0_i32_1 = arith.constant 0 : i32
    return %c0_i32, %c0_i32_0 : i32, i32
  }
  func.func @transform_22(%arg0: i32) -> (i32, i32) {
    %c0_i32 = arith.constant 0 : i32
    %c0_i32_0 = arith.constant 0 : i32
    %c0_i32_1 = arith.constant 0 : i32
    return %c0_i32, %c0_i32_0 : i32, i32
  }
  func.func @transform_23(%arg0: i32) -> (i32, i32) {
    %c0_i32 = arith.constant 0 : i32
    %c0_i32_0 = arith.constant 0 : i32
    %c0_i32_1 = arith.constant 0 : i32
    return %c0_i32, %c0_i32_0 : i32, i32
  }
  func.func @transform_24(%arg0: i32) -> (i32, i32) {
    %c0_i32 = arith.constant 0 : i32
    %c0_i32_0 = arith.constant 0 : i32
    %c0_i32_1 = arith.constant 0 : i32
    return %c0_i32, %c0_i32_0 : i32, i32
  }
  func.func @transform_25(%arg0: i32) -> (i32, i32, i32) {
    %c0_i32 = arith.constant 0 : i32
    %c0_i32_0 = arith.constant 0 : i32
    %c0_i32_1 = arith.constant 0 : i32
    return %arg0, %c0_i32, %c0_i32_0 : i32, i32, i32
  }
}

</mosaic_0001>

<llo_original>
// kernel: multi_disc_forward.1
$region0: #{multi_disc_forward.1}
  #allocation0 [shape = 'u32[]', space=smem, size = 0x4, offset = 0x4, fixed_abs, tag = 'smem constant byte address 0x4 - core index']
  #allocation1 [shape = 'u32[144,128]{1,0:T(1,128)}', space=vmem, size = 0x12000, scoped, tag = 'internal scratch']
  #allocation2 [shape = 'f32[1,1]{1,0:T(1,128)S(1)}', space=vmem, size = 0x200, scoped, tag = 'scoped memory for multi_disc_forward.1']
  %s0 = inlined_call_operand.vmem [shape: bf16[2,64,256], index: 0, kind: input, shape index: {}]
  %s1 = inlined_call_operand.vmem [shape: bf16[4,32,64], index: 1, kind: input, shape index: {}]
  %s2 = inlined_call_operand.vmem [shape: bf16[4,256,256], index: 2, kind: input, shape index: {}]
  %s3 = inlined_call_operand.vmem [shape: f32[1,256], index: 3, kind: input, shape index: {}]
  %s4 = inlined_call_operand.vmem [shape: bf16[4,16,32], index: 4, kind: input, shape index: {}]
  %s5 = inlined_call_operand.vmem [shape: bf16[4,256,256], index: 5, kind: input, shape index: {}]
  %s6 = inlined_call_operand.vmem [shape: f32[1,256], index: 6, kind: input, shape index: {}]
  %s7 = inlined_call_operand.vmem [shape: bf16[4,8,16], index: 7, kind: input, shape index: {}]
  %s8 = inlined_call_operand.hbm [shape: bf16[4,256,256], index: 8, kind: input, shape index: {}]
  %s9 = inlined_call_operand.vmem [shape: f32[1,256], index: 9, kind: input, shape index: {}]
  %s10 = inlined_call_operand.vmem [shape: bf16[4,3,8], index: 10, kind: input, shape index: {}]
  %s11 = inlined_call_operand.vmem [shape: bf16[4,256,96], index: 11, kind: input, shape index: {}]
  %s12 = inlined_call_operand.vmem [shape: f32[1,96], index: 12, kind: input, shape index: {}]
  %s13 = inlined_call_operand.vmem [shape: bf16[2,1,4], index: 13, kind: input, shape index: {}]
  %s14 = inlined_call_operand.vmem [shape: bf16[4,128], index: 14, kind: input, shape index: {}]
  %s15 = inlined_call_operand.vmem [shape: f32[1,128], index: 15, kind: input, shape index: {}]
  %s16 = inlined_call_operand.vmem [shape: bf16[128,64], index: 16, kind: input, shape index: {}]
  %s17 = inlined_call_operand.vmem [shape: f32[1,64], index: 17, kind: input, shape index: {}]
  %s18 = inlined_call_operand.vmem [shape: bf16[3,96,128], index: 18, kind: input, shape index: {}]
  %s19 = inlined_call_operand.vmem [shape: bf16[64,128], index: 19, kind: input, shape index: {}]
  %s20 = inlined_call_operand.vmem [shape: f32[1,128], index: 20, kind: input, shape index: {}]
  %s21 = inlined_call_operand.vmem [shape: bf16[128,32], index: 21, kind: input, shape index: {}]
  %s22 = inlined_call_operand.vmem [shape: f32[1,32], index: 22, kind: input, shape index: {}]
  %s23 = inlined_call_operand.vmem [shape: bf16[32,1], index: 23, kind: input, shape index: {}]
  %s24 = inlined_call_operand.<no memory space> [shape: f32[1,1], index: 24, kind: input, shape index: {}]
  %s25 = inlined_call_operand.vmem [shape: f32[2,1,1], index: 25, kind: output, shape index: {}]
  %s26 = sld [smem:[#allocation0]]
  $region137: #{multi_disc_forward.1} parent=0
    _
  %s28 = ssub.s32 1, %s26
  %s29 = scalar_select 0, %s28, %s26
  %v30 = vstv %s24
  %31 = vst [vmem:[#allocation2] sm:$0x1] %v30
  $region1: #{multi_disc_forward.1} parent=0
    #allocation3 [shape = 'u8[524288]{0}', space=vmem, size = 0x80000, scoped, tag = 'input window, operand 8, single buffered']
    #allocation4 [shape = 's32[2]{0}', space=sflag, size = 0x8, scoped, tag = 'scoped memory for multi_disc_forward.1']
    %32 = vsyncpa [#allocation4], 0
    loop: start=0, step=1, limit=4
    $region2: #{multi_disc_forward.1} parent=1 // loop_pre_header
      _
    $region3: #{multi_disc_forward.1} parent=1 // loop_header
      %s34 = sphi 0, %s38
      %p35 = scmp.ge.s32.totalorder %s34, 4
      %s44 = sphi 0, %s46
      %s47 = sphi 0, %s44
      %s48 = sphi 0, %s47
      %s64 = sphi 0, %s48
      %s68 = sphi 0, %s68
      %s70 = sphi 0, %s68
      %s71 = sphi 0, %s70
      %s85 = sphi 0, %s71
      %s89 = sphi 0, %s89
      %s91 = sphi 0, %s89
      %s92 = sphi 0, %s91
      %s106 = sphi 0, %s92
      %s110 = sphi 0, %s110
      %s112 = sphi 0, %s110
      %s113 = sphi 0, %s112
      %s127 = sphi 0, %s113
      %s131 = sphi 0, %s131
      %s133 = sphi 0, %s131
      %s134 = sphi 0, %s133
      %s148 = sphi 0, %s134
      %s152 = sphi 0, %s152
      %s154 = sphi 0, %s152
      %s155 = sphi 0, %s154
      %s169 = sphi 0, %s155
      %s173 = sphi 0, %s173
      %s175 = sphi 0, %s173
      %s176 = sphi 0, %s175
      %s190 = sphi 0, %s176
      %s194 = sphi 0, %s194
      %s196 = sphi 0, %s194
      %s197 = sphi 0, %s196
      %s211 = sphi 0, %s197
      %s215 = sphi 0, %s215
      %s217 = sphi 0, %s215
      %s218 = sphi 0, %s217
      %s232 = sphi 0, %s218
      %s236 = sphi 0, %s236
      %s238 = sphi 0, %s236
      %s239 = sphi 0, %s238
      %s253 = sphi 0, %s239
      %s257 = sphi 0, %s257
      %s259 = sphi 0, %s257
      %s260 = sphi 0, %s259
      %s274 = sphi 0, %s260
      %s278 = sphi 0, %s278
      %s280 = sphi 0, %s278
      %s281 = sphi 0, %s280
      %s295 = sphi 0, %s281
      %s299 = sphi 0, %s299
      %s301 = sphi 0, %s299
      %s302 = sphi 0, %s301
      %s316 = sphi 0, %s302
      %s322 = sphi 0, %s324
      %s325 = sphi 0, %s322
      %s326 = sphi 0, %s325
      %s342 = sphi 0, %s326
      %s346 = sphi 0, %s346
      %s348 = sphi 0, %s346
      %s349 = sphi 0, %s348
      %s363 = sphi 0, %s349
      %s367 = sphi 0, %s367
      %s369 = sphi 0, %s367
      %s370 = sphi 0, %s369
      %s384 = sphi 0, %s370
      %s388 = sphi 0, %s388
      %s390 = sphi 0, %s388
      %s391 = sphi 0, %s390
      %s405 = sphi 0, %s391
      %s409 = sphi 0, %s409
      %s411 = sphi 0, %s409
      %s412 = sphi 0, %s411
      %s426 = sphi 0, %s412
      %s430 = sphi 0, %s430
      %s432 = sphi 0, %s430
      %s433 = sphi 0, %s432
      %s447 = sphi 0, %s433
      %s451 = sphi 0, %s451
      %s453 = sphi 0, %s451
      %s454 = sphi 0, %s453
      %s468 = sphi 0, %s454
      %s472 = sphi 0, %s472
      %s474 = sphi 0, %s472
      %s475 = sphi 0, %s474
      %s489 = sphi 0, %s475
      %s493 = sphi 0, %s493
      %s495 = sphi 0, %s493
      %s496 = sphi 0, %s495
      %s510 = sphi 0, %s496
      %s514 = sphi 0, %s514
      %s516 = sphi 0, %s514
      %s517 = sphi 0, %s516
      %s531 = sphi 0, %s517
      %s535 = sphi 0, %s535
      %s537 = sphi 0, %s535
      %s538 = sphi 0, %s537
      %s552 = sphi 0, %s538
      %s556 = sphi 0, %s556
      %s558 = sphi 0, %s556
      %s559 = sphi 0, %s558
      %s573 = sphi 0, %s559
      %s579 = sphi 0, %s581
      %s582 = sphi 0, %s579
      %s583 = sphi 0, %s582
      %s599 = sphi 0, %s583
    $region4: #{multi_disc_forward.1} parent=1 // loop_header_branch
      %37 = sbr.rel (%p35) target = $region8
    $region5: #{multi_disc_forward.1} parent=1 // loop_body
      %s39 = ssub.s32 %s34, 1
      %s40 = ssub.s32 %s34, 2
      %s41 = sadd.s32 %s34, 1
      %s42 = ssub.s32 %s34, %s41
      %p43 = scmp.eq.s32.totalorder %s42, 0
      %s45 = sadd.s32 %s44, 1
      %s46 = scalar_select %p43, %s44, %s45
      %p49 = pneg %p43
      %p50 = scmp.eq.s32.totalorder %s34, 1
      %p51 = por %p49, %p50
      %p52 = scmp.ne.s32.totalorder %s44, %s47
      %p53 = scmp.eq.s32.totalorder %s34, 0
      %p54 = por %p52, %p53
      %p55 = scmp.ne.s32.totalorder %s44, %s47
      %p56 = scmp.eq.s32.totalorder %s39, 1
      %p57 = por %p55, %p56
      %p58 = scmp.ne.s32.totalorder %s47, %s48
      %p59 = scmp.eq.s32.totalorder %s39, 0
      %p60 = por %p58, %p59
      %p61 = scmp.ne.s32.totalorder %s47, %s48
      %p62 = scmp.eq.s32.totalorder %s40, 1
      %p63 = por %p61, %p62
      %p65 = scmp.ne.s32.totalorder %s48, %s64
      %p66 = scmp.eq.s32.totalorder %s40, 0
      %p67 = por %p65, %p66
      %s69 = sadd.s32 %s68, 1
      %p72 = scmp.eq.s32.totalorder %s34, 1
      %p73 = scmp.ne.s32.totalorder %s68, %s70
      %p74 = scmp.eq.s32.totalorder %s34, 0
      %p75 = por %p73, %p74
      %p76 = scmp.ne.s32.totalorder %s68, %s70
      %p77 = scmp.eq.s32.totalorder %s39, 1
      %p78 = por %p76, %p77
      %p79 = scmp.ne.s32.totalorder %s70, %s71
      %p80 = scmp.eq.s32.totalorder %s39, 0
      %p81 = por %p79, %p80
      %p82 = scmp.ne.s32.totalorder %s70, %s71
      %p83 = scmp.eq.s32.totalorder %s40, 1
      %p84 = por %p82, %p83
      %p86 = scmp.ne.s32.totalorder %s71, %s85
      %p87 = scmp.eq.s32.totalorder %s40, 0
      %p88 = por %p86, %p87
      %s90 = sadd.s32 %s89, 1
      %p93 = scmp.eq.s32.totalorder %s34, 1
      %p94 = scmp.ne.s32.totalorder %s89, %s91
      %p95 = scmp.eq.s32.totalorder %s34, 0
      %p96 = por %p94, %p95
      %p97 = scmp.ne.s32.totalorder %s89, %s91
      %p98 = scmp.eq.s32.totalorder %s39, 1
      %p99 = por %p97, %p98
      %p100 = scmp.ne.s32.totalorder %s91, %s92
      %p101 = scmp.eq.s32.totalorder %s39, 0
      %p102 = por %p100, %p101
      %p103 = scmp.ne.s32.totalorder %s91, %s92
      %p104 = scmp.eq.s32.totalorder %s40, 1
      %p105 = por %p103, %p104
      %p107 = scmp.ne.s32.totalorder %s92, %s106
      %p108 = scmp.eq.s32.totalorder %s40, 0
      %p109 = por %p107, %p108
      %s111 = sadd.s32 %s110, 1
      %p114 = scmp.eq.s32.totalorder %s34, 1
      %p115 = scmp.ne.s32.totalorder %s110, %s112
      %p116 = scmp.eq.s32.totalorder %s34, 0
      %p117 = por %p115, %p116
      %p118 = scmp.ne.s32.totalorder %s110, %s112
      %p119 = scmp.eq.s32.totalorder %s39, 1
      %p120 = por %p118, %p119
      %p121 = scmp.ne.s32.totalorder %s112, %s113
      %p122 = scmp.eq.s32.totalorder %s39, 0
      %p123 = por %p121, %p122
      %p124 = scmp.ne.s32.totalorder %s112, %s113
      %p125 = scmp.eq.s32.totalorder %s40, 1
      %p126 = por %p124, %p125
      %p128 = scmp.ne.s32.totalorder %s113, %s127
      %p129 = scmp.eq.s32.totalorder %s40, 0
      %p130 = por %p128, %p129
      %s132 = sadd.s32 %s131, 1
      %p135 = scmp.eq.s32.totalorder %s34, 1
      %p136 = scmp.ne.s32.totalorder %s131, %s133
      %p137 = scmp.eq.s32.totalorder %s34, 0
      %p138 = por %p136, %p137
      %p139 = scmp.ne.s32.totalorder %s131, %s133
      %p140 = scmp.eq.s32.totalorder %s39, 1
      %p141 = por %p139, %p140
      %p142 = scmp.ne.s32.totalorder %s133, %s134
      %p143 = scmp.eq.s32.totalorder %s39, 0
      %p144 = por %p142, %p143
      %p145 = scmp.ne.s32.totalorder %s133, %s134
      %p146 = scmp.eq.s32.totalorder %s40, 1
      %p147 = por %p145, %p146
      %p149 = scmp.ne.s32.totalorder %s134, %s148
      %p150 = scmp.eq.s32.totalorder %s40, 0
      %p151 = por %p149, %p150
      %s153 = sadd.s32 %s152, 1
      %p156 = scmp.eq.s32.totalorder %s34, 1
      %p157 = scmp.ne.s32.totalorder %s152, %s154
      %p158 = scmp.eq.s32.totalorder %s34, 0
      %p159 = por %p157, %p158
      %p160 = scmp.ne.s32.totalorder %s152, %s154
      %p161 = scmp.eq.s32.totalorder %s39, 1
      %p162 = por %p160, %p161
      %p163 = scmp.ne.s32.totalorder %s154, %s155
      %p164 = scmp.eq.s32.totalorder %s39, 0
      %p165 = por %p163, %p164
      %p166 = scmp.ne.s32.totalorder %s154, %s155
      %p167 = scmp.eq.s32.totalorder %s40, 1
      %p168 = por %p166, %p167
      %p170 = scmp.ne.s32.totalorder %s155, %s169
      %p171 = scmp.eq.s32.totalorder %s40, 0
      %p172 = por %p170, %p171
      %s174 = sadd.s32 %s173, 1
      %p177 = scmp.eq.s32.totalorder %s34, 1
      %p178 = scmp.ne.s32.totalorder %s173, %s175
      %p179 = scmp.eq.s32.totalorder %s34, 0
      %p180 = por %p178, %p179
      %p181 = scmp.ne.s32.totalorder %s173, %s175
      %p182 = scmp.eq.s32.totalorder %s39, 1
      %p183 = por %p181, %p182
      %p184 = scmp.ne.s32.totalorder %s175, %s176
      %p185 = scmp.eq.s32.totalorder %s39, 0
      %p186 = por %p184, %p185
      %p187 = scmp.ne.s32.totalorder %s175, %s176
      %p188 = scmp.eq.s32.totalorder %s40, 1
      %p189 = por %p187, %p188
      %p191 = scmp.ne.s32.totalorder %s176, %s190
      %p192 = scmp.eq.s32.totalorder %s40, 0
      %p193 = por %p191, %p192
      %s195 = sadd.s32 %s194, 1
      %p198 = scmp.eq.s32.totalorder %s34, 1
      %p199 = scmp.ne.s32.totalorder %s194, %s196
      %p200 = scmp.eq.s32.totalorder %s34, 0
      %p201 = por %p199, %p200
      %p202 = scmp.ne.s32.totalorder %s194, %s196
      %p203 = scmp.eq.s32.totalorder %s39, 1
      %p204 = por %p202, %p203
      %p205 = scmp.ne.s32.totalorder %s196, %s197
      %p206 = scmp.eq.s32.totalorder %s39, 0
      %p207 = por %p205, %p206
      %p208 = scmp.ne.s32.totalorder %s196, %s197
      %p209 = scmp.eq.s32.totalorder %s40, 1
      %p210 = por %p208, %p209
      %p212 = scmp.ne.s32.totalorder %s197, %s211
      %p213 = scmp.eq.s32.totalorder %s40, 0
      %p214 = por %p212, %p213
      %s216 = sadd.s32 %s215, 1
      %p219 = scmp.eq.s32.totalorder %s34, 1
      %p220 = scmp.ne.s32.totalorder %s215, %s217
      %p221 = scmp.eq.s32.totalorder %s34, 0
      %p222 = por %p220, %p221
      %p223 = scmp.ne.s32.totalorder %s215, %s217
      %p224 = scmp.eq.s32.totalorder %s39, 1
      %p225 = por %p223, %p224
      %p226 = scmp.ne.s32.totalorder %s217, %s218
      %p227 = scmp.eq.s32.totalorder %s39, 0
      %p228 = por %p226, %p227
      %p229 = scmp.ne.s32.totalorder %s217, %s218
      %p230 = scmp.eq.s32.totalorder %s40, 1
      %p231 = por %p229, %p230
      %p233 = scmp.ne.s32.totalorder %s218, %s232
      %p234 = scmp.eq.s32.totalorder %s40, 0
      %p235 = por %p233, %p234
      %s237 = sadd.s32 %s236, 1
      %p240 = scmp.eq.s32.totalorder %s34, 1
      %p241 = scmp.ne.s32.totalorder %s236, %s238
      %p242 = scmp.eq.s32.totalorder %s34, 0
      %p243 = por %p241, %p242
      %p244 = scmp.ne.s32.totalorder %s236, %s238
      %p245 = scmp.eq.s32.totalorder %s39, 1
      %p246 = por %p244, %p245
      %p247 = scmp.ne.s32.totalorder %s238, %s239
      %p248 = scmp.eq.s32.totalorder %s39, 0
      %p249 = por %p247, %p248
      %p250 = scmp.ne.s32.totalorder %s238, %s239
      %p251 = scmp.eq.s32.totalorder %s40, 1
      %p252 = por %p250, %p251
      %p254 = scmp.ne.s32.totalorder %s239, %s253
      %p255 = scmp.eq.s32.totalorder %s40, 0
      %p256 = por %p254, %p255
      %s258 = sadd.s32 %s257, 1
      %p261 = scmp.eq.s32.totalorder %s34, 1
      %p262 = scmp.ne.s32.totalorder %s257, %s259
      %p263 = scmp.eq.s32.totalorder %s34, 0
      %p264 = por %p262, %p263
      %p265 = scmp.ne.s32.totalorder %s257, %s259
      %p266 = scmp.eq.s32.totalorder %s39, 1
      %p267 = por %p265, %p266
      %p268 = scmp.ne.s32.totalorder %s259, %s260
      %p269 = scmp.eq.s32.totalorder %s39, 0
      %p270 = por %p268, %p269
      %p271 = scmp.ne.s32.totalorder %s259, %s260
      %p272 = scmp.eq.s32.totalorder %s40, 1
      %p273 = por %p271, %p272
      %p275 = scmp.ne.s32.totalorder %s260, %s274
      %p276 = scmp.eq.s32.totalorder %s40, 0
      %p277 = por %p275, %p276
      %s279 = sadd.s32 %s278, 1
      %p282 = scmp.eq.s32.totalorder %s34, 1
      %p283 = scmp.ne.s32.totalorder %s278, %s280
      %p284 = scmp.eq.s32.totalorder %s34, 0
      %p285 = por %p283, %p284
      %p286 = scmp.ne.s32.totalorder %s278, %s280
      %p287 = scmp.eq.s32.totalorder %s39, 1
      %p288 = por %p286, %p287
      %p289 = scmp.ne.s32.totalorder %s280, %s281
      %p290 = scmp.eq.s32.totalorder %s39, 0
      %p291 = por %p289, %p290
      %p292 = scmp.ne.s32.totalorder %s280, %s281
      %p293 = scmp.eq.s32.totalorder %s40, 1
      %p294 = por %p292, %p293
      %p296 = scmp.ne.s32.totalorder %s281, %s295
      %p297 = scmp.eq.s32.totalorder %s40, 0
      %p298 = por %p296, %p297
      %s300 = sadd.s32 %s299, 1
      %p303 = scmp.eq.s32.totalorder %s34, 1
      %p304 = scmp.ne.s32.totalorder %s299, %s301
      %p305 = scmp.eq.s32.totalorder %s34, 0
      %p306 = por %p304, %p305
      %p307 = scmp.ne.s32.totalorder %s299, %s301
      %p308 = scmp.eq.s32.totalorder %s39, 1
      %p309 = por %p307, %p308
      %p310 = scmp.ne.s32.totalorder %s301, %s302
      %p311 = scmp.eq.s32.totalorder %s39, 0
      %p312 = por %p310, %p311
      %p313 = scmp.ne.s32.totalorder %s301, %s302
      %p314 = scmp.eq.s32.totalorder %s40, 1
      %p315 = por %p313, %p314
      %p317 = scmp.ne.s32.totalorder %s302, %s316
      %p318 = scmp.eq.s32.totalorder %s40, 0
      %p319 = por %p317, %p318
      %s320 = ssub.s32 %s34, %s41
      %p321 = scmp.eq.s32.totalorder %s320, 0
      %s323 = sadd.s32 %s322, 1
      %s324 = scalar_select %p321, %s322, %s323
      %p327 = pneg %p321
      %p328 = scmp.eq.s32.totalorder %s34, 1
      %p329 = por %p327, %p328
      %p330 = scmp.ne.s32.totalorder %s322, %s325
      %p331 = scmp.eq.s32.totalorder %s34, 0
      %p332 = por %p330, %p331
      %p333 = scmp.ne.s32.totalorder %s322, %s325
      %p334 = scmp.eq.s32.totalorder %s39, 1
      %p335 = por %p333, %p334
      %p336 = scmp.ne.s32.totalorder %s325, %s326
      %p337 = scmp.eq.s32.totalorder %s39, 0
      %p338 = por %p336, %p337
      %p339 = scmp.ne.s32.totalorder %s325, %s326
      %p340 = scmp.eq.s32.totalorder %s40, 1
      %p341 = por %p339, %p340
      %p343 = scmp.ne.s32.totalorder %s326, %s342
      %p344 = scmp.eq.s32.totalorder %s40, 0
      %p345 = por %p343, %p344
      %s347 = sadd.s32 %s346, 1
      %p350 = scmp.eq.s32.totalorder %s34, 1
      %p351 = scmp.ne.s32.totalorder %s346, %s348
      %p352 = scmp.eq.s32.totalorder %s34, 0
      %p353 = por %p351, %p352
      %p354 = scmp.ne.s32.totalorder %s346, %s348
      %p355 = scmp.eq.s32.totalorder %s39, 1
      %p356 = por %p354, %p355
      %p357 = scmp.ne.s32.totalorder %s348, %s349
      %p358 = scmp.eq.s32.totalorder %s39, 0
      %p359 = por %p357, %p358
      %p360 = scmp.ne.s32.totalorder %s348, %s349
      %p361 = scmp.eq.s32.totalorder %s40, 1
      %p362 = por %p360, %p361
      %p364 = scmp.ne.s32.totalorder %s349, %s363
      %p365 = scmp.eq.s32.totalorder %s40, 0
      %p366 = por %p364, %p365
      %s368 = sadd.s32 %s367, 1
      %p371 = scmp.eq.s32.totalorder %s34, 1
      %p372 = scmp.ne.s32.totalorder %s367, %s369
      %p373 = scmp.eq.s32.totalorder %s34, 0
      %p374 = por %p372, %p373
      %p375 = scmp.ne.s32.totalorder %s367, %s369
      %p376 = scmp.eq.s32.totalorder %s39, 1
      %p377 = por %p375, %p376
      %p378 = scmp.ne.s32.totalorder %s369, %s370
      %p379 = scmp.eq.s32.totalorder %s39, 0
      %p380 = por %p378, %p379
      %p381 = scmp.ne.s32.totalorder %s369, %s370
      %p382 = scmp.eq.s32.totalorder %s40, 1
      %p383 = por %p381, %p382
      %p385 = scmp.ne.s32.totalorder %s370, %s384
      %p386 = scmp.eq.s32.totalorder %s40, 0
      %p387 = por %p385, %p386
      %s389 = sadd.s32 %s388, 1
      %p392 = scmp.eq.s32.totalorder %s34, 1
      %p393 = scmp.ne.s32.totalorder %s388, %s390
      %p394 = scmp.eq.s32.totalorder %s34, 0
      %p395 = por %p393, %p394
      %p396 = scmp.ne.s32.totalorder %s388, %s390
      %p397 = scmp.eq.s32.totalorder %s39, 1
      %p398 = por %p396, %p397
      %p399 = scmp.ne.s32.totalorder %s390, %s391
      %p400 = scmp.eq.s32.totalorder %s39, 0
      %p401 = por %p399, %p400
      %p402 = scmp.ne.s32.totalorder %s390, %s391
      %p403 = scmp.eq.s32.totalorder %s40, 1
      %p404 = por %p402, %p403
      %p406 = scmp.ne.s32.totalorder %s391, %s405
      %p407 = scmp.eq.s32.totalorder %s40, 0
      %p408 = por %p406, %p407
      %s410 = sadd.s32 %s409, 1
      %p413 = scmp.eq.s32.totalorder %s34, 1
      %p414 = scmp.ne.s32.totalorder %s409, %s411
      %p415 = scmp.eq.s32.totalorder %s34, 0
      %p416 = por %p414, %p415
      %p417 = scmp.ne.s32.totalorder %s409, %s411
      %p418 = scmp.eq.s32.totalorder %s39, 1
      %p419 = por %p417, %p418
      %p420 = scmp.ne.s32.totalorder %s411, %s412
      %p421 = scmp.eq.s32.totalorder %s39, 0
      %p422 = por %p420, %p421
      %p423 = scmp.ne.s32.totalorder %s411, %s412
      %p424 = scmp.eq.s32.totalorder %s40, 1
      %p425 = por %p423, %p424
      %p427 = scmp.ne.s32.totalorder %s412, %s426
      %p428 = scmp.eq.s32.totalorder %s40, 0
      %p429 = por %p427, %p428
      %s431 = sadd.s32 %s430, 1
      %p434 = scmp.eq.s32.totalorder %s34, 1
      %p435 = scmp.ne.s32.totalorder %s430, %s432
      %p436 = scmp.eq.s32.totalorder %s34, 0
      %p437 = por %p435, %p436
      %p438 = scmp.ne.s32.totalorder %s430, %s432
      %p439 = scmp.eq.s32.totalorder %s39, 1
      %p440 = por %p438, %p439
      %p441 = scmp.ne.s32.totalorder %s432, %s433
      %p442 = scmp.eq.s32.totalorder %s39, 0
      %p443 = por %p441, %p442
      %p444 = scmp.ne.s32.totalorder %s432, %s433
      %p445 = scmp.eq.s32.totalorder %s40, 1
      %p446 = por %p444, %p445
      %p448 = scmp.ne.s32.totalorder %s433, %s447
      %p449 = scmp.eq.s32.totalorder %s40, 0
      %p450 = por %p448, %p449
      %s452 = sadd.s32 %s451, 1
      %p455 = scmp.eq.s32.totalorder %s34, 1
      %p456 = scmp.ne.s32.totalorder %s451, %s453
      %p457 = scmp.eq.s32.totalorder %s34, 0
      %p458 = por %p456, %p457
      %p459 = scmp.ne.s32.totalorder %s451, %s453
      %p460 = scmp.eq.s32.totalorder %s39, 1
      %p461 = por %p459, %p460
      %p462 = scmp.ne.s32.totalorder %s453, %s454
      %p463 = scmp.eq.s32.totalorder %s39, 0
      %p464 = por %p462, %p463
      %p465 = scmp.ne.s32.totalorder %s453, %s454
      %p466 = scmp.eq.s32.totalorder %s40, 1
      %p467 = por %p465, %p466
      %p469 = scmp.ne.s32.totalorder %s454, %s468
      %p470 = scmp.eq.s32.totalorder %s40, 0
      %p471 = por %p469, %p470
      %s473 = sadd.s32 %s472, 1
      %p476 = scmp.eq.s32.totalorder %s34, 1
      %p477 = scmp.ne.s32.totalorder %s472, %s474
      %p478 = scmp.eq.s32.totalorder %s34, 0
      %p479 = por %p477, %p478
      %p480 = scmp.ne.s32.totalorder %s472, %s474
      %p481 = scmp.eq.s32.totalorder %s39, 1
      %p482 = por %p480, %p481
      %p483 = scmp.ne.s32.totalorder %s474, %s475
      %p484 = scmp.eq.s32.totalorder %s39, 0
      %p485 = por %p483, %p484
      %p486 = scmp.ne.s32.totalorder %s474, %s475
      %p487 = scmp.eq.s32.totalorder %s40, 1
      %p488 = por %p486, %p487
      %p490 = scmp.ne.s32.totalorder %s475, %s489
      %p491 = scmp.eq.s32.totalorder %s40, 0
      %p492 = por %p490, %p491
      %s494 = sadd.s32 %s493, 1
      %p497 = scmp.eq.s32.totalorder %s34, 1
      %p498 = scmp.ne.s32.totalorder %s493, %s495
      %p499 = scmp.eq.s32.totalorder %s34, 0
      %p500 = por %p498, %p499
      %p501 = scmp.ne.s32.totalorder %s493, %s495
      %p502 = scmp.eq.s32.totalorder %s39, 1
      %p503 = por %p501, %p502
      %p504 = scmp.ne.s32.totalorder %s495, %s496
      %p505 = scmp.eq.s32.totalorder %s39, 0
      %p506 = por %p504, %p505
      %p507 = scmp.ne.s32.totalorder %s495, %s496
      %p508 = scmp.eq.s32.totalorder %s40, 1
      %p509 = por %p507, %p508
      %p511 = scmp.ne.s32.totalorder %s496, %s510
      %p512 = scmp.eq.s32.totalorder %s40, 0
      %p513 = por %p511, %p512
      %s515 = sadd.s32 %s514, 1
      %p518 = scmp.eq.s32.totalorder %s34, 1
      %p519 = scmp.ne.s32.totalorder %s514, %s516
      %p520 = scmp.eq.s32.totalorder %s34, 0
      %p521 = por %p519, %p520
      %p522 = scmp.ne.s32.totalorder %s514, %s516
      %p523 = scmp.eq.s32.totalorder %s39, 1
      %p524 = por %p522, %p523
      %p525 = scmp.ne.s32.totalorder %s516, %s517
      %p526 = scmp.eq.s32.totalorder %s39, 0
      %p527 = por %p525, %p526
      %p528 = scmp.ne.s32.totalorder %s516, %s517
      %p529 = scmp.eq.s32.totalorder %s40, 1
      %p530 = por %p528, %p529
      %p532 = scmp.ne.s32.totalorder %s517, %s531
      %p533 = scmp.eq.s32.totalorder %s40, 0
      %p534 = por %p532, %p533
      %s536 = sadd.s32 %s535, 1
      %p539 = scmp.eq.s32.totalorder %s34, 1
      %p540 = scmp.ne.s32.totalorder %s535, %s537
      %p541 = scmp.eq.s32.totalorder %s34, 0
      %p542 = por %p540, %p541
      %p543 = scmp.ne.s32.totalorder %s535, %s537
      %p544 = scmp.eq.s32.totalorder %s39, 1
      %p545 = por %p543, %p544
      %p546 = scmp.ne.s32.totalorder %s537, %s538
      %p547 = scmp.eq.s32.totalorder %s39, 0
      %p548 = por %p546, %p547
      %p549 = scmp.ne.s32.totalorder %s537, %s538
      %p550 = scmp.eq.s32.totalorder %s40, 1
      %p551 = por %p549, %p550
      %p553 = scmp.ne.s32.totalorder %s538, %s552
      %p554 = scmp.eq.s32.totalorder %s40, 0
      %p555 = por %p553, %p554
      %s557 = sadd.s32 %s556, 1
      %p560 = scmp.eq.s32.totalorder %s34, 1
      %p561 = scmp.ne.s32.totalorder %s556, %s558
      %p562 = scmp.eq.s32.totalorder %s34, 0
      %p563 = por %p561, %p562
      %p564 = scmp.ne.s32.totalorder %s556, %s558
      %p565 = scmp.eq.s32.totalorder %s39, 1
      %p566 = por %p564, %p565
      %p567 = scmp.ne.s32.totalorder %s558, %s559
      %p568 = scmp.eq.s32.totalorder %s39, 0
      %p569 = por %p567, %p568
      %p570 = scmp.ne.s32.totalorder %s558, %s559
      %p571 = scmp.eq.s32.totalorder %s40, 1
      %p572 = por %p570, %p571
      %p574 = scmp.ne.s32.totalorder %s559, %s573
      %p575 = scmp.eq.s32.totalorder %s40, 0
      %p576 = por %p574, %p575
      %s577 = ssub.s32 %s34, %s41
      %p578 = scmp.eq.s32.totalorder %s577, 0
      %s580 = sadd.s32 %s579, 1
      %s581 = scalar_select %p578, %s579, %s580
      %p584 = pneg %p578
      %p585 = scmp.eq.s32.totalorder %s34, 1
      %p586 = por %p584, %p585
      %p587 = scmp.ne.s32.totalorder %s579, %s582
      %p588 = scmp.eq.s32.totalorder %s34, 0
      %p589 = por %p587, %p588
      %p590 = scmp.ne.s32.totalorder %s579, %s582
      %p591 = scmp.eq.s32.totalorder %s39, 1
      %p592 = por %p590, %p591
      %p593 = scmp.ne.s32.totalorder %s582, %s583
      %p594 = scmp.eq.s32.totalorder %s39, 0
      %p595 = por %p593, %p594
      %p596 = scmp.ne.s32.totalorder %s582, %s583
      %p597 = scmp.eq.s32.totalorder %s40, 1
      %p598 = por %p596, %p597
      %p600 = scmp.ne.s32.totalorder %s583, %s599
      %p601 = scmp.eq.s32.totalorder %s40, 0
      %p602 = por %p600, %p601
      %p603 = scmp.le.s32.totalorder 1, %s34
      %p604 = scmp.lt.s32.totalorder %s34, 3
      %p605 = pnand %p603, %p604
      %p606 = pneg %p605
      // Predicated region
      $region9: #{multi_disc_forward.1} parent=5 // pred_check
        _
      $region10: #{multi_disc_forward.1} parent=5 // pred_check_branch
        %608 = sbr.rel (%p605) target = $region12
      $region11: #{multi_disc_forward.1} parent=5 // pred_region
        %s609 = ssub.s32 %s34, 1
        // Predicated region
        $region13: #{multi_disc_forward.1} parent=11 // pred_check
          %p610 = pneg %p81
        $region14: #{multi_disc_forward.1} parent=11 // pred_check_branch
          %612 = sbr.rel (%p610) target = $region16
        $region15: #{multi_disc_forward.1} parent=11 // pred_region
          _
        $region16: #{multi_disc_forward.1} parent=11 // pred_fallthru
          _
        // Predicated region
        $region17: #{multi_disc_forward.1} parent=11 // pred_check
          %p613 = pneg %p102
        $region18: #{multi_disc_forward.1} parent=11 // pred_check_branch
          %615 = sbr.rel (%p613) target = $region20
        $region19: #{multi_disc_forward.1} parent=11 // pred_region
          _
        $region20: #{multi_disc_forward.1} parent=11 // pred_fallthru
          _
        // Predicated region
        $region21: #{multi_disc_forward.1} parent=11 // pred_check
          %p616 = pneg %p123
        $region22: #{multi_disc_forward.1} parent=11 // pred_check_branch
          %618 = sbr.rel (%p616) target = $region24
        $region23: #{multi_disc_forward.1} parent=11 // pred_region
          _
        $region24: #{multi_disc_forward.1} parent=11 // pred_fallthru
          _
        // Predicated region
        $region25: #{multi_disc_forward.1} parent=11 // pred_check
          %p619 = pneg %p144
        $region26: #{multi_disc_forward.1} parent=11 // pred_check_branch
          %621 = sbr.rel (%p619) target = $region28
        $region27: #{multi_disc_forward.1} parent=11 // pred_region
          _
        $region28: #{multi_disc_forward.1} parent=11 // pred_fallthru
          _
        // Predicated region
        $region29: #{multi_disc_forward.1} parent=11 // pred_check
          %p622 = pneg %p165
        $region30: #{multi_disc_forward.1} parent=11 // pred_check_branch
          %624 = sbr.rel (%p622) target = $region32
        $region31: #{multi_disc_forward.1} parent=11 // pred_region
          _
        $region32: #{multi_disc_forward.1} parent=11 // pred_fallthru
          _
        // Predicated region
        $region33: #{multi_disc_forward.1} parent=11 // pred_check
          %p625 = pneg %p186
        $region34: #{multi_disc_forward.1} parent=11 // pred_check_branch
          %627 = sbr.rel (%p625) target = $region36
        $region35: #{multi_disc_forward.1} parent=11 // pred_region
          _
        $region36: #{multi_disc_forward.1} parent=11 // pred_fallthru
          _
        // Predicated region
        $region37: #{multi_disc_forward.1} parent=11 // pred_check
          %p628 = pneg %p207
        $region38: #{multi_disc_forward.1} parent=11 // pred_check_branch
          %630 = sbr.rel (%p628) target = $region40
        $region39: #{multi_disc_forward.1} parent=11 // pred_region
          _
        $region40: #{multi_disc_forward.1} parent=11 // pred_fallthru
          _
        // Predicated region
        $region41: #{multi_disc_forward.1} parent=11 // pred_check
          %p631 = pneg %p228
        $region42: #{multi_disc_forward.1} parent=11 // pred_check_branch
          %633 = sbr.rel (%p631) target = $region44
        $region43: #{multi_disc_forward.1} parent=11 // pred_region
          %s635 = ssub.s32 16384, 16384
          %636 = vsyncadd [#allocation4], %s635
          %s637 = sshll.u32 [#allocation3], 4
          %s638 = int_to_ptr.vmem [resolvable:$true] %s637
          %643 = dma.hbm_to_vmem [thread:$0]  %s8, 16384, %s638, [#allocation4], 128, 128, 8
        $region44: #{multi_disc_forward.1} parent=11 // pred_fallthru
          _
        // Predicated region
        $region45: #{multi_disc_forward.1} parent=11 // pred_check
          %p644 = pneg %p249
        $region46: #{multi_disc_forward.1} parent=11 // pred_check_branch
          %646 = sbr.rel (%p644) target = $region48
        $region47: #{multi_disc_forward.1} parent=11 // pred_region
          _
        $region48: #{multi_disc_forward.1} parent=11 // pred_fallthru
          _
        // Predicated region
        $region49: #{multi_disc_forward.1} parent=11 // pred_check
          %p647 = pneg %p270
        $region50: #{multi_disc_forward.1} parent=11 // pred_check_branch
          %649 = sbr.rel (%p647) target = $region52
        $region51: #{multi_disc_forward.1} parent=11 // pred_region
          _
        $region52: #{multi_disc_forward.1} parent=11 // pred_fallthru
          _
        // Predicated region
        $region53: #{multi_disc_forward.1} parent=11 // pred_check
          %p650 = pneg %p291
        $region54: #{multi_disc_forward.1} parent=11 // pred_check_branch
          %652 = sbr.rel (%p650) target = $region56
        $region55: #{multi_disc_forward.1} parent=11 // pred_region
          _
        $region56: #{multi_disc_forward.1} parent=11 // pred_fallthru
          _
        // Predicated region
        $region57: #{multi_disc_forward.1} parent=11 // pred_check
          %p653 = pneg %p312
        $region58: #{multi_disc_forward.1} parent=11 // pred_check_branch
          %655 = sbr.rel (%p653) target = $region60
        $region59: #{multi_disc_forward.1} parent=11 // pred_region
          _
        $region60: #{multi_disc_forward.1} parent=11 // pred_fallthru
          _
        // Predicated region
        $region61: #{multi_disc_forward.1} parent=11 // pred_check
          %p656 = pneg %p359
        $region62: #{multi_disc_forward.1} parent=11 // pred_check_branch
          %658 = sbr.rel (%p656) target = $region64
        $region63: #{multi_disc_forward.1} parent=11 // pred_region
          _
        $region64: #{multi_disc_forward.1} parent=11 // pred_fallthru
          _
        // Predicated region
        $region65: #{multi_disc_forward.1} parent=11 // pred_check
          %p659 = pneg %p380
        $region66: #{multi_disc_forward.1} parent=11 // pred_check_branch
          %661 = sbr.rel (%p659) target = $region68
        $region67: #{multi_disc_forward.1} parent=11 // pred_region
          _
        $region68: #{multi_disc_forward.1} parent=11 // pred_fallthru
          _
        // Predicated region
        $region69: #{multi_disc_forward.1} parent=11 // pred_check
          %p662 = pneg %p401
        $region70: #{multi_disc_forward.1} parent=11 // pred_check_branch
          %664 = sbr.rel (%p662) target = $region72
        $region71: #{multi_disc_forward.1} parent=11 // pred_region
          _
        $region72: #{multi_disc_forward.1} parent=11 // pred_fallthru
          _
        // Predicated region
        $region73: #{multi_disc_forward.1} parent=11 // pred_check
          %p665 = pneg %p422
        $region74: #{multi_disc_forward.1} parent=11 // pred_check_branch
          %667 = sbr.rel (%p665) target = $region76
        $region75: #{multi_disc_forward.1} parent=11 // pred_region
          _
        $region76: #{multi_disc_forward.1} parent=11 // pred_fallthru
          _
        // Predicated region
        $region77: #{multi_disc_forward.1} parent=11 // pred_check
          %p668 = pneg %p443
        $region78: #{multi_disc_forward.1} parent=11 // pred_check_branch
          %670 = sbr.rel (%p668) target = $region80
        $region79: #{multi_disc_forward.1} parent=11 // pred_region
          _
        $region80: #{multi_disc_forward.1} parent=11 // pred_fallthru
          _
        // Predicated region
        $region81: #{multi_disc_forward.1} parent=11 // pred_check
          %p671 = pneg %p464
        $region82: #{multi_disc_forward.1} parent=11 // pred_check_branch
          %673 = sbr.rel (%p671) target = $region84
        $region83: #{multi_disc_forward.1} parent=11 // pred_region
          _
        $region84: #{multi_disc_forward.1} parent=11 // pred_fallthru
          _
        // Predicated region
        $region85: #{multi_disc_forward.1} parent=11 // pred_check
          %p674 = pneg %p485
        $region86: #{multi_disc_forward.1} parent=11 // pred_check_branch
          %676 = sbr.rel (%p674) target = $region88
        $region87: #{multi_disc_forward.1} parent=11 // pred_region
          _
        $region88: #{multi_disc_forward.1} parent=11 // pred_fallthru
          _
        // Predicated region
        $region89: #{multi_disc_forward.1} parent=11 // pred_check
          %p677 = pneg %p506
        $region90: #{multi_disc_forward.1} parent=11 // pred_check_branch
          %679 = sbr.rel (%p677) target = $region92
        $region91: #{multi_disc_forward.1} parent=11 // pred_region
          _
        $region92: #{multi_disc_forward.1} parent=11 // pred_fallthru
          _
        // Predicated region
        $region93: #{multi_disc_forward.1} parent=11 // pred_check
          %p680 = pneg %p527
        $region94: #{multi_disc_forward.1} parent=11 // pred_check_branch
          %682 = sbr.rel (%p680) target = $region96
        $region95: #{multi_disc_forward.1} parent=11 // pred_region
          _
        $region96: #{multi_disc_forward.1} parent=11 // pred_fallthru
          _
        // Predicated region
        $region97: #{multi_disc_forward.1} parent=11 // pred_check
          %p683 = pneg %p548
        $region98: #{multi_disc_forward.1} parent=11 // pred_check_branch
          %685 = sbr.rel (%p683) target = $region100
        $region99: #{multi_disc_forward.1} parent=11 // pred_region
          _
        $region100: #{multi_disc_forward.1} parent=11 // pred_fallthru
          _
        // Predicated region
        $region101: #{multi_disc_forward.1} parent=11 // pred_check
          %p686 = pneg %p569
        $region102: #{multi_disc_forward.1} parent=11 // pred_check_branch
          %688 = sbr.rel (%p686) target = $region104
        $region103: #{multi_disc_forward.1} parent=11 // pred_region
          _
        $region104: #{multi_disc_forward.1} parent=11 // pred_fallthru
          _
      $region12: #{multi_disc_forward.1} parent=5 // pred_fallthru
        _
      %p689 = scmp.lt.s32.totalorder %s34, 2
      // Predicated region
      $region105: #{multi_disc_forward.1} parent=5 // pred_check
        %p690 = pneg %p689
      $region106: #{multi_disc_forward.1} parent=5 // pred_check_branch
        %692 = sbr.rel (%p690) target = $region108
      $region107: #{multi_disc_forward.1} parent=5 // pred_region
        // Predicated region
        $region109: #{multi_disc_forward.1} parent=107 // pred_check
          %p693 = pneg %p54
        $region110: #{multi_disc_forward.1} parent=107 // pred_check_branch
          %695 = sbr.rel (%p693) target = $region112
        $region111: #{multi_disc_forward.1} parent=107 // pred_region
          %p696 = scmp.lt.s32.totalorder %s34, 1
          %s697 = scalar_select %p696, %s34, 1
          %s698 = smul.addr %s697, 16
          %s699 = smul.addr %s698, 4
          %s700 = scalar_lea.vmem %s0, %s699
        $region112: #{multi_disc_forward.1} parent=107 // pred_fallthru
          _
        // Predicated region
        $region113: #{multi_disc_forward.1} parent=107 // pred_check
          %p701 = pneg %p332
        $region114: #{multi_disc_forward.1} parent=107 // pred_check_branch
          %703 = sbr.rel (%p701) target = $region116
        $region115: #{multi_disc_forward.1} parent=107 // pred_region
          %p704 = scmp.lt.s32.totalorder %s34, 1
          %s705 = scalar_select %p704, %s34, 1
          %s706 = scalar_lea.vmem %s13, %s705
        $region116: #{multi_disc_forward.1} parent=107 // pred_fallthru
          _
      $region108: #{multi_disc_forward.1} parent=5 // pred_fallthru
        _
      %p707 = scmp.le.s32.totalorder 1, %s34
      %p708 = scmp.lt.s32.totalorder %s34, 3
      %p709 = pnand %p707, %p708
      %p710 = pneg %p709
      // Predicated region
      $region117: #{multi_disc_forward.1} parent=5 // pred_check
        _
      $region118: #{multi_disc_forward.1} parent=5 // pred_check_branch
        %712 = sbr.rel (%p709) target = $region120
      $region119: #{multi_disc_forward.1} parent=5 // pred_region
        %s713 = ssub.s32 %s34, 1
        // Predicated region
        $region121: #{multi_disc_forward.1} parent=119 // pred_check
          %p714 = pneg %p228
        $region122: #{multi_disc_forward.1} parent=119 // pred_check_branch
          %716 = sbr.rel (%p714) target = $region124
        $region123: #{multi_disc_forward.1} parent=119 // pred_region
          %717 = dma.done [#allocation4], 16384
        $region124: #{multi_disc_forward.1} parent=119 // pred_fallthru
          _
        %p718 = scmp.lt.s32.totalorder %s39, 1
        %s719 = scalar_select %p718, %s39, 1
        %s720 = smul.addr %s719, 16
        %s721 = smul.addr %s720, 4
        %s722 = scalar_lea.vmem %s0, %s721
        %p723 = pneg %p60
        %p724 = pneg %p57
        %p725 = pneg %p81
        %p726 = pneg %p78
        %p727 = pneg %p102
        %p728 = pneg %p99
        %p729 = pneg %p123
        %p730 = pneg %p120
        %p731 = pneg %p144
        %p732 = pneg %p141
        %p733 = pneg %p165
        %p734 = pneg %p162
        %p735 = pneg %p186
        %p736 = pneg %p183
        %p737 = pneg %p207
        %p738 = pneg %p204
        %p739 = pneg %p228
        %p740 = pneg %p225
        %p741 = pneg %p249
        %p742 = pneg %p246
        %p743 = pneg %p270
        %p744 = pneg %p267
        %p745 = pneg %p291
        %p746 = pneg %p288
        %p747 = pneg %p312
        %p748 = pneg %p309
        %p749 = scmp.lt.s32.totalorder %s39, 1
        %s750 = scalar_select %p749, %s39, 1
        %s751 = scalar_lea.vmem %s13, %s750
        %p752 = pneg %p338
        %p753 = pneg %p335
        %p754 = pneg %p359
        %p755 = pneg %p356
        %p756 = pneg %p380
        %p757 = pneg %p377
        %p758 = pneg %p401
        %p759 = pneg %p398
        %p760 = pneg %p422
        %p761 = pneg %p419
        %p762 = pneg %p443
        %p763 = pneg %p440
        %p764 = pneg %p464
        %p765 = pneg %p461
        %p766 = pneg %p485
        %p767 = pneg %p482
        %p768 = pneg %p506
        %p769 = pneg %p503
        %p770 = pneg %p527
        %p771 = pneg %p524
        %p772 = pneg %p548
        %p773 = pneg %p545
        %p774 = pneg %p569
        %p775 = pneg %p566
        %p776 = pneg %p595
        %p777 = pneg %p592
        %p778 = scmp.lt.s32.totalorder %s39, 1
        %s779 = scalar_select %p778, %s39, 1
        %s780 = scalar_lea.vmem %s25, %s779
        %p781 = scmp.lt.s32.totalorder %s39, 1
        %s782 = scalar_select %p781, %s39, 1
        %s783 = smul.addr %s782, 16
        %s784 = smul.addr %s783, 4
        %s785 = scalar_lea.vmem %s0, %s784
        %p786 = scmp.lt.s32.totalorder %s39, 1
        %s787 = scalar_select %p786, %s39, 1
        %s788 = scalar_lea.vmem %s13, %s787
        %p789 = scmp.lt.s32.totalorder %s39, 1
        %s790 = scalar_select %p789, %s39, 1
        %s791 = scalar_lea.vmem %s25, %s790
        %v793 = vld [vmem:[%s785] sm:$0xff]
        %v794 = vld [vmem:[%s785 + $0x8] sm:$0xff]
        %v795 = vld [vmem:[%s785 + $0x10] sm:$0xff]
        %v796 = vld [vmem:[%s785 + $0x18] sm:$0xff]
        %v797 = vld [vmem:[%s785 + $0x20] sm:$0xff]
        %v798 = vld [vmem:[%s785 + $0x28] sm:$0xff]
        %v799 = vld [vmem:[%s785 + $0x30] sm:$0xff]
        %v800 = vld [vmem:[%s785 + $0x38] sm:$0xff]
        %v801 = vld [vmem:[%s1] sm:$0xf]
        %v802 = vld [vmem:[%s1 + $0x4] sm:$0xf]
        %v803 = vld [vmem:[%s1 + $0x8] sm:$0xf]
        %v804 = vld [vmem:[%s1 + $0xc] sm:$0xf]
        %v809 = vunpack.c.l.b16 %v801
        %v810 = vunpack.c.l.b16 %v802
        %v811 = vunpack.c.l.b16 %v803
        %v812 = vunpack.c.l.b16 %v804
        %v813 = vpack.c.b16 %v810, %v809
        %v814 = vpack.c.b16 %v812, %v811
        %v823 = vunpack.c.l.b16 %v793
        %v824 = vunpack.c.h.b16 %v793
        %v825 = vunpack.c.l.b16 %v794
        %v826 = vunpack.c.h.b16 %v794
        %v827 = vunpack.c.l.b16 %v795
        %v828 = vunpack.c.h.b16 %v795
        %v829 = vunpack.c.l.b16 %v796
        %v830 = vunpack.c.h.b16 %v796
        %v831 = vunpack.c.l.b16 %v797
        %v832 = vunpack.c.h.b16 %v797
        %v833 = vunpack.c.l.b16 %v798
        %v834 = vunpack.c.h.b16 %v798
        %v835 = vunpack.c.l.b16 %v799
        %v836 = vunpack.c.h.b16 %v799
        %v837 = vunpack.c.l.b16 %v800
        %v838 = vunpack.c.h.b16 %v800
        %v839 = vpack.c.b16 %v825, %v823
        %v840 = vpack.c.b16 %v826, %v824
        %v841 = vpack.c.b16 %v829, %v827
        %v842 = vpack.c.b16 %v830, %v828
        %v843 = vpack.c.b16 %v833, %v831
        %v844 = vpack.c.b16 %v834, %v832
        %v845 = vpack.c.b16 %v837, %v835
        %v846 = vpack.c.b16 %v838, %v836
        %vm855 = vcmask 523264
        %v857 = vsel %vm855, %v813, 0
        %v860 = vsel %vm855, %v814, 0
        %862 = vmatprep.subr.bf16.mxu0 0
        %863 = vmatpush1.bf16.msra.mxu0 0
        %864 = vmatprep.subr.bf16.mxu0 0
        %865 = vmatpush1.bf16.msra.mxu0 0
        %866 = vmatprep.subr.bf16.mxu0 0
        %867 = vmatpush1.bf16.msra.mxu0 0
        %868 = vmatprep.subr.bf16.mxu0 0
        %869 = vmatpush1.bf16.msra.mxu0 0
        %870 = vmatprep.subr.bf16.mxu0 %v846
        %871 = vmatpush1.bf16.msra.mxu0 %v845
        %872 = vmatprep.subr.bf16.mxu0 %v844
        %873 = vmatpush1.bf16.msra.mxu0 %v843
        %874 = vmatprep.subr.bf16.mxu0 %v842
        %875 = vmatpush1.bf16.msra.mxu0 %v841
        %876 = vmatprep.subr.bf16.mxu0 %v840
        %877 = vmatpush1.bf16.msra.mxu0 %v839
        %878 = vmatprep.subr.bf16.mxu0 0
        %879 = vmatpush2.bf16.msra.mxu0 0
        %880 = vmatprep.subr.bf16.mxu0 0
        %881 = vmatpush2.bf16.msra.mxu0 0
        %882 = vmatprep.subr.bf16.mxu0 0
        %883 = vmatpush2.bf16.msra.mxu0 0
        %884 = vmatprep.subr.bf16.mxu0 0
        %885 = vmatpush2.bf16.msra.mxu0 0
        %886 = vmatprep.subr.bf16.mxu0 0
        %887 = vmatpush2.bf16.msra.mxu0 0
        %888 = vmatprep.subr.bf16.mxu0 0
        %889 = vmatpush2.bf16.msra.mxu0 0
        %890 = vmatprep.subr.bf16.mxu0 0
        %891 = vmatpush2.bf16.msra.mxu0 0
        %892 = vmatprep.subr.bf16.mxu0 0
        %893 = vmatpush2.bf16.msra.mxu0 0
        %894 = vmatprep.mubr.bf16.mxu0 0
        %895 = vmatmul.mubr.bf16.gmra.mxu0 %v857
        %v896 = vpop.f32.mrf.mxu0
        %v897 = vadd.f32 0.0, %v896
        %v898 = vpop.f32.mrf.mxu0
        %v899 = vadd.f32 0.0, %v898
        %v900 = vpop.f32.mrf.mxu0
        %v901 = vadd.f32 0.0, %v900
        %v902 = vpop.f32.mrf.mxu0
        %v903 = vadd.f32 0.0, %v902
        %904 = vmatprep.mubr.bf16.mxu0 0
        %905 = vmatmul.mubr.bf16.gmra.mxu0 %v860
        %v906 = vpop.f32.mrf.mxu0
        %v907 = vadd.f32 0.0, %v906
        %v908 = vpop.f32.mrf.mxu0
        %v909 = vadd.f32 0.0, %v908
        %v910 = vpop.f32.mrf.mxu0
        %v911 = vadd.f32 0.0, %v910
        %v912 = vpop.f32.mrf.mxu0
        %v913 = vadd.f32 0.0, %v912
        %914 = vdwg.mxu0
        %v915 = vpack.c.bf16 %v901, %v897
        %v916 = vpack.c.bf16 %v903, %v899
        %v917 = vpack.c.bf16 %v911, %v907
        %v918 = vpack.c.bf16 %v913, %v909
        %v919 = vld [vmem:[%s2] sm:$0xff]
        %v920 = vld [vmem:[%s2 + $0x8] sm:$0xff]
        %v921 = vld [vmem:[%s2 + $0x10] sm:$0xff]
        %v922 = vld [vmem:[%s2 + $0x18] sm:$0xff]
        %v923 = vld [vmem:[%s2 + $0x20] sm:$0xff]
        %v924 = vld [vmem:[%s2 + $0x28] sm:$0xff]
        %v925 = vld [vmem:[%s2 + $0x30] sm:$0xff]
        %v926 = vld [vmem:[%s2 + $0x38] sm:$0xff]
        %v927 = vld [vmem:[%s2 + $0x40] sm:$0xff]
        %v928 = vld [vmem:[%s2 + $0x48] sm:$0xff]
        %v929 = vld [vmem:[%s2 + $0x50] sm:$0xff]
        %v930 = vld [vmem:[%s2 + $0x58] sm:$0xff]
        %v931 = vld [vmem:[%s2 + $0x60] sm:$0xff]
        %v932 = vld [vmem:[%s2 + $0x68] sm:$0xff]
        %v933 = vld [vmem:[%s2 + $0x70] sm:$0xff]
        %v934 = vld [vmem:[%s2 + $0x78] sm:$0xff]
        %v935 = vld [vmem:[%s2 + $0x80] sm:$0xff]
        %v936 = vld [vmem:[%s2 + $0x88] sm:$0xff]
        %v937 = vld [vmem:[%s2 + $0x90] sm:$0xff]
        %v938 = vld [vmem:[%s2 + $0x98] sm:$0xff]
        %v939 = vld [vmem:[%s2 + $0xa0] sm:$0xff]
        %v940 = vld [vmem:[%s2 + $0xa8] sm:$0xff]
        %v941 = vld [vmem:[%s2 + $0xb0] sm:$0xff]
        %v942 = vld [vmem:[%s2 + $0xb8] sm:$0xff]
        %v943 = vld [vmem:[%s2 + $0xc0] sm:$0xff]
        %v944 = vld [vmem:[%s2 + $0xc8] sm:$0xff]
        %v945 = vld [vmem:[%s2 + $0xd0] sm:$0xff]
        %v946 = vld [vmem:[%s2 + $0xd8] sm:$0xff]
        %v947 = vld [vmem:[%s2 + $0xe0] sm:$0xff]
        %v948 = vld [vmem:[%s2 + $0xe8] sm:$0xff]
        %v949 = vld [vmem:[%s2 + $0xf0] sm:$0xff]
        %v950 = vld [vmem:[%s2 + $0xf8] sm:$0xff]
        %s951 = scalar_lea.vmem %s1, 16
        %v952 = vld [vmem:[%s951] sm:$0xf]
        %v953 = vld [vmem:[%s951 + $0x4] sm:$0xf]
        %v954 = vld [vmem:[%s951 + $0x8] sm:$0xf]
        %v955 = vld [vmem:[%s951 + $0xc] sm:$0xf]
        %v960 = vunpack.c.l.b16 %v952
        %v961 = vunpack.c.l.b16 %v953
        %v962 = vunpack.c.l.b16 %v954
        %v963 = vunpack.c.l.b16 %v955
        %v964 = vpack.c.b16 %v961, %v960
        %v965 = vpack.c.b16 %v963, %v962
        %v967 = vsel %vm855, %v964, 0
        %v970 = vsel %vm855, %v965, 0
        %972 = vmatprep.subr.bf16.mxu0 0
        %973 = vmatpush1.bf16.msra.mxu0 0
        %974 = vmatprep.subr.bf16.mxu0 0
        %975 = vmatpush1.bf16.msra.mxu0 0
        %976 = vmatprep.subr.bf16.mxu0 0
        %977 = vmatpush1.bf16.msra.mxu0 0
        %978 = vmatprep.subr.bf16.mxu0 0
        %979 = vmatpush1.bf16.msra.mxu0 0
        %980 = vmatprep.subr.bf16.mxu0 %v846
        %981 = vmatpush1.bf16.msra.mxu0 %v845
        %982 = vmatprep.subr.bf16.mxu0 %v844
        %983 = vmatpush1.bf16.msra.mxu0 %v843
        %984 = vmatprep.subr.bf16.mxu0 %v842
        %985 = vmatpush1.bf16.msra.mxu0 %v841
        %986 = vmatprep.subr.bf16.mxu0 %v840
        %987 = vmatpush1.bf16.msra.mxu0 %v839
        %988 = vmatprep.subr.bf16.mxu0 0
        %989 = vmatpush2.bf16.msra.mxu0 0
        %990 = vmatprep.subr.bf16.mxu0 0
        %991 = vmatpush2.bf16.msra.mxu0 0
        %992 = vmatprep.subr.bf16.mxu0 0
        %993 = vmatpush2.bf16.msra.mxu0 0
        %994 = vmatprep.subr.bf16.mxu0 0
        %995 = vmatpush2.bf16.msra.mxu0 0
        %996 = vmatprep.subr.bf16.mxu0 0
        %997 = vmatpush2.bf16.msra.mxu0 0
        %998 = vmatprep.subr.bf16.mxu0 0
        %999 = vmatpush2.bf16.msra.mxu0 0
        %1000 = vmatprep.subr.bf16.mxu0 0
        %1001 = vmatpush2.bf16.msra.mxu0 0
        %1002 = vmatprep.subr.bf16.mxu0 0
        %1003 = vmatpush2.bf16.msra.mxu0 0
        %1004 = vmatprep.mubr.bf16.mxu0 0
        %1005 = vmatmul.mubr.bf16.gmra.mxu0 %v967
        %v1006 = vpop.f32.mrf.mxu0
        %v1007 = vadd.f32 0.0, %v1006
        %v1008 = vpop.f32.mrf.mxu0
        %v1009 = vadd.f32 0.0, %v1008
        %v1010 = vpop.f32.mrf.mxu0
        %v1011 = vadd.f32 0.0, %v1010
        %v1012 = vpop.f32.mrf.mxu0
        %v1013 = vadd.f32 0.0, %v1012
        %1014 = vmatprep.mubr.bf16.mxu0 0
        %1015 = vmatmul.mubr.bf16.gmra.mxu0 %v970
        %v1016 = vpop.f32.mrf.mxu0
        %v1017 = vadd.f32 0.0, %v1016
        %v1018 = vpop.f32.mrf.mxu0
        %v1019 = vadd.f32 0.0, %v1018
        %v1020 = vpop.f32.mrf.mxu0
        %v1021 = vadd.f32 0.0, %v1020
        %v1022 = vpop.f32.mrf.mxu0
        %v1023 = vadd.f32 0.0, %v1022
        %1024 = vdwg.mxu0
        %v1025 = vpack.c.bf16 %v1011, %v1007
        %v1026 = vpack.c.bf16 %v1013, %v1009
        %v1027 = vpack.c.bf16 %v1021, %v1017
        %v1028 = vpack.c.bf16 %v1023, %v1019
        %s1029 = scalar_lea.vmem %s2, 256
        %v1030 = vld [vmem:[%s1029] sm:$0xff]
        %v1031 = vld [vmem:[%s1029 + $0x8] sm:$0xff]
        %v1032 = vld [vmem:[%s1029 + $0x10] sm:$0xff]
        %v1033 = vld [vmem:[%s1029 + $0x18] sm:$0xff]
        %v1034 = vld [vmem:[%s1029 + $0x20] sm:$0xff]
        %v1035 = vld [vmem:[%s1029 + $0x28] sm:$0xff]
        %v1036 = vld [vmem:[%s1029 + $0x30] sm:$0xff]
        %v1037 = vld [vmem:[%s1029 + $0x38] sm:$0xff]
        %v1038 = vld [vmem:[%s1029 + $0x40] sm:$0xff]
        %v1039 = vld [vmem:[%s1029 + $0x48] sm:$0xff]
        %v1040 = vld [vmem:[%s1029 + $0x50] sm:$0xff]
        %v1041 = vld [vmem:[%s1029 + $0x58] sm:$0xff]
        %v1042 = vld [vmem:[%s1029 + $0x60] sm:$0xff]
        %v1043 = vld [vmem:[%s1029 + $0x68] sm:$0xff]
        %v1044 = vld [vmem:[%s1029 + $0x70] sm:$0xff]
        %v1045 = vld [vmem:[%s1029 + $0x78] sm:$0xff]
        %v1046 = vld [vmem:[%s1029 + $0x80] sm:$0xff]
        %v1047 = vld [vmem:[%s1029 + $0x88] sm:$0xff]
        %v1048 = vld [vmem:[%s1029 + $0x90] sm:$0xff]
        %v1049 = vld [vmem:[%s1029 + $0x98] sm:$0xff]
        %v1050 = vld [vmem:[%s1029 + $0xa0] sm:$0xff]
        %v1051 = vld [vmem:[%s1029 + $0xa8] sm:$0xff]
        %v1052 = vld [vmem:[%s1029 + $0xb0] sm:$0xff]
        %v1053 = vld [vmem:[%s1029 + $0xb8] sm:$0xff]
        %v1054 = vld [vmem:[%s1029 + $0xc0] sm:$0xff]
        %v1055 = vld [vmem:[%s1029 + $0xc8] sm:$0xff]
        %v1056 = vld [vmem:[%s1029 + $0xd0] sm:$0xff]
        %v1057 = vld [vmem:[%s1029 + $0xd8] sm:$0xff]
        %v1058 = vld [vmem:[%s1029 + $0xe0] sm:$0xff]
        %v1059 = vld [vmem:[%s1029 + $0xe8] sm:$0xff]
        %v1060 = vld [vmem:[%s1029 + $0xf0] sm:$0xff]
        %v1061 = vld [vmem:[%s1029 + $0xf8] sm:$0xff]
        %v1094 = vunpack.c.l.b16 %v1030
        %v1095 = vunpack.c.h.b16 %v1030
        %v1096 = vunpack.c.l.b16 %v1031
        %v1097 = vunpack.c.h.b16 %v1031
        %v1098 = vunpack.c.l.b16 %v1032
        %v1099 = vunpack.c.h.b16 %v1032
        %v1100 = vunpack.c.l.b16 %v1033
        %v1101 = vunpack.c.h.b16 %v1033
        %v1102 = vunpack.c.l.b16 %v1034
        %v1103 = vunpack.c.h.b16 %v1034
        %v1104 = vunpack.c.l.b16 %v1035
        %v1105 = vunpack.c.h.b16 %v1035
        %v1106 = vunpack.c.l.b16 %v1036
        %v1107 = vunpack.c.h.b16 %v1036
        %v1108 = vunpack.c.l.b16 %v1037
        %v1109 = vunpack.c.h.b16 %v1037
        %v1110 = vunpack.c.l.b16 %v1038
        %v1111 = vunpack.c.h.b16 %v1038
        %v1112 = vunpack.c.l.b16 %v1039
        %v1113 = vunpack.c.h.b16 %v1039
        %v1114 = vunpack.c.l.b16 %v1040
        %v1115 = vunpack.c.h.b16 %v1040
        %v1116 = vunpack.c.l.b16 %v1041
        %v1117 = vunpack.c.h.b16 %v1041
        %v1118 = vunpack.c.l.b16 %v1042
        %v1119 = vunpack.c.h.b16 %v1042
        %v1120 = vunpack.c.l.b16 %v1043
        %v1121 = vunpack.c.h.b16 %v1043
        %v1122 = vunpack.c.l.b16 %v1044
        %v1123 = vunpack.c.h.b16 %v1044
        %v1124 = vunpack.c.l.b16 %v1045
        %v1125 = vunpack.c.h.b16 %v1045
        %v1126 = vunpack.c.l.b16 %v1046
        %v1127 = vunpack.c.h.b16 %v1046
        %v1128 = vunpack.c.l.b16 %v1047
        %v1129 = vunpack.c.h.b16 %v1047
        %v1130 = vunpack.c.l.b16 %v1048
        %v1131 = vunpack.c.h.b16 %v1048
        %v1132 = vunpack.c.l.b16 %v1049
        %v1133 = vunpack.c.h.b16 %v1049
        %v1134 = vunpack.c.l.b16 %v1050
        %v1135 = vunpack.c.h.b16 %v1050
        %v1136 = vunpack.c.l.b16 %v1051
        %v1137 = vunpack.c.h.b16 %v1051
        %v1138 = vunpack.c.l.b16 %v1052
        %v1139 = vunpack.c.h.b16 %v1052
        %v1140 = vunpack.c.l.b16 %v1053
        %v1141 = vunpack.c.h.b16 %v1053
        %v1142 = vunpack.c.l.b16 %v1054
        %v1143 = vunpack.c.h.b16 %v1054
        %v1144 = vunpack.c.l.b16 %v1055
        %v1145 = vunpack.c.h.b16 %v1055
        %v1146 = vunpack.c.l.b16 %v1056
        %v1147 = vunpack.c.h.b16 %v1056
        %v1148 = vunpack.c.l.b16 %v1057
        %v1149 = vunpack.c.h.b16 %v1057
        %v1150 = vunpack.c.l.b16 %v1058
        %v1151 = vunpack.c.h.b16 %v1058
        %v1152 = vunpack.c.l.b16 %v1059
        %v1153 = vunpack.c.h.b16 %v1059
        %v1154 = vunpack.c.l.b16 %v1060
        %v1155 = vunpack.c.h.b16 %v1060
        %v1156 = vunpack.c.l.b16 %v1061
        %v1157 = vunpack.c.h.b16 %v1061
        %v1158 = vpack.c.b16 %v1096, %v1094
        %v1159 = vpack.c.b16 %v1097, %v1095
        %v1160 = vpack.c.b16 %v1100, %v1098
        %v1161 = vpack.c.b16 %v1101, %v1099
        %v1162 = vpack.c.b16 %v1104, %v1102
        %v1163 = vpack.c.b16 %v1105, %v1103
        %v1164 = vpack.c.b16 %v1108, %v1106
        %v1165 = vpack.c.b16 %v1109, %v1107
        %v1166 = vpack.c.b16 %v1112, %v1110
        %v1167 = vpack.c.b16 %v1113, %v1111
        %v1168 = vpack.c.b16 %v1116, %v1114
        %v1169 = vpack.c.b16 %v1117, %v1115
        %v1170 = vpack.c.b16 %v1120, %v1118
        %v1171 = vpack.c.b16 %v1121, %v1119
        %v1172 = vpack.c.b16 %v1124, %v1122
        %v1173 = vpack.c.b16 %v1125, %v1123
        %v1174 = vpack.c.b16 %v1128, %v1126
        %v1175 = vpack.c.b16 %v1129, %v1127
        %v1176 = vpack.c.b16 %v1132, %v1130
        %v1177 = vpack.c.b16 %v1133, %v1131
        %v1178 = vpack.c.b16 %v1136, %v1134
        %v1179 = vpack.c.b16 %v1137, %v1135
        %v1180 = vpack.c.b16 %v1140, %v1138
        %v1181 = vpack.c.b16 %v1141, %v1139
        %v1182 = vpack.c.b16 %v1144, %v1142
        %v1183 = vpack.c.b16 %v1145, %v1143
        %v1184 = vpack.c.b16 %v1148, %v1146
        %v1185 = vpack.c.b16 %v1149, %v1147
        %v1186 = vpack.c.b16 %v1152, %v1150
        %v1187 = vpack.c.b16 %v1153, %v1151
        %v1188 = vpack.c.b16 %v1156, %v1154
        %v1189 = vpack.c.b16 %v1157, %v1155
        %1222 = vmatprep.subr.bf16.mxu0 %v1173
        %1223 = vmatpush1.bf16.msra.mxu0 %v1172
        %1224 = vmatprep.subr.bf16.mxu0 %v1171
        %1225 = vmatpush1.bf16.msra.mxu0 %v1170
        %1226 = vmatprep.subr.bf16.mxu0 %v1169
        %1227 = vmatpush1.bf16.msra.mxu0 %v1168
        %1228 = vmatprep.subr.bf16.mxu0 %v1167
        %1229 = vmatpush1.bf16.msra.mxu0 %v1166
        %1230 = vmatprep.subr.bf16.mxu0 %v1165
        %1231 = vmatpush1.bf16.msra.mxu0 %v1164
        %1232 = vmatprep.subr.bf16.mxu0 %v1163
        %1233 = vmatpush1.bf16.msra.mxu0 %v1162
        %1234 = vmatprep.subr.bf16.mxu0 %v1161
        %1235 = vmatpush1.bf16.msra.mxu0 %v1160
        %1236 = vmatprep.subr.bf16.mxu0 %v1159
        %1237 = vmatpush1.bf16.msra.mxu0 %v1158
        %1238 = vmatprep.subr.bf16.mxu0 %v1189
        %1239 = vmatpush2.bf16.msra.mxu0 %v1188
        %1240 = vmatprep.subr.bf16.mxu0 %v1187
        %1241 = vmatpush2.bf16.msra.mxu0 %v1186
        %1242 = vmatprep.subr.bf16.mxu0 %v1185
        %1243 = vmatpush2.bf16.msra.mxu0 %v1184
        %1244 = vmatprep.subr.bf16.mxu0 %v1183
        %1245 = vmatpush2.bf16.msra.mxu0 %v1182
        %1246 = vmatprep.subr.bf16.mxu0 %v1181
        %1247 = vmatpush2.bf16.msra.mxu0 %v1180
        %1248 = vmatprep.subr.bf16.mxu0 %v1179
        %1249 = vmatpush2.bf16.msra.mxu0 %v1178
        %1250 = vmatprep.subr.bf16.mxu0 %v1177
        %1251 = vmatpush2.bf16.msra.mxu0 %v1176
        %1252 = vmatprep.subr.bf16.mxu0 %v1175
        %1253 = vmatpush2.bf16.msra.mxu0 %v1174
        %1254 = vmatprep.mubr.bf16.mxu0 %v1026
        %1255 = vmatmul.mubr.bf16.gmra.mxu0 %v1025
        %v1256 = vpop.f32.mrf.mxu0
        %v1257 = vadd.f32 0.0, %v1256
        %v1258 = vpop.f32.mrf.mxu0
        %v1259 = vadd.f32 0.0, %v1258
        %v1260 = vpop.f32.mrf.mxu0
        %v1261 = vadd.f32 0.0, %v1260
        %v1262 = vpop.f32.mrf.mxu0
        %v1263 = vadd.f32 0.0, %v1262
        %1264 = vmatprep.mubr.bf16.mxu0 %v1028
        %1265 = vmatmul.mubr.bf16.gmra.mxu0 %v1027
        %v1266 = vpop.f32.mrf.mxu0
        %v1267 = vadd.f32 0.0, %v1266
        %v1268 = vpop.f32.mrf.mxu0
        %v1269 = vadd.f32 0.0, %v1268
        %v1270 = vpop.f32.mrf.mxu0
        %v1271 = vadd.f32 0.0, %v1270
        %v1272 = vpop.f32.mrf.mxu0
        %v1273 = vadd.f32 0.0, %v1272
        %1274 = vdwg.mxu0
        %v1307 = vunpack.c.l.b16 %v919
        %v1308 = vunpack.c.h.b16 %v919
        %v1309 = vunpack.c.l.b16 %v920
        %v1310 = vunpack.c.h.b16 %v920
        %v1311 = vunpack.c.l.b16 %v921
        %v1312 = vunpack.c.h.b16 %v921
        %v1313 = vunpack.c.l.b16 %v922
        %v1314 = vunpack.c.h.b16 %v922
        %v1315 = vunpack.c.l.b16 %v923
        %v1316 = vunpack.c.h.b16 %v923
        %v1317 = vunpack.c.l.b16 %v924
        %v1318 = vunpack.c.h.b16 %v924
        %v1319 = vunpack.c.l.b16 %v925
        %v1320 = vunpack.c.h.b16 %v925
        %v1321 = vunpack.c.l.b16 %v926
        %v1322 = vunpack.c.h.b16 %v926
        %v1323 = vunpack.c.l.b16 %v927
        %v1324 = vunpack.c.h.b16 %v927
        %v1325 = vunpack.c.l.b16 %v928
        %v1326 = vunpack.c.h.b16 %v928
        %v1327 = vunpack.c.l.b16 %v929
        %v1328 = vunpack.c.h.b16 %v929
        %v1329 = vunpack.c.l.b16 %v930
        %v1330 = vunpack.c.h.b16 %v930
        %v1331 = vunpack.c.l.b16 %v931
        %v1332 = vunpack.c.h.b16 %v931
        %v1333 = vunpack.c.l.b16 %v932
        %v1334 = vunpack.c.h.b16 %v932
        %v1335 = vunpack.c.l.b16 %v933
        %v1336 = vunpack.c.h.b16 %v933
        %v1337 = vunpack.c.l.b16 %v934
        %v1338 = vunpack.c.h.b16 %v934
        %v1339 = vunpack.c.l.b16 %v935
        %v1340 = vunpack.c.h.b16 %v935
        %v1341 = vunpack.c.l.b16 %v936
        %v1342 = vunpack.c.h.b16 %v936
        %v1343 = vunpack.c.l.b16 %v937
        %v1344 = vunpack.c.h.b16 %v937
        %v1345 = vunpack.c.l.b16 %v938
        %v1346 = vunpack.c.h.b16 %v938
        %v1347 = vunpack.c.l.b16 %v939
        %v1348 = vunpack.c.h.b16 %v939
        %v1349 = vunpack.c.l.b16 %v940
        %v1350 = vunpack.c.h.b16 %v940
        %v1351 = vunpack.c.l.b16 %v941
        %v1352 = vunpack.c.h.b16 %v941
        %v1353 = vunpack.c.l.b16 %v942
        %v1354 = vunpack.c.h.b16 %v942
        %v1355 = vunpack.c.l.b16 %v943
        %v1356 = vunpack.c.h.b16 %v943
        %v1357 = vunpack.c.l.b16 %v944
        %v1358 = vunpack.c.h.b16 %v944
        %v1359 = vunpack.c.l.b16 %v945
        %v1360 = vunpack.c.h.b16 %v945
        %v1361 = vunpack.c.l.b16 %v946
        %v1362 = vunpack.c.h.b16 %v946
        %v1363 = vunpack.c.l.b16 %v947
        %v1364 = vunpack.c.h.b16 %v947
        %v1365 = vunpack.c.l.b16 %v948
        %v1366 = vunpack.c.h.b16 %v948
        %v1367 = vunpack.c.l.b16 %v949
        %v1368 = vunpack.c.h.b16 %v949
        %v1369 = vunpack.c.l.b16 %v950
        %v1370 = vunpack.c.h.b16 %v950
        %v1371 = vpack.c.b16 %v1309, %v1307
        %v1372 = vpack.c.b16 %v1310, %v1308
        %v1373 = vpack.c.b16 %v1313, %v1311
        %v1374 = vpack.c.b16 %v1314, %v1312
        %v1375 = vpack.c.b16 %v1317, %v1315
        %v1376 = vpack.c.b16 %v1318, %v1316
        %v1377 = vpack.c.b16 %v1321, %v1319
        %v1378 = vpack.c.b16 %v1322, %v1320
        %v1379 = vpack.c.b16 %v1325, %v1323
        %v1380 = vpack.c.b16 %v1326, %v1324
        %v1381 = vpack.c.b16 %v1329, %v1327
        %v1382 = vpack.c.b16 %v1330, %v1328
        %v1383 = vpack.c.b16 %v1333, %v1331
        %v1384 = vpack.c.b16 %v1334, %v1332
        %v1385 = vpack.c.b16 %v1337, %v1335
        %v1386 = vpack.c.b16 %v1338, %v1336
        %v1387 = vpack.c.b16 %v1341, %v1339
        %v1388 = vpack.c.b16 %v1342, %v1340
        %v1389 = vpack.c.b16 %v1345, %v1343
        %v1390 = vpack.c.b16 %v1346, %v1344
        %v1391 = vpack.c.b16 %v1349, %v1347
        %v1392 = vpack.c.b16 %v1350, %v1348
        %v1393 = vpack.c.b16 %v1353, %v1351
        %v1394 = vpack.c.b16 %v1354, %v1352
        %v1395 = vpack.c.b16 %v1357, %v1355
        %v1396 = vpack.c.b16 %v1358, %v1356
        %v1397 = vpack.c.b16 %v1361, %v1359
        %v1398 = vpack.c.b16 %v1362, %v1360
        %v1399 = vpack.c.b16 %v1365, %v1363
        %v1400 = vpack.c.b16 %v1366, %v1364
        %v1401 = vpack.c.b16 %v1369, %v1367
        %v1402 = vpack.c.b16 %v1370, %v1368
        %1435 = vmatprep.subr.bf16.mxu0 %v1386
        %1436 = vmatpush1.bf16.msra.mxu0 %v1385
        %1437 = vmatprep.subr.bf16.mxu0 %v1384
        %1438 = vmatpush1.bf16.msra.mxu0 %v1383
        %1439 = vmatprep.subr.bf16.mxu0 %v1382
        %1440 = vmatpush1.bf16.msra.mxu0 %v1381
        %1441 = vmatprep.subr.bf16.mxu0 %v1380
        %1442 = vmatpush1.bf16.msra.mxu0 %v1379
        %1443 = vmatprep.subr.bf16.mxu0 %v1378
        %1444 = vmatpush1.bf16.msra.mxu0 %v1377
        %1445 = vmatprep.subr.bf16.mxu0 %v1376
        %1446 = vmatpush1.bf16.msra.mxu0 %v1375
        %1447 = vmatprep.subr.bf16.mxu0 %v1374
        %1448 = vmatpush1.bf16.msra.mxu0 %v1373
        %1449 = vmatprep.subr.bf16.mxu0 %v1372
        %1450 = vmatpush1.bf16.msra.mxu0 %v1371
        %1451 = vmatprep.subr.bf16.mxu0 %v1402
        %1452 = vmatpush2.bf16.msra.mxu0 %v1401
        %1453 = vmatprep.subr.bf16.mxu0 %v1400
        %1454 = vmatpush2.bf16.msra.mxu0 %v1399
        %1455 = vmatprep.subr.bf16.mxu0 %v1398
        %1456 = vmatpush2.bf16.msra.mxu0 %v1397
        %1457 = vmatprep.subr.bf16.mxu0 %v1396
        %1458 = vmatpush2.bf16.msra.mxu0 %v1395
        %1459 = vmatprep.subr.bf16.mxu0 %v1394
        %1460 = vmatpush2.bf16.msra.mxu0 %v1393
        %1461 = vmatprep.subr.bf16.mxu0 %v1392
        %1462 = vmatpush2.bf16.msra.mxu0 %v1391
        %1463 = vmatprep.subr.bf16.mxu0 %v1390
        %1464 = vmatpush2.bf16.msra.mxu0 %v1389
        %1465 = vmatprep.subr.bf16.mxu0 %v1388
        %1466 = vmatpush2.bf16.msra.mxu0 %v1387
        %1467 = vmatprep.mubr.bf16.mxu0 %v916
        %1468 = vmatmul.mubr.bf16.gmra.mxu0 %v915
        %v1469 = vpop.f32.mrf.mxu0
        %v1470 = vadd.f32 %v1257, %v1469
        %v1471 = vpop.f32.mrf.mxu0
        %v1472 = vadd.f32 %v1259, %v1471
        %v1473 = vpop.f32.mrf.mxu0
        %v1474 = vadd.f32 %v1261, %v1473
        %v1475 = vpop.f32.mrf.mxu0
        %v1476 = vadd.f32 %v1263, %v1475
        %1477 = vmatprep.mubr.bf16.mxu0 %v918
        %1478 = vmatmul.mubr.bf16.gmra.mxu0 %v917
        %v1479 = vpop.f32.mrf.mxu0
        %v1480 = vadd.f32 %v1267, %v1479
        %v1481 = vpop.f32.mrf.mxu0
        %v1482 = vadd.f32 %v1269, %v1481
        %v1483 = vpop.f32.mrf.mxu0
        %v1484 = vadd.f32 %v1271, %v1483
        %v1485 = vpop.f32.mrf.mxu0
        %v1486 = vadd.f32 %v1273, %v1485
        %1487 = vdwg.mxu0
        %s1488 = scalar_lea.vmem %s1, 32
        %v1489 = vld [vmem:[%s1488] sm:$0xf]
        %v1490 = vld [vmem:[%s1488 + $0x4] sm:$0xf]
        %v1491 = vld [vmem:[%s1488 + $0x8] sm:$0xf]
        %v1492 = vld [vmem:[%s1488 + $0xc] sm:$0xf]
        %v1497 = vunpack.c.l.b16 %v1489
        %v1498 = vunpack.c.l.b16 %v1490
        %v1499 = vunpack.c.l.b16 %v1491
        %v1500 = vunpack.c.l.b16 %v1492
        %v1501 = vpack.c.b16 %v1498, %v1497
        %v1502 = vpack.c.b16 %v1500, %v1499
        %v1504 = vsel %vm855, %v1501, 0
        %v1507 = vsel %vm855, %v1502, 0
        %1509 = vmatprep.subr.bf16.mxu0 0
        %1510 = vmatpush1.bf16.msra.mxu0 0
        %1511 = vmatprep.subr.bf16.mxu0 0
        %1512 = vmatpush1.bf16.msra.mxu0 0
        %1513 = vmatprep.subr.bf16.mxu0 0
        %1514 = vmatpush1.bf16.msra.mxu0 0
        %1515 = vmatprep.subr.bf16.mxu0 0
        %1516 = vmatpush1.bf16.msra.mxu0 0
        %1517 = vmatprep.subr.bf16.mxu0 %v846
        %1518 = vmatpush1.bf16.msra.mxu0 %v845
        %1519 = vmatprep.subr.bf16.mxu0 %v844
        %1520 = vmatpush1.bf16.msra.mxu0 %v843
        %1521 = vmatprep.subr.bf16.mxu0 %v842
        %1522 = vmatpush1.bf16.msra.mxu0 %v841
        %1523 = vmatprep.subr.bf16.mxu0 %v840
        %1524 = vmatpush1.bf16.msra.mxu0 %v839
        %1525 = vmatprep.subr.bf16.mxu0 0
        %1526 = vmatpush2.bf16.msra.mxu0 0
        %1527 = vmatprep.subr.bf16.mxu0 0
        %1528 = vmatpush2.bf16.msra.mxu0 0
        %1529 = vmatprep.subr.bf16.mxu0 0
        %1530 = vmatpush2.bf16.msra.mxu0 0
        %1531 = vmatprep.subr.bf16.mxu0 0
        %1532 = vmatpush2.bf16.msra.mxu0 0
        %1533 = vmatprep.subr.bf16.mxu0 0
        %1534 = vmatpush2.bf16.msra.mxu0 0
        %1535 = vmatprep.subr.bf16.mxu0 0
        %1536 = vmatpush2.bf16.msra.mxu0 0
        %1537 = vmatprep.subr.bf16.mxu0 0
        %1538 = vmatpush2.bf16.msra.mxu0 0
        %1539 = vmatprep.subr.bf16.mxu0 0
        %1540 = vmatpush2.bf16.msra.mxu0 0
        %1541 = vmatprep.mubr.bf16.mxu0 0
        %1542 = vmatmul.mubr.bf16.gmra.mxu0 %v1504
        %v1543 = vpop.f32.mrf.mxu0
        %v1544 = vadd.f32 0.0, %v1543
        %v1545 = vpop.f32.mrf.mxu0
        %v1546 = vadd.f32 0.0, %v1545
        %v1547 = vpop.f32.mrf.mxu0
        %v1548 = vadd.f32 0.0, %v1547
        %v1549 = vpop.f32.mrf.mxu0
        %v1550 = vadd.f32 0.0, %v1549
        %1551 = vmatprep.mubr.bf16.mxu0 0
        %1552 = vmatmul.mubr.bf16.gmra.mxu0 %v1507
        %v1553 = vpop.f32.mrf.mxu0
        %v1554 = vadd.f32 0.0, %v1553
        %v1555 = vpop.f32.mrf.mxu0
        %v1556 = vadd.f32 0.0, %v1555
        %v1557 = vpop.f32.mrf.mxu0
        %v1558 = vadd.f32 0.0, %v1557
        %v1559 = vpop.f32.mrf.mxu0
        %v1560 = vadd.f32 0.0, %v1559
        %1561 = vdwg.mxu0
        %v1562 = vpack.c.bf16 %v1548, %v1544
        %v1563 = vpack.c.bf16 %v1550, %v1546
        %v1564 = vpack.c.bf16 %v1558, %v1554
        %v1565 = vpack.c.bf16 %v1560, %v1556
        %s1566 = scalar_lea.vmem %s2, 512
        %v1567 = vld [vmem:[%s1566] sm:$0xff]
        %v1568 = vld [vmem:[%s1566 + $0x8] sm:$0xff]
        %v1569 = vld [vmem:[%s1566 + $0x10] sm:$0xff]
        %v1570 = vld [vmem:[%s1566 + $0x18] sm:$0xff]
        %v1571 = vld [vmem:[%s1566 + $0x20] sm:$0xff]
        %v1572 = vld [vmem:[%s1566 + $0x28] sm:$0xff]
        %v1573 = vld [vmem:[%s1566 + $0x30] sm:$0xff]
        %v1574 = vld [vmem:[%s1566 + $0x38] sm:$0xff]
        %v1575 = vld [vmem:[%s1566 + $0x40] sm:$0xff]
        %v1576 = vld [vmem:[%s1566 + $0x48] sm:$0xff]
        %v1577 = vld [vmem:[%s1566 + $0x50] sm:$0xff]
        %v1578 = vld [vmem:[%s1566 + $0x58] sm:$0xff]
        %v1579 = vld [vmem:[%s1566 + $0x60] sm:$0xff]
        %v1580 = vld [vmem:[%s1566 + $0x68] sm:$0xff]
        %v1581 = vld [vmem:[%s1566 + $0x70] sm:$0xff]
        %v1582 = vld [vmem:[%s1566 + $0x78] sm:$0xff]
        %v1583 = vld [vmem:[%s1566 + $0x80] sm:$0xff]
        %v1584 = vld [vmem:[%s1566 + $0x88] sm:$0xff]
        %v1585 = vld [vmem:[%s1566 + $0x90] sm:$0xff]
        %v1586 = vld [vmem:[%s1566 + $0x98] sm:$0xff]
        %v1587 = vld [vmem:[%s1566 + $0xa0] sm:$0xff]
        %v1588 = vld [vmem:[%s1566 + $0xa8] sm:$0xff]
        %v1589 = vld [vmem:[%s1566 + $0xb0] sm:$0xff]
        %v1590 = vld [vmem:[%s1566 + $0xb8] sm:$0xff]
        %v1591 = vld [vmem:[%s1566 + $0xc0] sm:$0xff]
        %v1592 = vld [vmem:[%s1566 + $0xc8] sm:$0xff]
        %v1593 = vld [vmem:[%s1566 + $0xd0] sm:$0xff]
        %v1594 = vld [vmem:[%s1566 + $0xd8] sm:$0xff]
        %v1595 = vld [vmem:[%s1566 + $0xe0] sm:$0xff]
        %v1596 = vld [vmem:[%s1566 + $0xe8] sm:$0xff]
        %v1597 = vld [vmem:[%s1566 + $0xf0] sm:$0xff]
        %v1598 = vld [vmem:[%s1566 + $0xf8] sm:$0xff]
        %v1631 = vunpack.c.l.b16 %v1567
        %v1632 = vunpack.c.h.b16 %v1567
        %v1633 = vunpack.c.l.b16 %v1568
        %v1634 = vunpack.c.h.b16 %v1568
        %v1635 = vunpack.c.l.b16 %v1569
        %v1636 = vunpack.c.h.b16 %v1569
        %v1637 = vunpack.c.l.b16 %v1570
        %v1638 = vunpack.c.h.b16 %v1570
        %v1639 = vunpack.c.l.b16 %v1571
        %v1640 = vunpack.c.h.b16 %v1571
        %v1641 = vunpack.c.l.b16 %v1572
        %v1642 = vunpack.c.h.b16 %v1572
        %v1643 = vunpack.c.l.b16 %v1573
        %v1644 = vunpack.c.h.b16 %v1573
        %v1645 = vunpack.c.l.b16 %v1574
        %v1646 = vunpack.c.h.b16 %v1574
        %v1647 = vunpack.c.l.b16 %v1575
        %v1648 = vunpack.c.h.b16 %v1575
        %v1649 = vunpack.c.l.b16 %v1576
        %v1650 = vunpack.c.h.b16 %v1576
        %v1651 = vunpack.c.l.b16 %v1577
        %v1652 = vunpack.c.h.b16 %v1577
        %v1653 = vunpack.c.l.b16 %v1578
        %v1654 = vunpack.c.h.b16 %v1578
        %v1655 = vunpack.c.l.b16 %v1579
        %v1656 = vunpack.c.h.b16 %v1579
        %v1657 = vunpack.c.l.b16 %v1580
        %v1658 = vunpack.c.h.b16 %v1580
        %v1659 = vunpack.c.l.b16 %v1581
        %v1660 = vunpack.c.h.b16 %v1581
        %v1661 = vunpack.c.l.b16 %v1582
        %v1662 = vunpack.c.h.b16 %v1582
        %v1663 = vunpack.c.l.b16 %v1583
        %v1664 = vunpack.c.h.b16 %v1583
        %v1665 = vunpack.c.l.b16 %v1584
        %v1666 = vunpack.c.h.b16 %v1584
        %v1667 = vunpack.c.l.b16 %v1585
        %v1668 = vunpack.c.h.b16 %v1585
        %v1669 = vunpack.c.l.b16 %v1586
        %v1670 = vunpack.c.h.b16 %v1586
        %v1671 = vunpack.c.l.b16 %v1587
        %v1672 = vunpack.c.h.b16 %v1587
        %v1673 = vunpack.c.l.b16 %v1588
        %v1674 = vunpack.c.h.b16 %v1588
        %v1675 = vunpack.c.l.b16 %v1589
        %v1676 = vunpack.c.h.b16 %v1589
        %v1677 = vunpack.c.l.b16 %v1590
        %v1678 = vunpack.c.h.b16 %v1590
        %v1679 = vunpack.c.l.b16 %v1591
        %v1680 = vunpack.c.h.b16 %v1591
        %v1681 = vunpack.c.l.b16 %v1592
        %v1682 = vunpack.c.h.b16 %v1592
        %v1683 = vunpack.c.l.b16 %v1593
        %v1684 = vunpack.c.h.b16 %v1593
        %v1685 = vunpack.c.l.b16 %v1594
        %v1686 = vunpack.c.h.b16 %v1594
        %v1687 = vunpack.c.l.b16 %v1595
        %v1688 = vunpack.c.h.b16 %v1595
        %v1689 = vunpack.c.l.b16 %v1596
        %v1690 = vunpack.c.h.b16 %v1596
        %v1691 = vunpack.c.l.b16 %v1597
        %v1692 = vunpack.c.h.b16 %v1597
        %v1693 = vunpack.c.l.b16 %v1598
        %v1694 = vunpack.c.h.b16 %v1598
        %v1695 = vpack.c.b16 %v1633, %v1631
        %v1696 = vpack.c.b16 %v1634, %v1632
        %v1697 = vpack.c.b16 %v1637, %v1635
        %v1698 = vpack.c.b16 %v1638, %v1636
        %v1699 = vpack.c.b16 %v1641, %v1639
        %v1700 = vpack.c.b16 %v1642, %v1640
        %v1701 = vpack.c.b16 %v1645, %v1643
        %v1702 = vpack.c.b16 %v1646, %v1644
        %v1703 = vpack.c.b16 %v1649, %v1647
        %v1704 = vpack.c.b16 %v1650, %v1648
        %v1705 = vpack.c.b16 %v1653, %v1651
        %v1706 = vpack.c.b16 %v1654, %v1652
        %v1707 = vpack.c.b16 %v1657, %v1655
        %v1708 = vpack.c.b16 %v1658, %v1656
        %v1709 = vpack.c.b16 %v1661, %v1659
        %v1710 = vpack.c.b16 %v1662, %v1660
        %v1711 = vpack.c.b16 %v1665, %v1663
        %v1712 = vpack.c.b16 %v1666, %v1664
        %v1713 = vpack.c.b16 %v1669, %v1667
        %v1714 = vpack.c.b16 %v1670, %v1668
        %v1715 = vpack.c.b16 %v1673, %v1671
        %v1716 = vpack.c.b16 %v1674, %v1672
        %v1717 = vpack.c.b16 %v1677, %v1675
        %v1718 = vpack.c.b16 %v1678, %v1676
        %v1719 = vpack.c.b16 %v1681, %v1679
        %v1720 = vpack.c.b16 %v1682, %v1680
        %v1721 = vpack.c.b16 %v1685, %v1683
        %v1722 = vpack.c.b16 %v1686, %v1684
        %v1723 = vpack.c.b16 %v1689, %v1687
        %v1724 = vpack.c.b16 %v1690, %v1688
        %v1725 = vpack.c.b16 %v1693, %v1691
        %v1726 = vpack.c.b16 %v1694, %v1692
        %1759 = vmatprep.subr.bf16.mxu0 %v1710
        %1760 = vmatpush1.bf16.msra.mxu0 %v1709
        %1761 = vmatprep.subr.bf16.mxu0 %v1708
        %1762 = vmatpush1.bf16.msra.mxu0 %v1707
        %1763 = vmatprep.subr.bf16.mxu0 %v1706
        %1764 = vmatpush1.bf16.msra.mxu0 %v1705
        %1765 = vmatprep.subr.bf16.mxu0 %v1704
        %1766 = vmatpush1.bf16.msra.mxu0 %v1703
        %1767 = vmatprep.subr.bf16.mxu0 %v1702
        %1768 = vmatpush1.bf16.msra.mxu0 %v1701
        %1769 = vmatprep.subr.bf16.mxu0 %v1700
        %1770 = vmatpush1.bf16.msra.mxu0 %v1699
        %1771 = vmatprep.subr.bf16.mxu0 %v1698
        %1772 = vmatpush1.bf16.msra.mxu0 %v1697
        %1773 = vmatprep.subr.bf16.mxu0 %v1696
        %1774 = vmatpush1.bf16.msra.mxu0 %v1695
        %1775 = vmatprep.subr.bf16.mxu0 %v1726
        %1776 = vmatpush2.bf16.msra.mxu0 %v1725
        %1777 = vmatprep.subr.bf16.mxu0 %v1724
        %1778 = vmatpush2.bf16.msra.mxu0 %v1723
        %1779 = vmatprep.subr.bf16.mxu0 %v1722
        %1780 = vmatpush2.bf16.msra.mxu0 %v1721
        %1781 = vmatprep.subr.bf16.mxu0 %v1720
        %1782 = vmatpush2.bf16.msra.mxu0 %v1719
        %1783 = vmatprep.subr.bf16.mxu0 %v1718
        %1784 = vmatpush2.bf16.msra.mxu0 %v1717
        %1785 = vmatprep.subr.bf16.mxu0 %v1716
        %1786 = vmatpush2.bf16.msra.mxu0 %v1715
        %1787 = vmatprep.subr.bf16.mxu0 %v1714
        %1788 = vmatpush2.bf16.msra.mxu0 %v1713
        %1789 = vmatprep.subr.bf16.mxu0 %v1712
        %1790 = vmatpush2.bf16.msra.mxu0 %v1711
        %1791 = vmatprep.mubr.bf16.mxu0 %v1563
        %1792 = vmatmul.mubr.bf16.gmra.mxu0 %v1562
        %v1793 = vpop.f32.mrf.mxu0
        %v1794 = vadd.f32 0.0, %v1793
        %v1795 = vpop.f32.mrf.mxu0
        %v1796 = vadd.f32 0.0, %v1795
        %v1797 = vpop.f32.mrf.mxu0
        %v1798 = vadd.f32 0.0, %v1797
        %v1799 = vpop.f32.mrf.mxu0
        %v1800 = vadd.f32 0.0, %v1799
        %1801 = vmatprep.mubr.bf16.mxu0 %v1565
        %1802 = vmatmul.mubr.bf16.gmra.mxu0 %v1564
        %v1803 = vpop.f32.mrf.mxu0
        %v1804 = vadd.f32 0.0, %v1803
        %v1805 = vpop.f32.mrf.mxu0
        %v1806 = vadd.f32 0.0, %v1805
        %v1807 = vpop.f32.mrf.mxu0
        %v1808 = vadd.f32 0.0, %v1807
        %v1809 = vpop.f32.mrf.mxu0
        %v1810 = vadd.f32 0.0, %v1809
        %1811 = vdwg.mxu0
        %v1812 = vadd.f32 %v1470, %v1794
        %v1813 = vadd.f32 %v1472, %v1796
        %v1814 = vadd.f32 %v1474, %v1798
        %v1815 = vadd.f32 %v1476, %v1800
        %v1816 = vadd.f32 %v1480, %v1804
        %v1817 = vadd.f32 %v1482, %v1806
        %v1818 = vadd.f32 %v1484, %v1808
        %v1819 = vadd.f32 %v1486, %v1810
        %s1820 = scalar_lea.vmem %s1, 48
        %v1821 = vld [vmem:[%s1820] sm:$0xf]
        %v1822 = vld [vmem:[%s1820 + $0x4] sm:$0xf]
        %v1823 = vld [vmem:[%s1820 + $0x8] sm:$0xf]
        %v1824 = vld [vmem:[%s1820 + $0xc] sm:$0xf]
        %v1829 = vunpack.c.l.b16 %v1821
        %v1830 = vunpack.c.l.b16 %v1822
        %v1831 = vunpack.c.l.b16 %v1823
        %v1832 = vunpack.c.l.b16 %v1824
        %v1833 = vpack.c.b16 %v1830, %v1829
        %v1834 = vpack.c.b16 %v1832, %v1831
        %v1836 = vsel %vm855, %v1833, 0
        %v1839 = vsel %vm855, %v1834, 0
        %1841 = vmatprep.subr.bf16.mxu0 0
        %1842 = vmatpush1.bf16.msra.mxu0 0
        %1843 = vmatprep.subr.bf16.mxu0 0
        %1844 = vmatpush1.bf16.msra.mxu0 0
        %1845 = vmatprep.subr.bf16.mxu0 0
        %1846 = vmatpush1.bf16.msra.mxu0 0
        %1847 = vmatprep.subr.bf16.mxu0 0
        %1848 = vmatpush1.bf16.msra.mxu0 0
        %1849 = vmatprep.subr.bf16.mxu0 %v846
        %1850 = vmatpush1.bf16.msra.mxu0 %v845
        %1851 = vmatprep.subr.bf16.mxu0 %v844
        %1852 = vmatpush1.bf16.msra.mxu0 %v843
        %1853 = vmatprep.subr.bf16.mxu0 %v842
        %1854 = vmatpush1.bf16.msra.mxu0 %v841
        %1855 = vmatprep.subr.bf16.mxu0 %v840
        %1856 = vmatpush1.bf16.msra.mxu0 %v839
        %1857 = vmatprep.subr.bf16.mxu0 0
        %1858 = vmatpush2.bf16.msra.mxu0 0
        %1859 = vmatprep.subr.bf16.mxu0 0
        %1860 = vmatpush2.bf16.msra.mxu0 0
        %1861 = vmatprep.subr.bf16.mxu0 0
        %1862 = vmatpush2.bf16.msra.mxu0 0
        %1863 = vmatprep.subr.bf16.mxu0 0
        %1864 = vmatpush2.bf16.msra.mxu0 0
        %1865 = vmatprep.subr.bf16.mxu0 0
        %1866 = vmatpush2.bf16.msra.mxu0 0
        %1867 = vmatprep.subr.bf16.mxu0 0
        %1868 = vmatpush2.bf16.msra.mxu0 0
        %1869 = vmatprep.subr.bf16.mxu0 0
        %1870 = vmatpush2.bf16.msra.mxu0 0
        %1871 = vmatprep.subr.bf16.mxu0 0
        %1872 = vmatpush2.bf16.msra.mxu0 0
        %1873 = vmatprep.mubr.bf16.mxu0 0
        %1874 = vmatmul.mubr.bf16.gmra.mxu0 %v1836
        %v1875 = vpop.f32.mrf.mxu0
        %v1876 = vadd.f32 0.0, %v1875
        %v1877 = vpop.f32.mrf.mxu0
        %v1878 = vadd.f32 0.0, %v1877
        %v1879 = vpop.f32.mrf.mxu0
        %v1880 = vadd.f32 0.0, %v1879
        %v1881 = vpop.f32.mrf.mxu0
        %v1882 = vadd.f32 0.0, %v1881
        %1883 = vmatprep.mubr.bf16.mxu0 0
        %1884 = vmatmul.mubr.bf16.gmra.mxu0 %v1839
        %v1885 = vpop.f32.mrf.mxu0
        %v1886 = vadd.f32 0.0, %v1885
        %v1887 = vpop.f32.mrf.mxu0
        %v1888 = vadd.f32 0.0, %v1887
        %v1889 = vpop.f32.mrf.mxu0
        %v1890 = vadd.f32 0.0, %v1889
        %v1891 = vpop.f32.mrf.mxu0
        %v1892 = vadd.f32 0.0, %v1891
        %1893 = vdwg.mxu0
        %v1894 = vpack.c.bf16 %v1880, %v1876
        %v1895 = vpack.c.bf16 %v1882, %v1878
        %v1896 = vpack.c.bf16 %v1890, %v1886
        %v1897 = vpack.c.bf16 %v1892, %v1888
        %s1898 = scalar_lea.vmem %s2, 768
        %v1899 = vld [vmem:[%s1898] sm:$0xff]
        %v1900 = vld [vmem:[%s1898 + $0x8] sm:$0xff]
        %v1901 = vld [vmem:[%s1898 + $0x10] sm:$0xff]
        %v1902 = vld [vmem:[%s1898 + $0x18] sm:$0xff]
        %v1903 = vld [vmem:[%s1898 + $0x20] sm:$0xff]
        %v1904 = vld [vmem:[%s1898 + $0x28] sm:$0xff]
        %v1905 = vld [vmem:[%s1898 + $0x30] sm:$0xff]
        %v1906 = vld [vmem:[%s1898 + $0x38] sm:$0xff]
        %v1907 = vld [vmem:[%s1898 + $0x40] sm:$0xff]
        %v1908 = vld [vmem:[%s1898 + $0x48] sm:$0xff]
        %v1909 = vld [vmem:[%s1898 + $0x50] sm:$0xff]
        %v1910 = vld [vmem:[%s1898 + $0x58] sm:$0xff]
        %v1911 = vld [vmem:[%s1898 + $0x60] sm:$0xff]
        %v1912 = vld [vmem:[%s1898 + $0x68] sm:$0xff]
        %v1913 = vld [vmem:[%s1898 + $0x70] sm:$0xff]
        %v1914 = vld [vmem:[%s1898 + $0x78] sm:$0xff]
        %v1915 = vld [vmem:[%s1898 + $0x80] sm:$0xff]
        %v1916 = vld [vmem:[%s1898 + $0x88] sm:$0xff]
        %v1917 = vld [vmem:[%s1898 + $0x90] sm:$0xff]
        %v1918 = vld [vmem:[%s1898 + $0x98] sm:$0xff]
        %v1919 = vld [vmem:[%s1898 + $0xa0] sm:$0xff]
        %v1920 = vld [vmem:[%s1898 + $0xa8] sm:$0xff]
        %v1921 = vld [vmem:[%s1898 + $0xb0] sm:$0xff]
        %v1922 = vld [vmem:[%s1898 + $0xb8] sm:$0xff]
        %v1923 = vld [vmem:[%s1898 + $0xc0] sm:$0xff]
        %v1924 = vld [vmem:[%s1898 + $0xc8] sm:$0xff]
        %v1925 = vld [vmem:[%s1898 + $0xd0] sm:$0xff]
        %v1926 = vld [vmem:[%s1898 + $0xd8] sm:$0xff]
        %v1927 = vld [vmem:[%s1898 + $0xe0] sm:$0xff]
        %v1928 = vld [vmem:[%s1898 + $0xe8] sm:$0xff]
        %v1929 = vld [vmem:[%s1898 + $0xf0] sm:$0xff]
        %v1930 = vld [vmem:[%s1898 + $0xf8] sm:$0xff]
        %v1963 = vunpack.c.l.b16 %v1899
        %v1964 = vunpack.c.h.b16 %v1899
        %v1965 = vunpack.c.l.b16 %v1900
        %v1966 = vunpack.c.h.b16 %v1900
        %v1967 = vunpack.c.l.b16 %v1901
        %v1968 = vunpack.c.h.b16 %v1901
        %v1969 = vunpack.c.l.b16 %v1902
        %v1970 = vunpack.c.h.b16 %v1902
        %v1971 = vunpack.c.l.b16 %v1903
        %v1972 = vunpack.c.h.b16 %v1903
        %v1973 = vunpack.c.l.b16 %v1904
        %v1974 = vunpack.c.h.b16 %v1904
        %v1975 = vunpack.c.l.b16 %v1905
        %v1976 = vunpack.c.h.b16 %v1905
        %v1977 = vunpack.c.l.b16 %v1906
        %v1978 = vunpack.c.h.b16 %v1906
        %v1979 = vunpack.c.l.b16 %v1907
        %v1980 = vunpack.c.h.b16 %v1907
        %v1981 = vunpack.c.l.b16 %v1908
        %v1982 = vunpack.c.h.b16 %v1908
        %v1983 = vunpack.c.l.b16 %v1909
        %v1984 = vunpack.c.h.b16 %v1909
        %v1985 = vunpack.c.l.b16 %v1910
        %v1986 = vunpack.c.h.b16 %v1910
        %v1987 = vunpack.c.l.b16 %v1911
        %v1988 = vunpack.c.h.b16 %v1911
        %v1989 = vunpack.c.l.b16 %v1912
        %v1990 = vunpack.c.h.b16 %v1912
        %v1991 = vunpack.c.l.b16 %v1913
        %v1992 = vunpack.c.h.b16 %v1913
        %v1993 = vunpack.c.l.b16 %v1914
        %v1994 = vunpack.c.h.b16 %v1914
        %v1995 = vunpack.c.l.b16 %v1915
        %v1996 = vunpack.c.h.b16 %v1915
        %v1997 = vunpack.c.l.b16 %v1916
        %v1998 = vunpack.c.h.b16 %v1916
        %v1999 = vunpack.c.l.b16 %v1917
        %v2000 = vunpack.c.h.b16 %v1917
        %v2001 = vunpack.c.l.b16 %v1918
        %v2002 = vunpack.c.h.b16 %v1918
        %v2003 = vunpack.c.l.b16 %v1919
        %v2004 = vunpack.c.h.b16 %v1919
        %v2005 = vunpack.c.l.b16 %v1920
        %v2006 = vunpack.c.h.b16 %v1920
        %v2007 = vunpack.c.l.b16 %v1921
        %v2008 = vunpack.c.h.b16 %v1921
        %v2009 = vunpack.c.l.b16 %v1922
        %v2010 = vunpack.c.h.b16 %v1922
        %v2011 = vunpack.c.l.b16 %v1923
        %v2012 = vunpack.c.h.b16 %v1923
        %v2013 = vunpack.c.l.b16 %v1924
        %v2014 = vunpack.c.h.b16 %v1924
        %v2015 = vunpack.c.l.b16 %v1925
        %v2016 = vunpack.c.h.b16 %v1925
        %v2017 = vunpack.c.l.b16 %v1926
        %v2018 = vunpack.c.h.b16 %v1926
        %v2019 = vunpack.c.l.b16 %v1927
        %v2020 = vunpack.c.h.b16 %v1927
        %v2021 = vunpack.c.l.b16 %v1928
        %v2022 = vunpack.c.h.b16 %v1928
        %v2023 = vunpack.c.l.b16 %v1929
        %v2024 = vunpack.c.h.b16 %v1929
        %v2025 = vunpack.c.l.b16 %v1930
        %v2026 = vunpack.c.h.b16 %v1930
        %v2027 = vpack.c.b16 %v1965, %v1963
        %v2028 = vpack.c.b16 %v1966, %v1964
        %v2029 = vpack.c.b16 %v1969, %v1967
        %v2030 = vpack.c.b16 %v1970, %v1968
        %v2031 = vpack.c.b16 %v1973, %v1971
        %v2032 = vpack.c.b16 %v1974, %v1972
        %v2033 = vpack.c.b16 %v1977, %v1975
        %v2034 = vpack.c.b16 %v1978, %v1976
        %v2035 = vpack.c.b16 %v1981, %v1979
        %v2036 = vpack.c.b16 %v1982, %v1980
        %v2037 = vpack.c.b16 %v1985, %v1983
        %v2038 = vpack.c.b16 %v1986, %v1984
        %v2039 = vpack.c.b16 %v1989, %v1987
        %v2040 = vpack.c.b16 %v1990, %v1988
        %v2041 = vpack.c.b16 %v1993, %v1991
        %v2042 = vpack.c.b16 %v1994, %v1992
        %v2043 = vpack.c.b16 %v1997, %v1995
        %v2044 = vpack.c.b16 %v1998, %v1996
        %v2045 = vpack.c.b16 %v2001, %v1999
        %v2046 = vpack.c.b16 %v2002, %v2000
        %v2047 = vpack.c.b16 %v2005, %v2003
        %v2048 = vpack.c.b16 %v2006, %v2004
        %v2049 = vpack.c.b16 %v2009, %v2007
        %v2050 = vpack.c.b16 %v2010, %v2008
        %v2051 = vpack.c.b16 %v2013, %v2011
        %v2052 = vpack.c.b16 %v2014, %v2012
        %v2053 = vpack.c.b16 %v2017, %v2015
        %v2054 = vpack.c.b16 %v2018, %v2016
        %v2055 = vpack.c.b16 %v2021, %v2019
        %v2056 = vpack.c.b16 %v2022, %v2020
        %v2057 = vpack.c.b16 %v2025, %v2023
        %v2058 = vpack.c.b16 %v2026, %v2024
        %2091 = vmatprep.subr.bf16.mxu0 %v2042
        %2092 = vmatpush1.bf16.msra.mxu0 %v2041
        %2093 = vmatprep.subr.bf16.mxu0 %v2040
        %2094 = vmatpush1.bf16.msra.mxu0 %v2039
        %2095 = vmatprep.subr.bf16.mxu0 %v2038
        %2096 = vmatpush1.bf16.msra.mxu0 %v2037
        %2097 = vmatprep.subr.bf16.mxu0 %v2036
        %2098 = vmatpush1.bf16.msra.mxu0 %v2035
        %2099 = vmatprep.subr.bf16.mxu0 %v2034
        %2100 = vmatpush1.bf16.msra.mxu0 %v2033
        %2101 = vmatprep.subr.bf16.mxu0 %v2032
        %2102 = vmatpush1.bf16.msra.mxu0 %v2031
        %2103 = vmatprep.subr.bf16.mxu0 %v2030
        %2104 = vmatpush1.bf16.msra.mxu0 %v2029
        %2105 = vmatprep.subr.bf16.mxu0 %v2028
        %2106 = vmatpush1.bf16.msra.mxu0 %v2027
        %2107 = vmatprep.subr.bf16.mxu0 %v2058
        %2108 = vmatpush2.bf16.msra.mxu0 %v2057
        %2109 = vmatprep.subr.bf16.mxu0 %v2056
        %2110 = vmatpush2.bf16.msra.mxu0 %v2055
        %2111 = vmatprep.subr.bf16.mxu0 %v2054
        %2112 = vmatpush2.bf16.msra.mxu0 %v2053
        %2113 = vmatprep.subr.bf16.mxu0 %v2052
        %2114 = vmatpush2.bf16.msra.mxu0 %v2051
        %2115 = vmatprep.subr.bf16.mxu0 %v2050
        %2116 = vmatpush2.bf16.msra.mxu0 %v2049
        %2117 = vmatprep.subr.bf16.mxu0 %v2048
        %2118 = vmatpush2.bf16.msra.mxu0 %v2047
        %2119 = vmatprep.subr.bf16.mxu0 %v2046
        %2120 = vmatpush2.bf16.msra.mxu0 %v2045
        %2121 = vmatprep.subr.bf16.mxu0 %v2044
        %2122 = vmatpush2.bf16.msra.mxu0 %v2043
        %2123 = vmatprep.mubr.bf16.mxu0 %v1895
        %2124 = vmatmul.mubr.bf16.gmra.mxu0 %v1894
        %v2125 = vpop.f32.mrf.mxu0
        %v2126 = vadd.f32 0.0, %v2125
        %v2127 = vpop.f32.mrf.mxu0
        %v2128 = vadd.f32 0.0, %v2127
        %v2129 = vpop.f32.mrf.mxu0
        %v2130 = vadd.f32 0.0, %v2129
        %v2131 = vpop.f32.mrf.mxu0
        %v2132 = vadd.f32 0.0, %v2131
        %2133 = vmatprep.mubr.bf16.mxu0 %v1897
        %2134 = vmatmul.mubr.bf16.gmra.mxu0 %v1896
        %v2135 = vpop.f32.mrf.mxu0
        %v2136 = vadd.f32 0.0, %v2135
        %v2137 = vpop.f32.mrf.mxu0
        %v2138 = vadd.f32 0.0, %v2137
        %v2139 = vpop.f32.mrf.mxu0
        %v2140 = vadd.f32 0.0, %v2139
        %v2141 = vpop.f32.mrf.mxu0
        %v2142 = vadd.f32 0.0, %v2141
        %2143 = vdwg.mxu0
        %v2144 = vadd.f32 %v1812, %v2126
        %v2145 = vadd.f32 %v1813, %v2128
        %v2146 = vadd.f32 %v1814, %v2130
        %v2147 = vadd.f32 %v1815, %v2132
        %v2148 = vadd.f32 %v1816, %v2136
        %v2149 = vadd.f32 %v1817, %v2138
        %v2150 = vadd.f32 %v1818, %v2140
        %v2151 = vadd.f32 %v1819, %v2142
        %v2152 = vld [vmem:[%s3] sm:$0x3]
        %v2154 = vlaneseq
        %v2155 = vshrl.u32 %v2154, 7
        %v2156 = vsub.s32 0, %v2155
        %v2157 = vrot.slane %v2152, %v2156
        %v2158 = vlaneseq
        %v2159 = vshrl.u32 %v2158, 7
        %v2160 = vsub.s32 1, %v2159
        %v2161 = vrot.slane %v2152, %v2160
        %v2164 = vadd.f32 %v2144, %v2157
        %v2165 = vadd.f32 %v2145, %v2161
        %v2166 = vadd.f32 %v2146, %v2157
        %v2167 = vadd.f32 %v2147, %v2161
        %v2168 = vadd.f32 %v2148, %v2157
        %v2169 = vadd.f32 %v2149, %v2161
        %v2170 = vadd.f32 %v2150, %v2157
        %v2171 = vadd.f32 %v2151, %v2161
        %vm2172 = vcmp.ge.f32.partialorder %v2164, 0.0
        %vm2173 = vcmp.ge.f32.partialorder %v2165, 0.0
        %vm2174 = vcmp.ge.f32.partialorder %v2166, 0.0
        %vm2175 = vcmp.ge.f32.partialorder %v2167, 0.0
        %vm2176 = vcmp.ge.f32.partialorder %v2168, 0.0
        %vm2177 = vcmp.ge.f32.partialorder %v2169, 0.0
        %vm2178 = vcmp.ge.f32.partialorder %v2170, 0.0
        %vm2179 = vcmp.ge.f32.partialorder %v2171, 0.0
        %v2180 = vmul.f32 %v2164, 0.2
        %v2181 = vmul.f32 %v2165, 0.2
        %v2182 = vmul.f32 %v2166, 0.2
        %v2183 = vmul.f32 %v2167, 0.2
        %v2184 = vmul.f32 %v2168, 0.2
        %v2185 = vmul.f32 %v2169, 0.2
        %v2186 = vmul.f32 %v2170, 0.2
        %v2187 = vmul.f32 %v2171, 0.2
        %v2188 = vsel %vm2172, %v2164, %v2180
        %v2189 = vsel %vm2173, %v2165, %v2181
        %v2190 = vsel %vm2174, %v2166, %v2182
        %v2191 = vsel %vm2175, %v2167, %v2183
        %v2192 = vsel %vm2176, %v2168, %v2184
        %v2193 = vsel %vm2177, %v2169, %v2185
        %v2194 = vsel %vm2178, %v2170, %v2186
        %v2195 = vsel %vm2179, %v2171, %v2187
        %v2196 = vpack.c.bf16 %v2190, %v2188
        %v2197 = vpack.c.bf16 %v2191, %v2189
        %v2198 = vpack.c.bf16 %v2194, %v2192
        %v2199 = vpack.c.bf16 %v2195, %v2193
        %v2200 = vld [vmem:[%s4] sm:$0xf]
        %v2201 = vld [vmem:[%s4 + $0x4] sm:$0xf]
        %v2204 = vunpack.c.l.b16 %v2200
        %v2205 = vunpack.c.l.b16 %v2201
        %v2206 = vpack.c.b16 %v2205, %v2204
        %vm2207 = vcmask 261120
        %v2209 = vsel %vm2207, %v2206, 0
        %2211 = vmatprep.subr.bf16.mxu0 0
        %2212 = vmatpush1.bf16.msra.mxu0 0
        %2213 = vmatprep.subr.bf16.mxu0 0
        %2214 = vmatpush1.bf16.msra.mxu0 0
        %2215 = vmatprep.subr.bf16.mxu0 0
        %2216 = vmatpush1.bf16.msra.mxu0 0
        %2217 = vmatprep.subr.bf16.mxu0 0
        %2218 = vmatpush1.bf16.msra.mxu0 0
        %2219 = vmatprep.subr.bf16.mxu0 0
        %2220 = vmatpush1.bf16.msra.mxu0 0
        %2221 = vmatprep.subr.bf16.mxu0 0
        %2222 = vmatpush1.bf16.msra.mxu0 0
        %2223 = vmatprep.subr.bf16.mxu0 %v2199
        %2224 = vmatpush1.bf16.msra.mxu0 %v2198
        %2225 = vmatprep.subr.bf16.mxu0 %v2197
        %2226 = vmatpush1.bf16.msra.mxu0 %v2196
        %2227 = vmatprep.subr.bf16.mxu0 0
        %2228 = vmatpush2.bf16.msra.mxu0 0
        %2229 = vmatprep.subr.bf16.mxu0 0
        %2230 = vmatpush2.bf16.msra.mxu0 0
        %2231 = vmatprep.subr.bf16.mxu0 0
        %2232 = vmatpush2.bf16.msra.mxu0 0
        %2233 = vmatprep.subr.bf16.mxu0 0
        %2234 = vmatpush2.bf16.msra.mxu0 0
        %2235 = vmatprep.subr.bf16.mxu0 0
        %2236 = vmatpush2.bf16.msra.mxu0 0
        %2237 = vmatprep.subr.bf16.mxu0 0
        %2238 = vmatpush2.bf16.msra.mxu0 0
        %2239 = vmatprep.subr.bf16.mxu0 0
        %2240 = vmatpush2.bf16.msra.mxu0 0
        %2241 = vmatprep.subr.bf16.mxu0 0
        %2242 = vmatpush2.bf16.msra.mxu0 0
        %2243 = vmatprep.mubr.bf16.mxu0 0
        %2244 = vmatmul.mubr.bf16.gmra.mxu0 %v2209
        %v2245 = vpop.f32.mrf.mxu0
        %v2246 = vadd.f32 0.0, %v2245
        %v2247 = vpop.f32.mrf.mxu0
        %v2248 = vadd.f32 0.0, %v2247
        %v2249 = vpop.f32.mrf.mxu0
        %v2250 = vadd.f32 0.0, %v2249
        %v2251 = vpop.f32.mrf.mxu0
        %v2252 = vadd.f32 0.0, %v2251
        %2253 = vdwg.mxu0
        %v2254 = vpack.c.bf16 %v2250, %v2246
        %v2255 = vpack.c.bf16 %v2252, %v2248
        %v2256 = vld [vmem:[%s5] sm:$0xff]
        %v2257 = vld [vmem:[%s5 + $0x8] sm:$0xff]
        %v2258 = vld [vmem:[%s5 + $0x10] sm:$0xff]
        %v2259 = vld [vmem:[%s5 + $0x18] sm:$0xff]
        %v2260 = vld [vmem:[%s5 + $0x20] sm:$0xff]
        %v2261 = vld [vmem:[%s5 + $0x28] sm:$0xff]
        %v2262 = vld [vmem:[%s5 + $0x30] sm:$0xff]
        %v2263 = vld [vmem:[%s5 + $0x38] sm:$0xff]
        %v2264 = vld [vmem:[%s5 + $0x40] sm:$0xff]
        %v2265 = vld [vmem:[%s5 + $0x48] sm:$0xff]
        %v2266 = vld [vmem:[%s5 + $0x50] sm:$0xff]
        %v2267 = vld [vmem:[%s5 + $0x58] sm:$0xff]
        %v2268 = vld [vmem:[%s5 + $0x60] sm:$0xff]
        %v2269 = vld [vmem:[%s5 + $0x68] sm:$0xff]
        %v2270 = vld [vmem:[%s5 + $0x70] sm:$0xff]
        %v2271 = vld [vmem:[%s5 + $0x78] sm:$0xff]
        %v2272 = vld [vmem:[%s5 + $0x80] sm:$0xff]
        %v2273 = vld [vmem:[%s5 + $0x88] sm:$0xff]
        %v2274 = vld [vmem:[%s5 + $0x90] sm:$0xff]
        %v2275 = vld [vmem:[%s5 + $0x98] sm:$0xff]
        %v2276 = vld [vmem:[%s5 + $0xa0] sm:$0xff]
        %v2277 = vld [vmem:[%s5 + $0xa8] sm:$0xff]
        %v2278 = vld [vmem:[%s5 + $0xb0] sm:$0xff]
        %v2279 = vld [vmem:[%s5 + $0xb8] sm:$0xff]
        %v2280 = vld [vmem:[%s5 + $0xc0] sm:$0xff]
        %v2281 = vld [vmem:[%s5 + $0xc8] sm:$0xff]
        %v2282 = vld [vmem:[%s5 + $0xd0] sm:$0xff]
        %v2283 = vld [vmem:[%s5 + $0xd8] sm:$0xff]
        %v2284 = vld [vmem:[%s5 + $0xe0] sm:$0xff]
        %v2285 = vld [vmem:[%s5 + $0xe8] sm:$0xff]
        %v2286 = vld [vmem:[%s5 + $0xf0] sm:$0xff]
        %v2287 = vld [vmem:[%s5 + $0xf8] sm:$0xff]
        %s2288 = scalar_lea.vmem %s4, 8
        %v2289 = vld [vmem:[%s2288] sm:$0xf]
        %v2290 = vld [vmem:[%s2288 + $0x4] sm:$0xf]
        %v2293 = vunpack.c.l.b16 %v2289
        %v2294 = vunpack.c.l.b16 %v2290
        %v2295 = vpack.c.b16 %v2294, %v2293
        %v2297 = vsel %vm2207, %v2295, 0
        %2299 = vmatprep.subr.bf16.mxu0 0
        %2300 = vmatpush1.bf16.msra.mxu0 0
        %2301 = vmatprep.subr.bf16.mxu0 0
        %2302 = vmatpush1.bf16.msra.mxu0 0
        %2303 = vmatprep.subr.bf16.mxu0 0
        %2304 = vmatpush1.bf16.msra.mxu0 0
        %2305 = vmatprep.subr.bf16.mxu0 0
        %2306 = vmatpush1.bf16.msra.mxu0 0
        %2307 = vmatprep.subr.bf16.mxu0 0
        %2308 = vmatpush1.bf16.msra.mxu0 0
        %2309 = vmatprep.subr.bf16.mxu0 0
        %2310 = vmatpush1.bf16.msra.mxu0 0
        %2311 = vmatprep.subr.bf16.mxu0 %v2199
        %2312 = vmatpush1.bf16.msra.mxu0 %v2198
        %2313 = vmatprep.subr.bf16.mxu0 %v2197
        %2314 = vmatpush1.bf16.msra.mxu0 %v2196
        %2315 = vmatprep.subr.bf16.mxu0 0
        %2316 = vmatpush2.bf16.msra.mxu0 0
        %2317 = vmatprep.subr.bf16.mxu0 0
        %2318 = vmatpush2.bf16.msra.mxu0 0
        %2319 = vmatprep.subr.bf16.mxu0 0
        %2320 = vmatpush2.bf16.msra.mxu0 0
        %2321 = vmatprep.subr.bf16.mxu0 0
        %2322 = vmatpush2.bf16.msra.mxu0 0
        %2323 = vmatprep.subr.bf16.mxu0 0
        %2324 = vmatpush2.bf16.msra.mxu0 0
        %2325 = vmatprep.subr.bf16.mxu0 0
        %2326 = vmatpush2.bf16.msra.mxu0 0
        %2327 = vmatprep.subr.bf16.mxu0 0
        %2328 = vmatpush2.bf16.msra.mxu0 0
        %2329 = vmatprep.subr.bf16.mxu0 0
        %2330 = vmatpush2.bf16.msra.mxu0 0
        %2331 = vmatprep.mubr.bf16.mxu0 0
        %2332 = vmatmul.mubr.bf16.gmra.mxu0 %v2297
        %v2333 = vpop.f32.mrf.mxu0
        %v2334 = vadd.f32 0.0, %v2333
        %v2335 = vpop.f32.mrf.mxu0
        %v2336 = vadd.f32 0.0, %v2335
        %v2337 = vpop.f32.mrf.mxu0
        %v2338 = vadd.f32 0.0, %v2337
        %v2339 = vpop.f32.mrf.mxu0
        %v2340 = vadd.f32 0.0, %v2339
        %2341 = vdwg.mxu0
        %v2342 = vpack.c.bf16 %v2338, %v2334
        %v2343 = vpack.c.bf16 %v2340, %v2336
        %s2344 = scalar_lea.vmem %s5, 256
        %v2345 = vld [vmem:[%s2344] sm:$0xff]
        %v2346 = vld [vmem:[%s2344 + $0x8] sm:$0xff]
        %v2347 = vld [vmem:[%s2344 + $0x10] sm:$0xff]
        %v2348 = vld [vmem:[%s2344 + $0x18] sm:$0xff]
        %v2349 = vld [vmem:[%s2344 + $0x20] sm:$0xff]
        %v2350 = vld [vmem:[%s2344 + $0x28] sm:$0xff]
        %v2351 = vld [vmem:[%s2344 + $0x30] sm:$0xff]
        %v2352 = vld [vmem:[%s2344 + $0x38] sm:$0xff]
        %v2353 = vld [vmem:[%s2344 + $0x40] sm:$0xff]
        %v2354 = vld [vmem:[%s2344 + $0x48] sm:$0xff]
        %v2355 = vld [vmem:[%s2344 + $0x50] sm:$0xff]
        %v2356 = vld [vmem:[%s2344 + $0x58] sm:$0xff]
        %v2357 = vld [vmem:[%s2344 + $0x60] sm:$0xff]
        %v2358 = vld [vmem:[%s2344 + $0x68] sm:$0xff]
        %v2359 = vld [vmem:[%s2344 + $0x70] sm:$0xff]
        %v2360 = vld [vmem:[%s2344 + $0x78] sm:$0xff]
        %v2361 = vld [vmem:[%s2344 + $0x80] sm:$0xff]
        %v2362 = vld [vmem:[%s2344 + $0x88] sm:$0xff]
        %v2363 = vld [vmem:[%s2344 + $0x90] sm:$0xff]
        %v2364 = vld [vmem:[%s2344 + $0x98] sm:$0xff]
        %v2365 = vld [vmem:[%s2344 + $0xa0] sm:$0xff]
        %v2366 = vld [vmem:[%s2344 + $0xa8] sm:$0xff]
        %v2367 = vld [vmem:[%s2344 + $0xb0] sm:$0xff]
        %v2368 = vld [vmem:[%s2344 + $0xb8] sm:$0xff]
        %v2369 = vld [vmem:[%s2344 + $0xc0] sm:$0xff]
        %v2370 = vld [vmem:[%s2344 + $0xc8] sm:$0xff]
        %v2371 = vld [vmem:[%s2344 + $0xd0] sm:$0xff]
        %v2372 = vld [vmem:[%s2344 + $0xd8] sm:$0xff]
        %v2373 = vld [vmem:[%s2344 + $0xe0] sm:$0xff]
        %v2374 = vld [vmem:[%s2344 + $0xe8] sm:$0xff]
        %v2375 = vld [vmem:[%s2344 + $0xf0] sm:$0xff]
        %v2376 = vld [vmem:[%s2344 + $0xf8] sm:$0xff]
        %v2409 = vunpack.c.l.b16 %v2345
        %v2410 = vunpack.c.h.b16 %v2345
        %v2411 = vunpack.c.l.b16 %v2346
        %v2412 = vunpack.c.h.b16 %v2346
        %v2413 = vunpack.c.l.b16 %v2347
        %v2414 = vunpack.c.h.b16 %v2347
        %v2415 = vunpack.c.l.b16 %v2348
        %v2416 = vunpack.c.h.b16 %v2348
        %v2417 = vunpack.c.l.b16 %v2349
        %v2418 = vunpack.c.h.b16 %v2349
        %v2419 = vunpack.c.l.b16 %v2350
        %v2420 = vunpack.c.h.b16 %v2350
        %v2421 = vunpack.c.l.b16 %v2351
        %v2422 = vunpack.c.h.b16 %v2351
        %v2423 = vunpack.c.l.b16 %v2352
        %v2424 = vunpack.c.h.b16 %v2352
        %v2425 = vunpack.c.l.b16 %v2353
        %v2426 = vunpack.c.h.b16 %v2353
        %v2427 = vunpack.c.l.b16 %v2354
        %v2428 = vunpack.c.h.b16 %v2354
        %v2429 = vunpack.c.l.b16 %v2355
        %v2430 = vunpack.c.h.b16 %v2355
        %v2431 = vunpack.c.l.b16 %v2356
        %v2432 = vunpack.c.h.b16 %v2356
        %v2433 = vunpack.c.l.b16 %v2357
        %v2434 = vunpack.c.h.b16 %v2357
        %v2435 = vunpack.c.l.b16 %v2358
        %v2436 = vunpack.c.h.b16 %v2358
        %v2437 = vunpack.c.l.b16 %v2359
        %v2438 = vunpack.c.h.b16 %v2359
        %v2439 = vunpack.c.l.b16 %v2360
        %v2440 = vunpack.c.h.b16 %v2360
        %v2441 = vunpack.c.l.b16 %v2361
        %v2442 = vunpack.c.h.b16 %v2361
        %v2443 = vunpack.c.l.b16 %v2362
        %v2444 = vunpack.c.h.b16 %v2362
        %v2445 = vunpack.c.l.b16 %v2363
        %v2446 = vunpack.c.h.b16 %v2363
        %v2447 = vunpack.c.l.b16 %v2364
        %v2448 = vunpack.c.h.b16 %v2364
        %v2449 = vunpack.c.l.b16 %v2365
        %v2450 = vunpack.c.h.b16 %v2365
        %v2451 = vunpack.c.l.b16 %v2366
        %v2452 = vunpack.c.h.b16 %v2366
        %v2453 = vunpack.c.l.b16 %v2367
        %v2454 = vunpack.c.h.b16 %v2367
        %v2455 = vunpack.c.l.b16 %v2368
        %v2456 = vunpack.c.h.b16 %v2368
        %v2457 = vunpack.c.l.b16 %v2369
        %v2458 = vunpack.c.h.b16 %v2369
        %v2459 = vunpack.c.l.b16 %v2370
        %v2460 = vunpack.c.h.b16 %v2370
        %v2461 = vunpack.c.l.b16 %v2371
        %v2462 = vunpack.c.h.b16 %v2371
        %v2463 = vunpack.c.l.b16 %v2372
        %v2464 = vunpack.c.h.b16 %v2372
        %v2465 = vunpack.c.l.b16 %v2373
        %v2466 = vunpack.c.h.b16 %v2373
        %v2467 = vunpack.c.l.b16 %v2374
        %v2468 = vunpack.c.h.b16 %v2374
        %v2469 = vunpack.c.l.b16 %v2375
        %v2470 = vunpack.c.h.b16 %v2375
        %v2471 = vunpack.c.l.b16 %v2376
        %v2472 = vunpack.c.h.b16 %v2376
        %v2473 = vpack.c.b16 %v2411, %v2409
        %v2474 = vpack.c.b16 %v2412, %v2410
        %v2475 = vpack.c.b16 %v2415, %v2413
        %v2476 = vpack.c.b16 %v2416, %v2414
        %v2477 = vpack.c.b16 %v2419, %v2417
        %v2478 = vpack.c.b16 %v2420, %v2418
        %v2479 = vpack.c.b16 %v2423, %v2421
        %v2480 = vpack.c.b16 %v2424, %v2422
        %v2481 = vpack.c.b16 %v2427, %v2425
        %v2482 = vpack.c.b16 %v2428, %v2426
        %v2483 = vpack.c.b16 %v2431, %v2429
        %v2484 = vpack.c.b16 %v2432, %v2430
        %v2485 = vpack.c.b16 %v2435, %v2433
        %v2486 = vpack.c.b16 %v2436, %v2434
        %v2487 = vpack.c.b16 %v2439, %v2437
        %v2488 = vpack.c.b16 %v2440, %v2438
        %v2489 = vpack.c.b16 %v2443, %v2441
        %v2490 = vpack.c.b16 %v2444, %v2442
        %v2491 = vpack.c.b16 %v2447, %v2445
        %v2492 = vpack.c.b16 %v2448, %v2446
        %v2493 = vpack.c.b16 %v2451, %v2449
        %v2494 = vpack.c.b16 %v2452, %v2450
        %v2495 = vpack.c.b16 %v2455, %v2453
        %v2496 = vpack.c.b16 %v2456, %v2454
        %v2497 = vpack.c.b16 %v2459, %v2457
        %v2498 = vpack.c.b16 %v2460, %v2458
        %v2499 = vpack.c.b16 %v2463, %v2461
        %v2500 = vpack.c.b16 %v2464, %v2462
        %v2501 = vpack.c.b16 %v2467, %v2465
        %v2502 = vpack.c.b16 %v2468, %v2466
        %v2503 = vpack.c.b16 %v2471, %v2469
        %v2504 = vpack.c.b16 %v2472, %v2470
        %2537 = vmatprep.subr.bf16.mxu0 %v2488
        %2538 = vmatpush1.bf16.msra.mxu0 %v2487
        %2539 = vmatprep.subr.bf16.mxu0 %v2486
        %2540 = vmatpush1.bf16.msra.mxu0 %v2485
        %2541 = vmatprep.subr.bf16.mxu0 %v2484
        %2542 = vmatpush1.bf16.msra.mxu0 %v2483
        %2543 = vmatprep.subr.bf16.mxu0 %v2482
        %2544 = vmatpush1.bf16.msra.mxu0 %v2481
        %2545 = vmatprep.subr.bf16.mxu0 %v2480
        %2546 = vmatpush1.bf16.msra.mxu0 %v2479
        %2547 = vmatprep.subr.bf16.mxu0 %v2478
        %2548 = vmatpush1.bf16.msra.mxu0 %v2477
        %2549 = vmatprep.subr.bf16.mxu0 %v2476
        %2550 = vmatpush1.bf16.msra.mxu0 %v2475
        %2551 = vmatprep.subr.bf16.mxu0 %v2474
        %2552 = vmatpush1.bf16.msra.mxu0 %v2473
        %2553 = vmatprep.subr.bf16.mxu0 %v2504
        %2554 = vmatpush2.bf16.msra.mxu0 %v2503
        %2555 = vmatprep.subr.bf16.mxu0 %v2502
        %2556 = vmatpush2.bf16.msra.mxu0 %v2501
        %2557 = vmatprep.subr.bf16.mxu0 %v2500
        %2558 = vmatpush2.bf16.msra.mxu0 %v2499
        %2559 = vmatprep.subr.bf16.mxu0 %v2498
        %2560 = vmatpush2.bf16.msra.mxu0 %v2497
        %2561 = vmatprep.subr.bf16.mxu0 %v2496
        %2562 = vmatpush2.bf16.msra.mxu0 %v2495
        %2563 = vmatprep.subr.bf16.mxu0 %v2494
        %2564 = vmatpush2.bf16.msra.mxu0 %v2493
        %2565 = vmatprep.subr.bf16.mxu0 %v2492
        %2566 = vmatpush2.bf16.msra.mxu0 %v2491
        %2567 = vmatprep.subr.bf16.mxu0 %v2490
        %2568 = vmatpush2.bf16.msra.mxu0 %v2489
        %2569 = vmatprep.mubr.bf16.mxu0 %v2343
        %2570 = vmatmul.mubr.bf16.gmra.mxu0 %v2342
        %v2571 = vpop.f32.mrf.mxu0
        %v2572 = vadd.f32 0.0, %v2571
        %v2573 = vpop.f32.mrf.mxu0
        %v2574 = vadd.f32 0.0, %v2573
        %v2575 = vpop.f32.mrf.mxu0
        %v2576 = vadd.f32 0.0, %v2575
        %v2577 = vpop.f32.mrf.mxu0
        %v2578 = vadd.f32 0.0, %v2577
        %2579 = vdwg.mxu0
        %v2612 = vunpack.c.l.b16 %v2256
        %v2613 = vunpack.c.h.b16 %v2256
        %v2614 = vunpack.c.l.b16 %v2257
        %v2615 = vunpack.c.h.b16 %v2257
        %v2616 = vunpack.c.l.b16 %v2258
        %v2617 = vunpack.c.h.b16 %v2258
        %v2618 = vunpack.c.l.b16 %v2259
        %v2619 = vunpack.c.h.b16 %v2259
        %v2620 = vunpack.c.l.b16 %v2260
        %v2621 = vunpack.c.h.b16 %v2260
        %v2622 = vunpack.c.l.b16 %v2261
        %v2623 = vunpack.c.h.b16 %v2261
        %v2624 = vunpack.c.l.b16 %v2262
        %v2625 = vunpack.c.h.b16 %v2262
        %v2626 = vunpack.c.l.b16 %v2263
        %v2627 = vunpack.c.h.b16 %v2263
        %v2628 = vunpack.c.l.b16 %v2264
        %v2629 = vunpack.c.h.b16 %v2264
        %v2630 = vunpack.c.l.b16 %v2265
        %v2631 = vunpack.c.h.b16 %v2265
        %v2632 = vunpack.c.l.b16 %v2266
        %v2633 = vunpack.c.h.b16 %v2266
        %v2634 = vunpack.c.l.b16 %v2267
        %v2635 = vunpack.c.h.b16 %v2267
        %v2636 = vunpack.c.l.b16 %v2268
        %v2637 = vunpack.c.h.b16 %v2268
        %v2638 = vunpack.c.l.b16 %v2269
        %v2639 = vunpack.c.h.b16 %v2269
        %v2640 = vunpack.c.l.b16 %v2270
        %v2641 = vunpack.c.h.b16 %v2270
        %v2642 = vunpack.c.l.b16 %v2271
        %v2643 = vunpack.c.h.b16 %v2271
        %v2644 = vunpack.c.l.b16 %v2272
        %v2645 = vunpack.c.h.b16 %v2272
        %v2646 = vunpack.c.l.b16 %v2273
        %v2647 = vunpack.c.h.b16 %v2273
        %v2648 = vunpack.c.l.b16 %v2274
        %v2649 = vunpack.c.h.b16 %v2274
        %v2650 = vunpack.c.l.b16 %v2275
        %v2651 = vunpack.c.h.b16 %v2275
        %v2652 = vunpack.c.l.b16 %v2276
        %v2653 = vunpack.c.h.b16 %v2276
        %v2654 = vunpack.c.l.b16 %v2277
        %v2655 = vunpack.c.h.b16 %v2277
        %v2656 = vunpack.c.l.b16 %v2278
        %v2657 = vunpack.c.h.b16 %v2278
        %v2658 = vunpack.c.l.b16 %v2279
        %v2659 = vunpack.c.h.b16 %v2279
        %v2660 = vunpack.c.l.b16 %v2280
        %v2661 = vunpack.c.h.b16 %v2280
        %v2662 = vunpack.c.l.b16 %v2281
        %v2663 = vunpack.c.h.b16 %v2281
        %v2664 = vunpack.c.l.b16 %v2282
        %v2665 = vunpack.c.h.b16 %v2282
        %v2666 = vunpack.c.l.b16 %v2283
        %v2667 = vunpack.c.h.b16 %v2283
        %v2668 = vunpack.c.l.b16 %v2284
        %v2669 = vunpack.c.h.b16 %v2284
        %v2670 = vunpack.c.l.b16 %v2285
        %v2671 = vunpack.c.h.b16 %v2285
        %v2672 = vunpack.c.l.b16 %v2286
        %v2673 = vunpack.c.h.b16 %v2286
        %v2674 = vunpack.c.l.b16 %v2287
        %v2675 = vunpack.c.h.b16 %v2287
        %v2676 = vpack.c.b16 %v2614, %v2612
        %v2677 = vpack.c.b16 %v2615, %v2613
        %v2678 = vpack.c.b16 %v2618, %v2616
        %v2679 = vpack.c.b16 %v2619, %v2617
        %v2680 = vpack.c.b16 %v2622, %v2620
        %v2681 = vpack.c.b16 %v2623, %v2621
        %v2682 = vpack.c.b16 %v2626, %v2624
        %v2683 = vpack.c.b16 %v2627, %v2625
        %v2684 = vpack.c.b16 %v2630, %v2628
        %v2685 = vpack.c.b16 %v2631, %v2629
        %v2686 = vpack.c.b16 %v2634, %v2632
        %v2687 = vpack.c.b16 %v2635, %v2633
        %v2688 = vpack.c.b16 %v2638, %v2636
        %v2689 = vpack.c.b16 %v2639, %v2637
        %v2690 = vpack.c.b16 %v2642, %v2640
        %v2691 = vpack.c.b16 %v2643, %v2641
        %v2692 = vpack.c.b16 %v2646, %v2644
        %v2693 = vpack.c.b16 %v2647, %v2645
        %v2694 = vpack.c.b16 %v2650, %v2648
        %v2695 = vpack.c.b16 %v2651, %v2649
        %v2696 = vpack.c.b16 %v2654, %v2652
        %v2697 = vpack.c.b16 %v2655, %v2653
        %v2698 = vpack.c.b16 %v2658, %v2656
        %v2699 = vpack.c.b16 %v2659, %v2657
        %v2700 = vpack.c.b16 %v2662, %v2660
        %v2701 = vpack.c.b16 %v2663, %v2661
        %v2702 = vpack.c.b16 %v2666, %v2664
        %v2703 = vpack.c.b16 %v2667, %v2665
        %v2704 = vpack.c.b16 %v2670, %v2668
        %v2705 = vpack.c.b16 %v2671, %v2669
        %v2706 = vpack.c.b16 %v2674, %v2672
        %v2707 = vpack.c.b16 %v2675, %v2673
        %2740 = vmatprep.subr.bf16.mxu0 %v2691
        %2741 = vmatpush1.bf16.msra.mxu0 %v2690
        %2742 = vmatprep.subr.bf16.mxu0 %v2689
        %2743 = vmatpush1.bf16.msra.mxu0 %v2688
        %2744 = vmatprep.subr.bf16.mxu0 %v2687
        %2745 = vmatpush1.bf16.msra.mxu0 %v2686
        %2746 = vmatprep.subr.bf16.mxu0 %v2685
        %2747 = vmatpush1.bf16.msra.mxu0 %v2684
        %2748 = vmatprep.subr.bf16.mxu0 %v2683
        %2749 = vmatpush1.bf16.msra.mxu0 %v2682
        %2750 = vmatprep.subr.bf16.mxu0 %v2681
        %2751 = vmatpush1.bf16.msra.mxu0 %v2680
        %2752 = vmatprep.subr.bf16.mxu0 %v2679
        %2753 = vmatpush1.bf16.msra.mxu0 %v2678
        %2754 = vmatprep.subr.bf16.mxu0 %v2677
        %2755 = vmatpush1.bf16.msra.mxu0 %v2676
        %2756 = vmatprep.subr.bf16.mxu0 %v2707
        %2757 = vmatpush2.bf16.msra.mxu0 %v2706
        %2758 = vmatprep.subr.bf16.mxu0 %v2705
        %2759 = vmatpush2.bf16.msra.mxu0 %v2704
        %2760 = vmatprep.subr.bf16.mxu0 %v2703
        %2761 = vmatpush2.bf16.msra.mxu0 %v2702
        %2762 = vmatprep.subr.bf16.mxu0 %v2701
        %2763 = vmatpush2.bf16.msra.mxu0 %v2700
        %2764 = vmatprep.subr.bf16.mxu0 %v2699
        %2765 = vmatpush2.bf16.msra.mxu0 %v2698
        %2766 = vmatprep.subr.bf16.mxu0 %v2697
        %2767 = vmatpush2.bf16.msra.mxu0 %v2696
        %2768 = vmatprep.subr.bf16.mxu0 %v2695
        %2769 = vmatpush2.bf16.msra.mxu0 %v2694
        %2770 = vmatprep.subr.bf16.mxu0 %v2693
        %2771 = vmatpush2.bf16.msra.mxu0 %v2692
        %2772 = vmatprep.mubr.bf16.mxu0 %v2255
        %2773 = vmatmul.mubr.bf16.gmra.mxu0 %v2254
        %v2774 = vpop.f32.mrf.mxu0
        %v2775 = vadd.f32 %v2572, %v2774
        %v2776 = vpop.f32.mrf.mxu0
        %v2777 = vadd.f32 %v2574, %v2776
        %v2778 = vpop.f32.mrf.mxu0
        %v2779 = vadd.f32 %v2576, %v2778
        %v2780 = vpop.f32.mrf.mxu0
        %v2781 = vadd.f32 %v2578, %v2780
        %2782 = vdwg.mxu0
        %s2783 = scalar_lea.vmem %s4, 16
        %v2784 = vld [vmem:[%s2783] sm:$0xf]
        %v2785 = vld [vmem:[%s2783 + $0x4] sm:$0xf]
        %v2788 = vunpack.c.l.b16 %v2784
        %v2789 = vunpack.c.l.b16 %v2785
        %v2790 = vpack.c.b16 %v2789, %v2788
        %v2792 = vsel %vm2207, %v2790, 0
        %2794 = vmatprep.subr.bf16.mxu0 0
        %2795 = vmatpush1.bf16.msra.mxu0 0
        %2796 = vmatprep.subr.bf16.mxu0 0
        %2797 = vmatpush1.bf16.msra.mxu0 0
        %2798 = vmatprep.subr.bf16.mxu0 0
        %2799 = vmatpush1.bf16.msra.mxu0 0
        %2800 = vmatprep.subr.bf16.mxu0 0
        %2801 = vmatpush1.bf16.msra.mxu0 0
        %2802 = vmatprep.subr.bf16.mxu0 0
        %2803 = vmatpush1.bf16.msra.mxu0 0
        %2804 = vmatprep.subr.bf16.mxu0 0
        %2805 = vmatpush1.bf16.msra.mxu0 0
        %2806 = vmatprep.subr.bf16.mxu0 %v2199
        %2807 = vmatpush1.bf16.msra.mxu0 %v2198
        %2808 = vmatprep.subr.bf16.mxu0 %v2197
        %2809 = vmatpush1.bf16.msra.mxu0 %v2196
        %2810 = vmatprep.subr.bf16.mxu0 0
        %2811 = vmatpush2.bf16.msra.mxu0 0
        %2812 = vmatprep.subr.bf16.mxu0 0
        %2813 = vmatpush2.bf16.msra.mxu0 0
        %2814 = vmatprep.subr.bf16.mxu0 0
        %2815 = vmatpush2.bf16.msra.mxu0 0
        %2816 = vmatprep.subr.bf16.mxu0 0
        %2817 = vmatpush2.bf16.msra.mxu0 0
        %2818 = vmatprep.subr.bf16.mxu0 0
        %2819 = vmatpush2.bf16.msra.mxu0 0
        %2820 = vmatprep.subr.bf16.mxu0 0
        %2821 = vmatpush2.bf16.msra.mxu0 0
        %2822 = vmatprep.subr.bf16.mxu0 0
        %2823 = vmatpush2.bf16.msra.mxu0 0
        %2824 = vmatprep.subr.bf16.mxu0 0
        %2825 = vmatpush2.bf16.msra.mxu0 0
        %2826 = vmatprep.mubr.bf16.mxu0 0
        %2827 = vmatmul.mubr.bf16.gmra.mxu0 %v2792
        %v2828 = vpop.f32.mrf.mxu0
        %v2829 = vadd.f32 0.0, %v2828
        %v2830 = vpop.f32.mrf.mxu0
        %v2831 = vadd.f32 0.0, %v2830
        %v2832 = vpop.f32.mrf.mxu0
        %v2833 = vadd.f32 0.0, %v2832
        %v2834 = vpop.f32.mrf.mxu0
        %v2835 = vadd.f32 0.0, %v2834
        %2836 = vdwg.mxu0
        %v2837 = vpack.c.bf16 %v2833, %v2829
        %v2838 = vpack.c.bf16 %v2835, %v2831
        %s2839 = scalar_lea.vmem %s5, 512
        %v2840 = vld [vmem:[%s2839] sm:$0xff]
        %v2841 = vld [vmem:[%s2839 + $0x8] sm:$0xff]
        %v2842 = vld [vmem:[%s2839 + $0x10] sm:$0xff]
        %v2843 = vld [vmem:[%s2839 + $0x18] sm:$0xff]
        %v2844 = vld [vmem:[%s2839 + $0x20] sm:$0xff]
        %v2845 = vld [vmem:[%s2839 + $0x28] sm:$0xff]
        %v2846 = vld [vmem:[%s2839 + $0x30] sm:$0xff]
        %v2847 = vld [vmem:[%s2839 + $0x38] sm:$0xff]
        %v2848 = vld [vmem:[%s2839 + $0x40] sm:$0xff]
        %v2849 = vld [vmem:[%s2839 + $0x48] sm:$0xff]
        %v2850 = vld [vmem:[%s2839 + $0x50] sm:$0xff]
        %v2851 = vld [vmem:[%s2839 + $0x58] sm:$0xff]
        %v2852 = vld [vmem:[%s2839 + $0x60] sm:$0xff]
        %v2853 = vld [vmem:[%s2839 + $0x68] sm:$0xff]
        %v2854 = vld [vmem:[%s2839 + $0x70] sm:$0xff]
        %v2855 = vld [vmem:[%s2839 + $0x78] sm:$0xff]
        %v2856 = vld [vmem:[%s2839 + $0x80] sm:$0xff]
        %v2857 = vld [vmem:[%s2839 + $0x88] sm:$0xff]
        %v2858 = vld [vmem:[%s2839 + $0x90] sm:$0xff]
        %v2859 = vld [vmem:[%s2839 + $0x98] sm:$0xff]
        %v2860 = vld [vmem:[%s2839 + $0xa0] sm:$0xff]
        %v2861 = vld [vmem:[%s2839 + $0xa8] sm:$0xff]
        %v2862 = vld [vmem:[%s2839 + $0xb0] sm:$0xff]
        %v2863 = vld [vmem:[%s2839 + $0xb8] sm:$0xff]
        %v2864 = vld [vmem:[%s2839 + $0xc0] sm:$0xff]
        %v2865 = vld [vmem:[%s2839 + $0xc8] sm:$0xff]
        %v2866 = vld [vmem:[%s2839 + $0xd0] sm:$0xff]
        %v2867 = vld [vmem:[%s2839 + $0xd8] sm:$0xff]
        %v2868 = vld [vmem:[%s2839 + $0xe0] sm:$0xff]
        %v2869 = vld [vmem:[%s2839 + $0xe8] sm:$0xff]
        %v2870 = vld [vmem:[%s2839 + $0xf0] sm:$0xff]
        %v2871 = vld [vmem:[%s2839 + $0xf8] sm:$0xff]
        %v2904 = vunpack.c.l.b16 %v2840
        %v2905 = vunpack.c.h.b16 %v2840
        %v2906 = vunpack.c.l.b16 %v2841
        %v2907 = vunpack.c.h.b16 %v2841
        %v2908 = vunpack.c.l.b16 %v2842
        %v2909 = vunpack.c.h.b16 %v2842
        %v2910 = vunpack.c.l.b16 %v2843
        %v2911 = vunpack.c.h.b16 %v2843
        %v2912 = vunpack.c.l.b16 %v2844
        %v2913 = vunpack.c.h.b16 %v2844
        %v2914 = vunpack.c.l.b16 %v2845
        %v2915 = vunpack.c.h.b16 %v2845
        %v2916 = vunpack.c.l.b16 %v2846
        %v2917 = vunpack.c.h.b16 %v2846
        %v2918 = vunpack.c.l.b16 %v2847
        %v2919 = vunpack.c.h.b16 %v2847
        %v2920 = vunpack.c.l.b16 %v2848
        %v2921 = vunpack.c.h.b16 %v2848
        %v2922 = vunpack.c.l.b16 %v2849
        %v2923 = vunpack.c.h.b16 %v2849
        %v2924 = vunpack.c.l.b16 %v2850
        %v2925 = vunpack.c.h.b16 %v2850
        %v2926 = vunpack.c.l.b16 %v2851
        %v2927 = vunpack.c.h.b16 %v2851
        %v2928 = vunpack.c.l.b16 %v2852
        %v2929 = vunpack.c.h.b16 %v2852
        %v2930 = vunpack.c.l.b16 %v2853
        %v2931 = vunpack.c.h.b16 %v2853
        %v2932 = vunpack.c.l.b16 %v2854
        %v2933 = vunpack.c.h.b16 %v2854
        %v2934 = vunpack.c.l.b16 %v2855
        %v2935 = vunpack.c.h.b16 %v2855
        %v2936 = vunpack.c.l.b16 %v2856
        %v2937 = vunpack.c.h.b16 %v2856
        %v2938 = vunpack.c.l.b16 %v2857
        %v2939 = vunpack.c.h.b16 %v2857
        %v2940 = vunpack.c.l.b16 %v2858
        %v2941 = vunpack.c.h.b16 %v2858
        %v2942 = vunpack.c.l.b16 %v2859
        %v2943 = vunpack.c.h.b16 %v2859
        %v2944 = vunpack.c.l.b16 %v2860
        %v2945 = vunpack.c.h.b16 %v2860
        %v2946 = vunpack.c.l.b16 %v2861
        %v2947 = vunpack.c.h.b16 %v2861
        %v2948 = vunpack.c.l.b16 %v2862
        %v2949 = vunpack.c.h.b16 %v2862
        %v2950 = vunpack.c.l.b16 %v2863
        %v2951 = vunpack.c.h.b16 %v2863
        %v2952 = vunpack.c.l.b16 %v2864
        %v2953 = vunpack.c.h.b16 %v2864
        %v2954 = vunpack.c.l.b16 %v2865
        %v2955 = vunpack.c.h.b16 %v2865
        %v2956 = vunpack.c.l.b16 %v2866
        %v2957 = vunpack.c.h.b16 %v2866
        %v2958 = vunpack.c.l.b16 %v2867
        %v2959 = vunpack.c.h.b16 %v2867
        %v2960 = vunpack.c.l.b16 %v2868
        %v2961 = vunpack.c.h.b16 %v2868
        %v2962 = vunpack.c.l.b16 %v2869
        %v2963 = vunpack.c.h.b16 %v2869
        %v2964 = vunpack.c.l.b16 %v2870
        %v2965 = vunpack.c.h.b16 %v2870
        %v2966 = vunpack.c.l.b16 %v2871
        %v2967 = vunpack.c.h.b16 %v2871
        %v2968 = vpack.c.b16 %v2906, %v2904
        %v2969 = vpack.c.b16 %v2907, %v2905
        %v2970 = vpack.c.b16 %v2910, %v2908
        %v2971 = vpack.c.b16 %v2911, %v2909
        %v2972 = vpack.c.b16 %v2914, %v2912
        %v2973 = vpack.c.b16 %v2915, %v2913
        %v2974 = vpack.c.b16 %v2918, %v2916
        %v2975 = vpack.c.b16 %v2919, %v2917
        %v2976 = vpack.c.b16 %v2922, %v2920
        %v2977 = vpack.c.b16 %v2923, %v2921
        %v2978 = vpack.c.b16 %v2926, %v2924
        %v2979 = vpack.c.b16 %v2927, %v2925
        %v2980 = vpack.c.b16 %v2930, %v2928
        %v2981 = vpack.c.b16 %v2931, %v2929
        %v2982 = vpack.c.b16 %v2934, %v2932
        %v2983 = vpack.c.b16 %v2935, %v2933
        %v2984 = vpack.c.b16 %v2938, %v2936
        %v2985 = vpack.c.b16 %v2939, %v2937
        %v2986 = vpack.c.b16 %v2942, %v2940
        %v2987 = vpack.c.b16 %v2943, %v2941
        %v2988 = vpack.c.b16 %v2946, %v2944
        %v2989 = vpack.c.b16 %v2947, %v2945
        %v2990 = vpack.c.b16 %v2950, %v2948
        %v2991 = vpack.c.b16 %v2951, %v2949
        %v2992 = vpack.c.b16 %v2954, %v2952
        %v2993 = vpack.c.b16 %v2955, %v2953
        %v2994 = vpack.c.b16 %v2958, %v2956
        %v2995 = vpack.c.b16 %v2959, %v2957
        %v2996 = vpack.c.b16 %v2962, %v2960
        %v2997 = vpack.c.b16 %v2963, %v2961
        %v2998 = vpack.c.b16 %v2966, %v2964
        %v2999 = vpack.c.b16 %v2967, %v2965
        %3032 = vmatprep.subr.bf16.mxu0 %v2983
        %3033 = vmatpush1.bf16.msra.mxu0 %v2982
        %3034 = vmatprep.subr.bf16.mxu0 %v2981
        %3035 = vmatpush1.bf16.msra.mxu0 %v2980
        %3036 = vmatprep.subr.bf16.mxu0 %v2979
        %3037 = vmatpush1.bf16.msra.mxu0 %v2978
        %3038 = vmatprep.subr.bf16.mxu0 %v2977
        %3039 = vmatpush1.bf16.msra.mxu0 %v2976
        %3040 = vmatprep.subr.bf16.mxu0 %v2975
        %3041 = vmatpush1.bf16.msra.mxu0 %v2974
        %3042 = vmatprep.subr.bf16.mxu0 %v2973
        %3043 = vmatpush1.bf16.msra.mxu0 %v2972
        %3044 = vmatprep.subr.bf16.mxu0 %v2971
        %3045 = vmatpush1.bf16.msra.mxu0 %v2970
        %3046 = vmatprep.subr.bf16.mxu0 %v2969
        %3047 = vmatpush1.bf16.msra.mxu0 %v2968
        %3048 = vmatprep.subr.bf16.mxu0 %v2999
        %3049 = vmatpush2.bf16.msra.mxu0 %v2998
        %3050 = vmatprep.subr.bf16.mxu0 %v2997
        %3051 = vmatpush2.bf16.msra.mxu0 %v2996
        %3052 = vmatprep.subr.bf16.mxu0 %v2995
        %3053 = vmatpush2.bf16.msra.mxu0 %v2994
        %3054 = vmatprep.subr.bf16.mxu0 %v2993
        %3055 = vmatpush2.bf16.msra.mxu0 %v2992
        %3056 = vmatprep.subr.bf16.mxu0 %v2991
        %3057 = vmatpush2.bf16.msra.mxu0 %v2990
        %3058 = vmatprep.subr.bf16.mxu0 %v2989
        %3059 = vmatpush2.bf16.msra.mxu0 %v2988
        %3060 = vmatprep.subr.bf16.mxu0 %v2987
        %3061 = vmatpush2.bf16.msra.mxu0 %v2986
        %3062 = vmatprep.subr.bf16.mxu0 %v2985
        %3063 = vmatpush2.bf16.msra.mxu0 %v2984
        %3064 = vmatprep.mubr.bf16.mxu0 %v2838
        %3065 = vmatmul.mubr.bf16.gmra.mxu0 %v2837
        %v3066 = vpop.f32.mrf.mxu0
        %v3067 = vadd.f32 0.0, %v3066
        %v3068 = vpop.f32.mrf.mxu0
        %v3069 = vadd.f32 0.0, %v3068
        %v3070 = vpop.f32.mrf.mxu0
        %v3071 = vadd.f32 0.0, %v3070
        %v3072 = vpop.f32.mrf.mxu0
        %v3073 = vadd.f32 0.0, %v3072
        %3074 = vdwg.mxu0
        %v3075 = vadd.f32 %v2775, %v3067
        %v3076 = vadd.f32 %v2777, %v3069
        %v3077 = vadd.f32 %v2779, %v3071
        %v3078 = vadd.f32 %v2781, %v3073
        %s3079 = scalar_lea.vmem %s4, 24
        %v3080 = vld [vmem:[%s3079] sm:$0xf]
        %v3081 = vld [vmem:[%s3079 + $0x4] sm:$0xf]
        %v3084 = vunpack.c.l.b16 %v3080
        %v3085 = vunpack.c.l.b16 %v3081
        %v3086 = vpack.c.b16 %v3085, %v3084
        %v3088 = vsel %vm2207, %v3086, 0
        %3090 = vmatprep.subr.bf16.mxu0 0
        %3091 = vmatpush1.bf16.msra.mxu0 0
        %3092 = vmatprep.subr.bf16.mxu0 0
        %3093 = vmatpush1.bf16.msra.mxu0 0
        %3094 = vmatprep.subr.bf16.mxu0 0
        %3095 = vmatpush1.bf16.msra.mxu0 0
        %3096 = vmatprep.subr.bf16.mxu0 0
        %3097 = vmatpush1.bf16.msra.mxu0 0
        %3098 = vmatprep.subr.bf16.mxu0 0
        %3099 = vmatpush1.bf16.msra.mxu0 0
        %3100 = vmatprep.subr.bf16.mxu0 0
        %3101 = vmatpush1.bf16.msra.mxu0 0
        %3102 = vmatprep.subr.bf16.mxu0 %v2199
        %3103 = vmatpush1.bf16.msra.mxu0 %v2198
        %3104 = vmatprep.subr.bf16.mxu0 %v2197
        %3105 = vmatpush1.bf16.msra.mxu0 %v2196
        %3106 = vmatprep.subr.bf16.mxu0 0
        %3107 = vmatpush2.bf16.msra.mxu0 0
        %3108 = vmatprep.subr.bf16.mxu0 0
        %3109 = vmatpush2.bf16.msra.mxu0 0
        %3110 = vmatprep.subr.bf16.mxu0 0
        %3111 = vmatpush2.bf16.msra.mxu0 0
        %3112 = vmatprep.subr.bf16.mxu0 0
        %3113 = vmatpush2.bf16.msra.mxu0 0
        %3114 = vmatprep.subr.bf16.mxu0 0
        %3115 = vmatpush2.bf16.msra.mxu0 0
        %3116 = vmatprep.subr.bf16.mxu0 0
        %3117 = vmatpush2.bf16.msra.mxu0 0
        %3118 = vmatprep.subr.bf16.mxu0 0
        %3119 = vmatpush2.bf16.msra.mxu0 0
        %3120 = vmatprep.subr.bf16.mxu0 0
        %3121 = vmatpush2.bf16.msra.mxu0 0
        %3122 = vmatprep.mubr.bf16.mxu0 0
        %3123 = vmatmul.mubr.bf16.gmra.mxu0 %v3088
        %v3124 = vpop.f32.mrf.mxu0
        %v3125 = vadd.f32 0.0, %v3124
        %v3126 = vpop.f32.mrf.mxu0
        %v3127 = vadd.f32 0.0, %v3126
        %v3128 = vpop.f32.mrf.mxu0
        %v3129 = vadd.f32 0.0, %v3128
        %v3130 = vpop.f32.mrf.mxu0
        %v3131 = vadd.f32 0.0, %v3130
        %3132 = vdwg.mxu0
        %v3133 = vpack.c.bf16 %v3129, %v3125
        %v3134 = vpack.c.bf16 %v3131, %v3127
        %s3135 = scalar_lea.vmem %s5, 768
        %v3136 = vld [vmem:[%s3135] sm:$0xff]
        %v3137 = vld [vmem:[%s3135 + $0x8] sm:$0xff]
        %v3138 = vld [vmem:[%s3135 + $0x10] sm:$0xff]
        %v3139 = vld [vmem:[%s3135 + $0x18] sm:$0xff]
        %v3140 = vld [vmem:[%s3135 + $0x20] sm:$0xff]
        %v3141 = vld [vmem:[%s3135 + $0x28] sm:$0xff]
        %v3142 = vld [vmem:[%s3135 + $0x30] sm:$0xff]
        %v3143 = vld [vmem:[%s3135 + $0x38] sm:$0xff]
        %v3144 = vld [vmem:[%s3135 + $0x40] sm:$0xff]
        %v3145 = vld [vmem:[%s3135 + $0x48] sm:$0xff]
        %v3146 = vld [vmem:[%s3135 + $0x50] sm:$0xff]
        %v3147 = vld [vmem:[%s3135 + $0x58] sm:$0xff]
        %v3148 = vld [vmem:[%s3135 + $0x60] sm:$0xff]
        %v3149 = vld [vmem:[%s3135 + $0x68] sm:$0xff]
        %v3150 = vld [vmem:[%s3135 + $0x70] sm:$0xff]
        %v3151 = vld [vmem:[%s3135 + $0x78] sm:$0xff]
        %v3152 = vld [vmem:[%s3135 + $0x80] sm:$0xff]
        %v3153 = vld [vmem:[%s3135 + $0x88] sm:$0xff]
        %v3154 = vld [vmem:[%s3135 + $0x90] sm:$0xff]
        %v3155 = vld [vmem:[%s3135 + $0x98] sm:$0xff]
        %v3156 = vld [vmem:[%s3135 + $0xa0] sm:$0xff]
        %v3157 = vld [vmem:[%s3135 + $0xa8] sm:$0xff]
        %v3158 = vld [vmem:[%s3135 + $0xb0] sm:$0xff]
        %v3159 = vld [vmem:[%s3135 + $0xb8] sm:$0xff]
        %v3160 = vld [vmem:[%s3135 + $0xc0] sm:$0xff]
        %v3161 = vld [vmem:[%s3135 + $0xc8] sm:$0xff]
        %v3162 = vld [vmem:[%s3135 + $0xd0] sm:$0xff]
        %v3163 = vld [vmem:[%s3135 + $0xd8] sm:$0xff]
        %v3164 = vld [vmem:[%s3135 + $0xe0] sm:$0xff]
        %v3165 = vld [vmem:[%s3135 + $0xe8] sm:$0xff]
        %v3166 = vld [vmem:[%s3135 + $0xf0] sm:$0xff]
        %v3167 = vld [vmem:[%s3135 + $0xf8] sm:$0xff]
        %v3200 = vunpack.c.l.b16 %v3136
        %v3201 = vunpack.c.h.b16 %v3136
        %v3202 = vunpack.c.l.b16 %v3137
        %v3203 = vunpack.c.h.b16 %v3137
        %v3204 = vunpack.c.l.b16 %v3138
        %v3205 = vunpack.c.h.b16 %v3138
        %v3206 = vunpack.c.l.b16 %v3139
        %v3207 = vunpack.c.h.b16 %v3139
        %v3208 = vunpack.c.l.b16 %v3140
        %v3209 = vunpack.c.h.b16 %v3140
        %v3210 = vunpack.c.l.b16 %v3141
        %v3211 = vunpack.c.h.b16 %v3141
        %v3212 = vunpack.c.l.b16 %v3142
        %v3213 = vunpack.c.h.b16 %v3142
        %v3214 = vunpack.c.l.b16 %v3143
        %v3215 = vunpack.c.h.b16 %v3143
        %v3216 = vunpack.c.l.b16 %v3144
        %v3217 = vunpack.c.h.b16 %v3144
        %v3218 = vunpack.c.l.b16 %v3145
        %v3219 = vunpack.c.h.b16 %v3145
        %v3220 = vunpack.c.l.b16 %v3146
        %v3221 = vunpack.c.h.b16 %v3146
        %v3222 = vunpack.c.l.b16 %v3147
        %v3223 = vunpack.c.h.b16 %v3147
        %v3224 = vunpack.c.l.b16 %v3148
        %v3225 = vunpack.c.h.b16 %v3148
        %v3226 = vunpack.c.l.b16 %v3149
        %v3227 = vunpack.c.h.b16 %v3149
        %v3228 = vunpack.c.l.b16 %v3150
        %v3229 = vunpack.c.h.b16 %v3150
        %v3230 = vunpack.c.l.b16 %v3151
        %v3231 = vunpack.c.h.b16 %v3151
        %v3232 = vunpack.c.l.b16 %v3152
        %v3233 = vunpack.c.h.b16 %v3152
        %v3234 = vunpack.c.l.b16 %v3153
        %v3235 = vunpack.c.h.b16 %v3153
        %v3236 = vunpack.c.l.b16 %v3154
        %v3237 = vunpack.c.h.b16 %v3154
        %v3238 = vunpack.c.l.b16 %v3155
        %v3239 = vunpack.c.h.b16 %v3155
        %v3240 = vunpack.c.l.b16 %v3156
        %v3241 = vunpack.c.h.b16 %v3156
        %v3242 = vunpack.c.l.b16 %v3157
        %v3243 = vunpack.c.h.b16 %v3157
        %v3244 = vunpack.c.l.b16 %v3158
        %v3245 = vunpack.c.h.b16 %v3158
        %v3246 = vunpack.c.l.b16 %v3159
        %v3247 = vunpack.c.h.b16 %v3159
        %v3248 = vunpack.c.l.b16 %v3160
        %v3249 = vunpack.c.h.b16 %v3160
        %v3250 = vunpack.c.l.b16 %v3161
        %v3251 = vunpack.c.h.b16 %v3161
        %v3252 = vunpack.c.l.b16 %v3162
        %v3253 = vunpack.c.h.b16 %v3162
        %v3254 = vunpack.c.l.b16 %v3163
        %v3255 = vunpack.c.h.b16 %v3163
        %v3256 = vunpack.c.l.b16 %v3164
        %v3257 = vunpack.c.h.b16 %v3164
        %v3258 = vunpack.c.l.b16 %v3165
        %v3259 = vunpack.c.h.b16 %v3165
        %v3260 = vunpack.c.l.b16 %v3166
        %v3261 = vunpack.c.h.b16 %v3166
        %v3262 = vunpack.c.l.b16 %v3167
        %v3263 = vunpack.c.h.b16 %v3167
        %v3264 = vpack.c.b16 %v3202, %v3200
        %v3265 = vpack.c.b16 %v3203, %v3201
        %v3266 = vpack.c.b16 %v3206, %v3204
        %v3267 = vpack.c.b16 %v3207, %v3205
        %v3268 = vpack.c.b16 %v3210, %v3208
        %v3269 = vpack.c.b16 %v3211, %v3209
        %v3270 = vpack.c.b16 %v3214, %v3212
        %v3271 = vpack.c.b16 %v3215, %v3213
        %v3272 = vpack.c.b16 %v3218, %v3216
        %v3273 = vpack.c.b16 %v3219, %v3217
        %v3274 = vpack.c.b16 %v3222, %v3220
        %v3275 = vpack.c.b16 %v3223, %v3221
        %v3276 = vpack.c.b16 %v3226, %v3224
        %v3277 = vpack.c.b16 %v3227, %v3225
        %v3278 = vpack.c.b16 %v3230, %v3228
        %v3279 = vpack.c.b16 %v3231, %v3229
        %v3280 = vpack.c.b16 %v3234, %v3232
        %v3281 = vpack.c.b16 %v3235, %v3233
        %v3282 = vpack.c.b16 %v3238, %v3236
        %v3283 = vpack.c.b16 %v3239, %v3237
        %v3284 = vpack.c.b16 %v3242, %v3240
        %v3285 = vpack.c.b16 %v3243, %v3241
        %v3286 = vpack.c.b16 %v3246, %v3244
        %v3287 = vpack.c.b16 %v3247, %v3245
        %v3288 = vpack.c.b16 %v3250, %v3248
        %v3289 = vpack.c.b16 %v3251, %v3249
        %v3290 = vpack.c.b16 %v3254, %v3252
        %v3291 = vpack.c.b16 %v3255, %v3253
        %v3292 = vpack.c.b16 %v3258, %v3256
        %v3293 = vpack.c.b16 %v3259, %v3257
        %v3294 = vpack.c.b16 %v3262, %v3260
        %v3295 = vpack.c.b16 %v3263, %v3261
        %3328 = vmatprep.subr.bf16.mxu0 %v3279
        %3329 = vmatpush1.bf16.msra.mxu0 %v3278
        %3330 = vmatprep.subr.bf16.mxu0 %v3277
        %3331 = vmatpush1.bf16.msra.mxu0 %v3276
        %3332 = vmatprep.subr.bf16.mxu0 %v3275
        %3333 = vmatpush1.bf16.msra.mxu0 %v3274
        %3334 = vmatprep.subr.bf16.mxu0 %v3273
        %3335 = vmatpush1.bf16.msra.mxu0 %v3272
        %3336 = vmatprep.subr.bf16.mxu0 %v3271
        %3337 = vmatpush1.bf16.msra.mxu0 %v3270
        %3338 = vmatprep.subr.bf16.mxu0 %v3269
        %3339 = vmatpush1.bf16.msra.mxu0 %v3268
        %3340 = vmatprep.subr.bf16.mxu0 %v3267
        %3341 = vmatpush1.bf16.msra.mxu0 %v3266
        %3342 = vmatprep.subr.bf16.mxu0 %v3265
        %3343 = vmatpush1.bf16.msra.mxu0 %v3264
        %3344 = vmatprep.subr.bf16.mxu0 %v3295
        %3345 = vmatpush2.bf16.msra.mxu0 %v3294
        %3346 = vmatprep.subr.bf16.mxu0 %v3293
        %3347 = vmatpush2.bf16.msra.mxu0 %v3292
        %3348 = vmatprep.subr.bf16.mxu0 %v3291
        %3349 = vmatpush2.bf16.msra.mxu0 %v3290
        %3350 = vmatprep.subr.bf16.mxu0 %v3289
        %3351 = vmatpush2.bf16.msra.mxu0 %v3288
        %3352 = vmatprep.subr.bf16.mxu0 %v3287
        %3353 = vmatpush2.bf16.msra.mxu0 %v3286
        %3354 = vmatprep.subr.bf16.mxu0 %v3285
        %3355 = vmatpush2.bf16.msra.mxu0 %v3284
        %3356 = vmatprep.subr.bf16.mxu0 %v3283
        %3357 = vmatpush2.bf16.msra.mxu0 %v3282
        %3358 = vmatprep.subr.bf16.mxu0 %v3281
        %3359 = vmatpush2.bf16.msra.mxu0 %v3280
        %3360 = vmatprep.mubr.bf16.mxu0 %v3134
        %3361 = vmatmul.mubr.bf16.gmra.mxu0 %v3133
        %v3362 = vpop.f32.mrf.mxu0
        %v3363 = vadd.f32 0.0, %v3362
        %v3364 = vpop.f32.mrf.mxu0
        %v3365 = vadd.f32 0.0, %v3364
        %v3366 = vpop.f32.mrf.mxu0
        %v3367 = vadd.f32 0.0, %v3366
        %v3368 = vpop.f32.mrf.mxu0
        %v3369 = vadd.f32 0.0, %v3368
        %3370 = vdwg.mxu0
        %v3371 = vadd.f32 %v3075, %v3363
        %v3372 = vadd.f32 %v3076, %v3365
        %v3373 = vadd.f32 %v3077, %v3367
        %v3374 = vadd.f32 %v3078, %v3369
        %v3375 = vld [vmem:[%s6] sm:$0x3]
        %v3377 = vlaneseq
        %v3378 = vshrl.u32 %v3377, 7
        %v3379 = vsub.s32 0, %v3378
        %v3380 = vrot.slane %v3375, %v3379
        %v3381 = vlaneseq
        %v3382 = vshrl.u32 %v3381, 7
        %v3383 = vsub.s32 1, %v3382
        %v3384 = vrot.slane %v3375, %v3383
        %v3387 = vadd.f32 %v3371, %v3380
        %v3388 = vadd.f32 %v3372, %v3384
        %v3389 = vadd.f32 %v3373, %v3380
        %v3390 = vadd.f32 %v3374, %v3384
        %vm3391 = vcmp.ge.f32.partialorder %v3387, 0.0
        %vm3392 = vcmp.ge.f32.partialorder %v3388, 0.0
        %vm3393 = vcmp.ge.f32.partialorder %v3389, 0.0
        %vm3394 = vcmp.ge.f32.partialorder %v3390, 0.0
        %v3395 = vmul.f32 %v3387, 0.2
        %v3396 = vmul.f32 %v3388, 0.2
        %v3397 = vmul.f32 %v3389, 0.2
        %v3398 = vmul.f32 %v3390, 0.2
        %v3399 = vsel %vm3391, %v3387, %v3395
        %v3400 = vsel %vm3392, %v3388, %v3396
        %v3401 = vsel %vm3393, %v3389, %v3397
        %v3402 = vsel %vm3394, %v3390, %v3398
        %v3403 = vpack.c.bf16 %v3401, %v3399
        %v3404 = vpack.c.bf16 %v3402, %v3400
        %v3405 = vld [vmem:[%s7] sm:$0xf]
        %vm3406 = vcmask 130048
        %v3408 = vsel %vm3406, %v3405, 0
        %3410 = vmatprep.subr.bf16.mxu0 0
        %3411 = vmatpush1.bf16.msra.mxu0 0
        %3412 = vmatprep.subr.bf16.mxu0 0
        %3413 = vmatpush1.bf16.msra.mxu0 0
        %3414 = vmatprep.subr.bf16.mxu0 0
        %3415 = vmatpush1.bf16.msra.mxu0 0
        %3416 = vmatprep.subr.bf16.mxu0 0
        %3417 = vmatpush1.bf16.msra.mxu0 0
        %3418 = vmatprep.subr.bf16.mxu0 0
        %3419 = vmatpush1.bf16.msra.mxu0 0
        %3420 = vmatprep.subr.bf16.mxu0 0
        %3421 = vmatpush1.bf16.msra.mxu0 0
        %3422 = vmatprep.subr.bf16.mxu0 0
        %3423 = vmatpush1.bf16.msra.mxu0 0
        %3424 = vmatprep.subr.bf16.mxu0 %v3404
        %3425 = vmatpush1.bf16.msra.mxu0 %v3403
        %3426 = vmatprep.subr.bf16.mxu0 0
        %3427 = vmatpush2.bf16.msra.mxu0 0
        %3428 = vmatprep.subr.bf16.mxu0 0
        %3429 = vmatpush2.bf16.msra.mxu0 0
        %3430 = vmatprep.subr.bf16.mxu0 0
        %3431 = vmatpush2.bf16.msra.mxu0 0
        %3432 = vmatprep.subr.bf16.mxu0 0
        %3433 = vmatpush2.bf16.msra.mxu0 0
        %3434 = vmatprep.subr.bf16.mxu0 0
        %3435 = vmatpush2.bf16.msra.mxu0 0
        %3436 = vmatprep.subr.bf16.mxu0 0
        %3437 = vmatpush2.bf16.msra.mxu0 0
        %3438 = vmatprep.subr.bf16.mxu0 0
        %3439 = vmatpush2.bf16.msra.mxu0 0
        %3440 = vmatprep.subr.bf16.mxu0 0
        %3441 = vmatpush2.bf16.msra.mxu0 0
        %3442 = vmatprep.mubr.bf16.mxu0 0
        %3443 = vmatmul.mubr.bf16.gmra.mxu0 %v3408
        %v3444 = vpop.f32.mrf.mxu0
        %v3445 = vadd.f32 0.0, %v3444
        %v3446 = vpop.f32.mrf.mxu0
        %v3447 = vadd.f32 0.0, %v3446
        %v3448 = vpop.f32.mrf.mxu0
        %v3449 = vpop.f32.mrf.mxu0
        %3450 = vdwg.mxu0
        %v3451 = vpack.c.bf16 %v3445, %v3445
        %v3452 = vpack.c.bf16 %v3447, %v3447
        %v3453 = vld [vmem:[#allocation3] sm:$0xff]
        %v3454 = vld [vmem:[#allocation3 + $0x8] sm:$0xff]
        %v3455 = vld [vmem:[#allocation3 + $0x10] sm:$0xff]
        %v3456 = vld [vmem:[#allocation3 + $0x18] sm:$0xff]
        %v3457 = vld [vmem:[#allocation3 + $0x20] sm:$0xff]
        %v3458 = vld [vmem:[#allocation3 + $0x28] sm:$0xff]
        %v3459 = vld [vmem:[#allocation3 + $0x30] sm:$0xff]
        %v3460 = vld [vmem:[#allocation3 + $0x38] sm:$0xff]
        %v3461 = vld [vmem:[#allocation3 + $0x40] sm:$0xff]
        %v3462 = vld [vmem:[#allocation3 + $0x48] sm:$0xff]
        %v3463 = vld [vmem:[#allocation3 + $0x50] sm:$0xff]
        %v3464 = vld [vmem:[#allocation3 + $0x58] sm:$0xff]
        %v3465 = vld [vmem:[#allocation3 + $0x60] sm:$0xff]
        %v3466 = vld [vmem:[#allocation3 + $0x68] sm:$0xff]
        %v3467 = vld [vmem:[#allocation3 + $0x70] sm:$0xff]
        %v3468 = vld [vmem:[#allocation3 + $0x78] sm:$0xff]
        %v3469 = vld [vmem:[#allocation3 + $0x80] sm:$0xff]
        %v3470 = vld [vmem:[#allocation3 + $0x88] sm:$0xff]
        %v3471 = vld [vmem:[#allocation3 + $0x90] sm:$0xff]
        %v3472 = vld [vmem:[#allocation3 + $0x98] sm:$0xff]
        %v3473 = vld [vmem:[#allocation3 + $0xa0] sm:$0xff]
        %v3474 = vld [vmem:[#allocation3 + $0xa8] sm:$0xff]
        %v3475 = vld [vmem:[#allocation3 + $0xb0] sm:$0xff]
        %v3476 = vld [vmem:[#allocation3 + $0xb8] sm:$0xff]
        %v3477 = vld [vmem:[#allocation3 + $0xc0] sm:$0xff]
        %v3478 = vld [vmem:[#allocation3 + $0xc8] sm:$0xff]
        %v3479 = vld [vmem:[#allocation3 + $0xd0] sm:$0xff]
        %v3480 = vld [vmem:[#allocation3 + $0xd8] sm:$0xff]
        %v3481 = vld [vmem:[#allocation3 + $0xe0] sm:$0xff]
        %v3482 = vld [vmem:[#allocation3 + $0xe8] sm:$0xff]
        %v3483 = vld [vmem:[#allocation3 + $0xf0] sm:$0xff]
        %v3484 = vld [vmem:[#allocation3 + $0xf8] sm:$0xff]
        %s3485 = scalar_lea.vmem %s7, 4
        %v3486 = vld [vmem:[%s3485] sm:$0xf]
        %v3488 = vsel %vm3406, %v3486, 0
        %3490 = vmatprep.subr.bf16.mxu0 0
        %3491 = vmatpush1.bf16.msra.mxu0 0
        %3492 = vmatprep.subr.bf16.mxu0 0
        %3493 = vmatpush1.bf16.msra.mxu0 0
        %3494 = vmatprep.subr.bf16.mxu0 0
        %3495 = vmatpush1.bf16.msra.mxu0 0
        %3496 = vmatprep.subr.bf16.mxu0 0
        %3497 = vmatpush1.bf16.msra.mxu0 0
        %3498 = vmatprep.subr.bf16.mxu0 0
        %3499 = vmatpush1.bf16.msra.mxu0 0
        %3500 = vmatprep.subr.bf16.mxu0 0
        %3501 = vmatpush1.bf16.msra.mxu0 0
        %3502 = vmatprep.subr.bf16.mxu0 0
        %3503 = vmatpush1.bf16.msra.mxu0 0
        %3504 = vmatprep.subr.bf16.mxu0 %v3404
        %3505 = vmatpush1.bf16.msra.mxu0 %v3403
        %3506 = vmatprep.subr.bf16.mxu0 0
        %3507 = vmatpush2.bf16.msra.mxu0 0
        %3508 = vmatprep.subr.bf16.mxu0 0
        %3509 = vmatpush2.bf16.msra.mxu0 0
        %3510 = vmatprep.subr.bf16.mxu0 0
        %3511 = vmatpush2.bf16.msra.mxu0 0
        %3512 = vmatprep.subr.bf16.mxu0 0
        %3513 = vmatpush2.bf16.msra.mxu0 0
        %3514 = vmatprep.subr.bf16.mxu0 0
        %3515 = vmatpush2.bf16.msra.mxu0 0
        %3516 = vmatprep.subr.bf16.mxu0 0
        %3517 = vmatpush2.bf16.msra.mxu0 0
        %3518 = vmatprep.subr.bf16.mxu0 0
        %3519 = vmatpush2.bf16.msra.mxu0 0
        %3520 = vmatprep.subr.bf16.mxu0 0
        %3521 = vmatpush2.bf16.msra.mxu0 0
        %3522 = vmatprep.mubr.bf16.mxu0 0
        %3523 = vmatmul.mubr.bf16.gmra.mxu0 %v3488
        %v3524 = vpop.f32.mrf.mxu0
        %v3525 = vadd.f32 0.0, %v3524
        %v3526 = vpop.f32.mrf.mxu0
        %v3527 = vadd.f32 0.0, %v3526
        %v3528 = vpop.f32.mrf.mxu0
        %v3529 = vpop.f32.mrf.mxu0
        %3530 = vdwg.mxu0
        %v3531 = vpack.c.bf16 %v3525, %v3525
        %v3532 = vpack.c.bf16 %v3527, %v3527
        %s3533 = scalar_lea.vmem [#allocation3], 256
        %v3534 = vld [vmem:[%s3533] sm:$0xff]
        %v3535 = vld [vmem:[%s3533 + $0x8] sm:$0xff]
        %v3536 = vld [vmem:[%s3533 + $0x10] sm:$0xff]
        %v3537 = vld [vmem:[%s3533 + $0x18] sm:$0xff]
        %v3538 = vld [vmem:[%s3533 + $0x20] sm:$0xff]
        %v3539 = vld [vmem:[%s3533 + $0x28] sm:$0xff]
        %v3540 = vld [vmem:[%s3533 + $0x30] sm:$0xff]
        %v3541 = vld [vmem:[%s3533 + $0x38] sm:$0xff]
        %v3542 = vld [vmem:[%s3533 + $0x40] sm:$0xff]
        %v3543 = vld [vmem:[%s3533 + $0x48] sm:$0xff]
        %v3544 = vld [vmem:[%s3533 + $0x50] sm:$0xff]
        %v3545 = vld [vmem:[%s3533 + $0x58] sm:$0xff]
        %v3546 = vld [vmem:[%s3533 + $0x60] sm:$0xff]
        %v3547 = vld [vmem:[%s3533 + $0x68] sm:$0xff]
        %v3548 = vld [vmem:[%s3533 + $0x70] sm:$0xff]
        %v3549 = vld [vmem:[%s3533 + $0x78] sm:$0xff]
        %v3550 = vld [vmem:[%s3533 + $0x80] sm:$0xff]
        %v3551 = vld [vmem:[%s3533 + $0x88] sm:$0xff]
        %v3552 = vld [vmem:[%s3533 + $0x90] sm:$0xff]
        %v3553 = vld [vmem:[%s3533 + $0x98] sm:$0xff]
        %v3554 = vld [vmem:[%s3533 + $0xa0] sm:$0xff]
        %v3555 = vld [vmem:[%s3533 + $0xa8] sm:$0xff]
        %v3556 = vld [vmem:[%s3533 + $0xb0] sm:$0xff]
        %v3557 = vld [vmem:[%s3533 + $0xb8] sm:$0xff]
        %v3558 = vld [vmem:[%s3533 + $0xc0] sm:$0xff]
        %v3559 = vld [vmem:[%s3533 + $0xc8] sm:$0xff]
        %v3560 = vld [vmem:[%s3533 + $0xd0] sm:$0xff]
        %v3561 = vld [vmem:[%s3533 + $0xd8] sm:$0xff]
        %v3562 = vld [vmem:[%s3533 + $0xe0] sm:$0xff]
        %v3563 = vld [vmem:[%s3533 + $0xe8] sm:$0xff]
        %v3564 = vld [vmem:[%s3533 + $0xf0] sm:$0xff]
        %v3565 = vld [vmem:[%s3533 + $0xf8] sm:$0xff]
        %v3598 = vunpack.c.l.b16 %v3534
        %v3599 = vunpack.c.h.b16 %v3534
        %v3600 = vunpack.c.l.b16 %v3535
        %v3601 = vunpack.c.h.b16 %v3535
        %v3602 = vunpack.c.l.b16 %v3536
        %v3603 = vunpack.c.h.b16 %v3536
        %v3604 = vunpack.c.l.b16 %v3537
        %v3605 = vunpack.c.h.b16 %v3537
        %v3606 = vunpack.c.l.b16 %v3538
        %v3607 = vunpack.c.h.b16 %v3538
        %v3608 = vunpack.c.l.b16 %v3539
        %v3609 = vunpack.c.h.b16 %v3539
        %v3610 = vunpack.c.l.b16 %v3540
        %v3611 = vunpack.c.h.b16 %v3540
        %v3612 = vunpack.c.l.b16 %v3541
        %v3613 = vunpack.c.h.b16 %v3541
        %v3614 = vunpack.c.l.b16 %v3542
        %v3615 = vunpack.c.h.b16 %v3542
        %v3616 = vunpack.c.l.b16 %v3543
        %v3617 = vunpack.c.h.b16 %v3543
        %v3618 = vunpack.c.l.b16 %v3544
        %v3619 = vunpack.c.h.b16 %v3544
        %v3620 = vunpack.c.l.b16 %v3545
        %v3621 = vunpack.c.h.b16 %v3545
        %v3622 = vunpack.c.l.b16 %v3546
        %v3623 = vunpack.c.h.b16 %v3546
        %v3624 = vunpack.c.l.b16 %v3547
        %v3625 = vunpack.c.h.b16 %v3547
        %v3626 = vunpack.c.l.b16 %v3548
        %v3627 = vunpack.c.h.b16 %v3548
        %v3628 = vunpack.c.l.b16 %v3549
        %v3629 = vunpack.c.h.b16 %v3549
        %v3630 = vunpack.c.l.b16 %v3550
        %v3631 = vunpack.c.h.b16 %v3550
        %v3632 = vunpack.c.l.b16 %v3551
        %v3633 = vunpack.c.h.b16 %v3551
        %v3634 = vunpack.c.l.b16 %v3552
        %v3635 = vunpack.c.h.b16 %v3552
        %v3636 = vunpack.c.l.b16 %v3553
        %v3637 = vunpack.c.h.b16 %v3553
        %v3638 = vunpack.c.l.b16 %v3554
        %v3639 = vunpack.c.h.b16 %v3554
        %v3640 = vunpack.c.l.b16 %v3555
        %v3641 = vunpack.c.h.b16 %v3555
        %v3642 = vunpack.c.l.b16 %v3556
        %v3643 = vunpack.c.h.b16 %v3556
        %v3644 = vunpack.c.l.b16 %v3557
        %v3645 = vunpack.c.h.b16 %v3557
        %v3646 = vunpack.c.l.b16 %v3558
        %v3647 = vunpack.c.h.b16 %v3558
        %v3648 = vunpack.c.l.b16 %v3559
        %v3649 = vunpack.c.h.b16 %v3559
        %v3650 = vunpack.c.l.b16 %v3560
        %v3651 = vunpack.c.h.b16 %v3560
        %v3652 = vunpack.c.l.b16 %v3561
        %v3653 = vunpack.c.h.b16 %v3561
        %v3654 = vunpack.c.l.b16 %v3562
        %v3655 = vunpack.c.h.b16 %v3562
        %v3656 = vunpack.c.l.b16 %v3563
        %v3657 = vunpack.c.h.b16 %v3563
        %v3658 = vunpack.c.l.b16 %v3564
        %v3659 = vunpack.c.h.b16 %v3564
        %v3660 = vunpack.c.l.b16 %v3565
        %v3661 = vunpack.c.h.b16 %v3565
        %v3662 = vpack.c.b16 %v3600, %v3598
        %v3663 = vpack.c.b16 %v3601, %v3599
        %v3664 = vpack.c.b16 %v3604, %v3602
        %v3665 = vpack.c.b16 %v3605, %v3603
        %v3666 = vpack.c.b16 %v3608, %v3606
        %v3667 = vpack.c.b16 %v3609, %v3607
        %v3668 = vpack.c.b16 %v3612, %v3610
        %v3669 = vpack.c.b16 %v3613, %v3611
        %v3670 = vpack.c.b16 %v3616, %v3614
        %v3671 = vpack.c.b16 %v3617, %v3615
        %v3672 = vpack.c.b16 %v3620, %v3618
        %v3673 = vpack.c.b16 %v3621, %v3619
        %v3674 = vpack.c.b16 %v3624, %v3622
        %v3675 = vpack.c.b16 %v3625, %v3623
        %v3676 = vpack.c.b16 %v3628, %v3626
        %v3677 = vpack.c.b16 %v3629, %v3627
        %v3678 = vpack.c.b16 %v3632, %v3630
        %v3679 = vpack.c.b16 %v3633, %v3631
        %v3680 = vpack.c.b16 %v3636, %v3634
        %v3681 = vpack.c.b16 %v3637, %v3635
        %v3682 = vpack.c.b16 %v3640, %v3638
        %v3683 = vpack.c.b16 %v3641, %v3639
        %v3684 = vpack.c.b16 %v3644, %v3642
        %v3685 = vpack.c.b16 %v3645, %v3643
        %v3686 = vpack.c.b16 %v3648, %v3646
        %v3687 = vpack.c.b16 %v3649, %v3647
        %v3688 = vpack.c.b16 %v3652, %v3650
        %v3689 = vpack.c.b16 %v3653, %v3651
        %v3690 = vpack.c.b16 %v3656, %v3654
        %v3691 = vpack.c.b16 %v3657, %v3655
        %v3692 = vpack.c.b16 %v3660, %v3658
        %v3693 = vpack.c.b16 %v3661, %v3659
        %3726 = vmatprep.subr.bf16.mxu0 %v3677
        %3727 = vmatpush1.bf16.msra.mxu0 %v3676
        %3728 = vmatprep.subr.bf16.mxu0 %v3675
        %3729 = vmatpush1.bf16.msra.mxu0 %v3674
        %3730 = vmatprep.subr.bf16.mxu0 %v3673
        %3731 = vmatpush1.bf16.msra.mxu0 %v3672
        %3732 = vmatprep.subr.bf16.mxu0 %v3671
        %3733 = vmatpush1.bf16.msra.mxu0 %v3670
        %3734 = vmatprep.subr.bf16.mxu0 %v3669
        %3735 = vmatpush1.bf16.msra.mxu0 %v3668
        %3736 = vmatprep.subr.bf16.mxu0 %v3667
        %3737 = vmatpush1.bf16.msra.mxu0 %v3666
        %3738 = vmatprep.subr.bf16.mxu0 %v3665
        %3739 = vmatpush1.bf16.msra.mxu0 %v3664
        %3740 = vmatprep.subr.bf16.mxu0 %v3663
        %3741 = vmatpush1.bf16.msra.mxu0 %v3662
        %3742 = vmatprep.subr.bf16.mxu0 %v3693
        %3743 = vmatpush2.bf16.msra.mxu0 %v3692
        %3744 = vmatprep.subr.bf16.mxu0 %v3691
        %3745 = vmatpush2.bf16.msra.mxu0 %v3690
        %3746 = vmatprep.subr.bf16.mxu0 %v3689
        %3747 = vmatpush2.bf16.msra.mxu0 %v3688
        %3748 = vmatprep.subr.bf16.mxu0 %v3687
        %3749 = vmatpush2.bf16.msra.mxu0 %v3686
        %3750 = vmatprep.subr.bf16.mxu0 %v3685
        %3751 = vmatpush2.bf16.msra.mxu0 %v3684
        %3752 = vmatprep.subr.bf16.mxu0 %v3683
        %3753 = vmatpush2.bf16.msra.mxu0 %v3682
        %3754 = vmatprep.subr.bf16.mxu0 %v3681
        %3755 = vmatpush2.bf16.msra.mxu0 %v3680
        %3756 = vmatprep.subr.bf16.mxu0 %v3679
        %3757 = vmatpush2.bf16.msra.mxu0 %v3678
        %3758 = vmatprep.mubr.bf16.mxu0 %v3532
        %3759 = vmatmul.mubr.bf16.gmra.mxu0 %v3531
        %v3760 = vpop.f32.mrf.mxu0
        %v3761 = vadd.f32 0.0, %v3760
        %v3762 = vpop.f32.mrf.mxu0
        %v3763 = vadd.f32 0.0, %v3762
        %v3764 = vpop.f32.mrf.mxu0
        %v3765 = vpop.f32.mrf.mxu0
        %3766 = vdwg.mxu0
        %v3799 = vunpack.c.l.b16 %v3453
        %v3800 = vunpack.c.h.b16 %v3453
        %v3801 = vunpack.c.l.b16 %v3454
        %v3802 = vunpack.c.h.b16 %v3454
        %v3803 = vunpack.c.l.b16 %v3455
        %v3804 = vunpack.c.h.b16 %v3455
        %v3805 = vunpack.c.l.b16 %v3456
        %v3806 = vunpack.c.h.b16 %v3456
        %v3807 = vunpack.c.l.b16 %v3457
        %v3808 = vunpack.c.h.b16 %v3457
        %v3809 = vunpack.c.l.b16 %v3458
        %v3810 = vunpack.c.h.b16 %v3458
        %v3811 = vunpack.c.l.b16 %v3459
        %v3812 = vunpack.c.h.b16 %v3459
        %v3813 = vunpack.c.l.b16 %v3460
        %v3814 = vunpack.c.h.b16 %v3460
        %v3815 = vunpack.c.l.b16 %v3461
        %v3816 = vunpack.c.h.b16 %v3461
        %v3817 = vunpack.c.l.b16 %v3462
        %v3818 = vunpack.c.h.b16 %v3462
        %v3819 = vunpack.c.l.b16 %v3463
        %v3820 = vunpack.c.h.b16 %v3463
        %v3821 = vunpack.c.l.b16 %v3464
        %v3822 = vunpack.c.h.b16 %v3464
        %v3823 = vunpack.c.l.b16 %v3465
        %v3824 = vunpack.c.h.b16 %v3465
        %v3825 = vunpack.c.l.b16 %v3466
        %v3826 = vunpack.c.h.b16 %v3466
        %v3827 = vunpack.c.l.b16 %v3467
        %v3828 = vunpack.c.h.b16 %v3467
        %v3829 = vunpack.c.l.b16 %v3468
        %v3830 = vunpack.c.h.b16 %v3468
        %v3831 = vunpack.c.l.b16 %v3469
        %v3832 = vunpack.c.h.b16 %v3469
        %v3833 = vunpack.c.l.b16 %v3470
        %v3834 = vunpack.c.h.b16 %v3470
        %v3835 = vunpack.c.l.b16 %v3471
        %v3836 = vunpack.c.h.b16 %v3471
        %v3837 = vunpack.c.l.b16 %v3472
        %v3838 = vunpack.c.h.b16 %v3472
        %v3839 = vunpack.c.l.b16 %v3473
        %v3840 = vunpack.c.h.b16 %v3473
        %v3841 = vunpack.c.l.b16 %v3474
        %v3842 = vunpack.c.h.b16 %v3474
        %v3843 = vunpack.c.l.b16 %v3475
        %v3844 = vunpack.c.h.b16 %v3475
        %v3845 = vunpack.c.l.b16 %v3476
        %v3846 = vunpack.c.h.b16 %v3476
        %v3847 = vunpack.c.l.b16 %v3477
        %v3848 = vunpack.c.h.b16 %v3477
        %v3849 = vunpack.c.l.b16 %v3478
        %v3850 = vunpack.c.h.b16 %v3478
        %v3851 = vunpack.c.l.b16 %v3479
        %v3852 = vunpack.c.h.b16 %v3479
        %v3853 = vunpack.c.l.b16 %v3480
        %v3854 = vunpack.c.h.b16 %v3480
        %v3855 = vunpack.c.l.b16 %v3481
        %v3856 = vunpack.c.h.b16 %v3481
        %v3857 = vunpack.c.l.b16 %v3482
        %v3858 = vunpack.c.h.b16 %v3482
        %v3859 = vunpack.c.l.b16 %v3483
        %v3860 = vunpack.c.h.b16 %v3483
        %v3861 = vunpack.c.l.b16 %v3484
        %v3862 = vunpack.c.h.b16 %v3484
        %v3863 = vpack.c.b16 %v3801, %v3799
        %v3864 = vpack.c.b16 %v3802, %v3800
        %v3865 = vpack.c.b16 %v3805, %v3803
        %v3866 = vpack.c.b16 %v3806, %v3804
        %v3867 = vpack.c.b16 %v3809, %v3807
        %v3868 = vpack.c.b16 %v3810, %v3808
        %v3869 = vpack.c.b16 %v3813, %v3811
        %v3870 = vpack.c.b16 %v3814, %v3812
        %v3871 = vpack.c.b16 %v3817, %v3815
        %v3872 = vpack.c.b16 %v3818, %v3816
        %v3873 = vpack.c.b16 %v3821, %v3819
        %v3874 = vpack.c.b16 %v3822, %v3820
        %v3875 = vpack.c.b16 %v3825, %v3823
        %v3876 = vpack.c.b16 %v3826, %v3824
        %v3877 = vpack.c.b16 %v3829, %v3827
        %v3878 = vpack.c.b16 %v3830, %v3828
        %v3879 = vpack.c.b16 %v3833, %v3831
        %v3880 = vpack.c.b16 %v3834, %v3832
        %v3881 = vpack.c.b16 %v3837, %v3835
        %v3882 = vpack.c.b16 %v3838, %v3836
        %v3883 = vpack.c.b16 %v3841, %v3839
        %v3884 = vpack.c.b16 %v3842, %v3840
        %v3885 = vpack.c.b16 %v3845, %v3843
        %v3886 = vpack.c.b16 %v3846, %v3844
        %v3887 = vpack.c.b16 %v3849, %v3847
        %v3888 = vpack.c.b16 %v3850, %v3848
        %v3889 = vpack.c.b16 %v3853, %v3851
        %v3890 = vpack.c.b16 %v3854, %v3852
        %v3891 = vpack.c.b16 %v3857, %v3855
        %v3892 = vpack.c.b16 %v3858, %v3856
        %v3893 = vpack.c.b16 %v3861, %v3859
        %v3894 = vpack.c.b16 %v3862, %v3860
        %3927 = vmatprep.subr.bf16.mxu0 %v3878
        %3928 = vmatpush1.bf16.msra.mxu0 %v3877
        %3929 = vmatprep.subr.bf16.mxu0 %v3876
        %3930 = vmatpush1.bf16.msra.mxu0 %v3875
        %3931 = vmatprep.subr.bf16.mxu0 %v3874
        %3932 = vmatpush1.bf16.msra.mxu0 %v3873
        %3933 = vmatprep.subr.bf16.mxu0 %v3872
        %3934 = vmatpush1.bf16.msra.mxu0 %v3871
        %3935 = vmatprep.subr.bf16.mxu0 %v3870
        %3936 = vmatpush1.bf16.msra.mxu0 %v3869
        %3937 = vmatprep.subr.bf16.mxu0 %v3868
        %3938 = vmatpush1.bf16.msra.mxu0 %v3867
        %3939 = vmatprep.subr.bf16.mxu0 %v3866
        %3940 = vmatpush1.bf16.msra.mxu0 %v3865
        %3941 = vmatprep.subr.bf16.mxu0 %v3864
        %3942 = vmatpush1.bf16.msra.mxu0 %v3863
        %3943 = vmatprep.subr.bf16.mxu0 %v3894
        %3944 = vmatpush2.bf16.msra.mxu0 %v3893
        %3945 = vmatprep.subr.bf16.mxu0 %v3892
        %3946 = vmatpush2.bf16.msra.mxu0 %v3891
        %3947 = vmatprep.subr.bf16.mxu0 %v3890
        %3948 = vmatpush2.bf16.msra.mxu0 %v3889
        %3949 = vmatprep.subr.bf16.mxu0 %v3888
        %3950 = vmatpush2.bf16.msra.mxu0 %v3887
        %3951 = vmatprep.subr.bf16.mxu0 %v3886
        %3952 = vmatpush2.bf16.msra.mxu0 %v3885
        %3953 = vmatprep.subr.bf16.mxu0 %v3884
        %3954 = vmatpush2.bf16.msra.mxu0 %v3883
        %3955 = vmatprep.subr.bf16.mxu0 %v3882
        %3956 = vmatpush2.bf16.msra.mxu0 %v3881
        %3957 = vmatprep.subr.bf16.mxu0 %v3880
        %3958 = vmatpush2.bf16.msra.mxu0 %v3879
        %3959 = vmatprep.mubr.bf16.mxu0 %v3452
        %3960 = vmatmul.mubr.bf16.gmra.mxu0 %v3451
        %v3961 = vpop.f32.mrf.mxu0
        %v3962 = vadd.f32 %v3761, %v3961
        %v3963 = vpop.f32.mrf.mxu0
        %v3964 = vadd.f32 %v3763, %v3963
        %v3965 = vpop.f32.mrf.mxu0
        %v3966 = vpop.f32.mrf.mxu0
        %3967 = vdwg.mxu0
        %s3968 = scalar_lea.vmem %s7, 8
        %v3969 = vld [vmem:[%s3968] sm:$0xf]
        %v3971 = vsel %vm3406, %v3969, 0
        %3973 = vmatprep.subr.bf16.mxu0 0
        %3974 = vmatpush1.bf16.msra.mxu0 0
        %3975 = vmatprep.subr.bf16.mxu0 0
        %3976 = vmatpush1.bf16.msra.mxu0 0
        %3977 = vmatprep.subr.bf16.mxu0 0
        %3978 = vmatpush1.bf16.msra.mxu0 0
        %3979 = vmatprep.subr.bf16.mxu0 0
        %3980 = vmatpush1.bf16.msra.mxu0 0
        %3981 = vmatprep.subr.bf16.mxu0 0
        %3982 = vmatpush1.bf16.msra.mxu0 0
        %3983 = vmatprep.subr.bf16.mxu0 0
        %3984 = vmatpush1.bf16.msra.mxu0 0
        %3985 = vmatprep.subr.bf16.mxu0 0
        %3986 = vmatpush1.bf16.msra.mxu0 0
        %3987 = vmatprep.subr.bf16.mxu0 %v3404
        %3988 = vmatpush1.bf16.msra.mxu0 %v3403
        %3989 = vmatprep.subr.bf16.mxu0 0
        %3990 = vmatpush2.bf16.msra.mxu0 0
        %3991 = vmatprep.subr.bf16.mxu0 0
        %3992 = vmatpush2.bf16.msra.mxu0 0
        %3993 = vmatprep.subr.bf16.mxu0 0
        %3994 = vmatpush2.bf16.msra.mxu0 0
        %3995 = vmatprep.subr.bf16.mxu0 0
        %3996 = vmatpush2.bf16.msra.mxu0 0
        %3997 = vmatprep.subr.bf16.mxu0 0
        %3998 = vmatpush2.bf16.msra.mxu0 0
        %3999 = vmatprep.subr.bf16.mxu0 0
        %4000 = vmatpush2.bf16.msra.mxu0 0
        %4001 = vmatprep.subr.bf16.mxu0 0
        %4002 = vmatpush2.bf16.msra.mxu0 0
        %4003 = vmatprep.subr.bf16.mxu0 0
        %4004 = vmatpush2.bf16.msra.mxu0 0
        %4005 = vmatprep.mubr.bf16.mxu0 0
        %4006 = vmatmul.mubr.bf16.gmra.mxu0 %v3971
        %v4007 = vpop.f32.mrf.mxu0
        %v4008 = vadd.f32 0.0, %v4007
        %v4009 = vpop.f32.mrf.mxu0
        %v4010 = vadd.f32 0.0, %v4009
        %v4011 = vpop.f32.mrf.mxu0
        %v4012 = vpop.f32.mrf.mxu0
        %4013 = vdwg.mxu0
        %v4014 = vpack.c.bf16 %v4008, %v4008
        %v4015 = vpack.c.bf16 %v4010, %v4010
        %s4016 = scalar_lea.vmem [#allocation3], 512
        %v4017 = vld [vmem:[%s4016] sm:$0xff]
        %v4018 = vld [vmem:[%s4016 + $0x8] sm:$0xff]
        %v4019 = vld [vmem:[%s4016 + $0x10] sm:$0xff]
        %v4020 = vld [vmem:[%s4016 + $0x18] sm:$0xff]
        %v4021 = vld [vmem:[%s4016 + $0x20] sm:$0xff]
        %v4022 = vld [vmem:[%s4016 + $0x28] sm:$0xff]
        %v4023 = vld [vmem:[%s4016 + $0x30] sm:$0xff]
        %v4024 = vld [vmem:[%s4016 + $0x38] sm:$0xff]
        %v4025 = vld [vmem:[%s4016 + $0x40] sm:$0xff]
        %v4026 = vld [vmem:[%s4016 + $0x48] sm:$0xff]
        %v4027 = vld [vmem:[%s4016 + $0x50] sm:$0xff]
        %v4028 = vld [vmem:[%s4016 + $0x58] sm:$0xff]
        %v4029 = vld [vmem:[%s4016 + $0x60] sm:$0xff]
        %v4030 = vld [vmem:[%s4016 + $0x68] sm:$0xff]
        %v4031 = vld [vmem:[%s4016 + $0x70] sm:$0xff]
        %v4032 = vld [vmem:[%s4016 + $0x78] sm:$0xff]
        %v4033 = vld [vmem:[%s4016 + $0x80] sm:$0xff]
        %v4034 = vld [vmem:[%s4016 + $0x88] sm:$0xff]
        %v4035 = vld [vmem:[%s4016 + $0x90] sm:$0xff]
        %v4036 = vld [vmem:[%s4016 + $0x98] sm:$0xff]
        %v4037 = vld [vmem:[%s4016 + $0xa0] sm:$0xff]
        %v4038 = vld [vmem:[%s4016 + $0xa8] sm:$0xff]
        %v4039 = vld [vmem:[%s4016 + $0xb0] sm:$0xff]
        %v4040 = vld [vmem:[%s4016 + $0xb8] sm:$0xff]
        %v4041 = vld [vmem:[%s4016 + $0xc0] sm:$0xff]
        %v4042 = vld [vmem:[%s4016 + $0xc8] sm:$0xff]
        %v4043 = vld [vmem:[%s4016 + $0xd0] sm:$0xff]
        %v4044 = vld [vmem:[%s4016 + $0xd8] sm:$0xff]
        %v4045 = vld [vmem:[%s4016 + $0xe0] sm:$0xff]
        %v4046 = vld [vmem:[%s4016 + $0xe8] sm:$0xff]
        %v4047 = vld [vmem:[%s4016 + $0xf0] sm:$0xff]
        %v4048 = vld [vmem:[%s4016 + $0xf8] sm:$0xff]
        %v4081 = vunpack.c.l.b16 %v4017
        %v4082 = vunpack.c.h.b16 %v4017
        %v4083 = vunpack.c.l.b16 %v4018
        %v4084 = vunpack.c.h.b16 %v4018
        %v4085 = vunpack.c.l.b16 %v4019
        %v4086 = vunpack.c.h.b16 %v4019
        %v4087 = vunpack.c.l.b16 %v4020
        %v4088 = vunpack.c.h.b16 %v4020
        %v4089 = vunpack.c.l.b16 %v4021
        %v4090 = vunpack.c.h.b16 %v4021
        %v4091 = vunpack.c.l.b16 %v4022
        %v4092 = vunpack.c.h.b16 %v4022
        %v4093 = vunpack.c.l.b16 %v4023
        %v4094 = vunpack.c.h.b16 %v4023
        %v4095 = vunpack.c.l.b16 %v4024
        %v4096 = vunpack.c.h.b16 %v4024
        %v4097 = vunpack.c.l.b16 %v4025
        %v4098 = vunpack.c.h.b16 %v4025
        %v4099 = vunpack.c.l.b16 %v4026
        %v4100 = vunpack.c.h.b16 %v4026
        %v4101 = vunpack.c.l.b16 %v4027
        %v4102 = vunpack.c.h.b16 %v4027
        %v4103 = vunpack.c.l.b16 %v4028
        %v4104 = vunpack.c.h.b16 %v4028
        %v4105 = vunpack.c.l.b16 %v4029
        %v4106 = vunpack.c.h.b16 %v4029
        %v4107 = vunpack.c.l.b16 %v4030
        %v4108 = vunpack.c.h.b16 %v4030
        %v4109 = vunpack.c.l.b16 %v4031
        %v4110 = vunpack.c.h.b16 %v4031
        %v4111 = vunpack.c.l.b16 %v4032
        %v4112 = vunpack.c.h.b16 %v4032
        %v4113 = vunpack.c.l.b16 %v4033
        %v4114 = vunpack.c.h.b16 %v4033
        %v4115 = vunpack.c.l.b16 %v4034
        %v4116 = vunpack.c.h.b16 %v4034
        %v4117 = vunpack.c.l.b16 %v4035
        %v4118 = vunpack.c.h.b16 %v4035
        %v4119 = vunpack.c.l.b16 %v4036
        %v4120 = vunpack.c.h.b16 %v4036
        %v4121 = vunpack.c.l.b16 %v4037
        %v4122 = vunpack.c.h.b16 %v4037
        %v4123 = vunpack.c.l.b16 %v4038
        %v4124 = vunpack.c.h.b16 %v4038
        %v4125 = vunpack.c.l.b16 %v4039
        %v4126 = vunpack.c.h.b16 %v4039
        %v4127 = vunpack.c.l.b16 %v4040
        %v4128 = vunpack.c.h.b16 %v4040
        %v4129 = vunpack.c.l.b16 %v4041
        %v4130 = vunpack.c.h.b16 %v4041
        %v4131 = vunpack.c.l.b16 %v4042
        %v4132 = vunpack.c.h.b16 %v4042
        %v4133 = vunpack.c.l.b16 %v4043
        %v4134 = vunpack.c.h.b16 %v4043
        %v4135 = vunpack.c.l.b16 %v4044
        %v4136 = vunpack.c.h.b16 %v4044
        %v4137 = vunpack.c.l.b16 %v4045
        %v4138 = vunpack.c.h.b16 %v4045
        %v4139 = vunpack.c.l.b16 %v4046
        %v4140 = vunpack.c.h.b16 %v4046
        %v4141 = vunpack.c.l.b16 %v4047
        %v4142 = vunpack.c.h.b16 %v4047
        %v4143 = vunpack.c.l.b16 %v4048
        %v4144 = vunpack.c.h.b16 %v4048
        %v4145 = vpack.c.b16 %v4083, %v4081
        %v4146 = vpack.c.b16 %v4084, %v4082
        %v4147 = vpack.c.b16 %v4087, %v4085
        %v4148 = vpack.c.b16 %v4088, %v4086
        %v4149 = vpack.c.b16 %v4091, %v4089
        %v4150 = vpack.c.b16 %v4092, %v4090
        %v4151 = vpack.c.b16 %v4095, %v4093
        %v4152 = vpack.c.b16 %v4096, %v4094
        %v4153 = vpack.c.b16 %v4099, %v4097
        %v4154 = vpack.c.b16 %v4100, %v4098
        %v4155 = vpack.c.b16 %v4103, %v4101
        %v4156 = vpack.c.b16 %v4104, %v4102
        %v4157 = vpack.c.b16 %v4107, %v4105
        %v4158 = vpack.c.b16 %v4108, %v4106
        %v4159 = vpack.c.b16 %v4111, %v4109
        %v4160 = vpack.c.b16 %v4112, %v4110
        %v4161 = vpack.c.b16 %v4115, %v4113
        %v4162 = vpack.c.b16 %v4116, %v4114
        %v4163 = vpack.c.b16 %v4119, %v4117
        %v4164 = vpack.c.b16 %v4120, %v4118
        %v4165 = vpack.c.b16 %v4123, %v4121
        %v4166 = vpack.c.b16 %v4124, %v4122
        %v4167 = vpack.c.b16 %v4127, %v4125
        %v4168 = vpack.c.b16 %v4128, %v4126
        %v4169 = vpack.c.b16 %v4131, %v4129
        %v4170 = vpack.c.b16 %v4132, %v4130
        %v4171 = vpack.c.b16 %v4135, %v4133
        %v4172 = vpack.c.b16 %v4136, %v4134
        %v4173 = vpack.c.b16 %v4139, %v4137
        %v4174 = vpack.c.b16 %v4140, %v4138
        %v4175 = vpack.c.b16 %v4143, %v4141
        %v4176 = vpack.c.b16 %v4144, %v4142
        %4209 = vmatprep.subr.bf16.mxu0 %v4160
        %4210 = vmatpush1.bf16.msra.mxu0 %v4159
        %4211 = vmatprep.subr.bf16.mxu0 %v4158
        %4212 = vmatpush1.bf16.msra.mxu0 %v4157
        %4213 = vmatprep.subr.bf16.mxu0 %v4156
        %4214 = vmatpush1.bf16.msra.mxu0 %v4155
        %4215 = vmatprep.subr.bf16.mxu0 %v4154
        %4216 = vmatpush1.bf16.msra.mxu0 %v4153
        %4217 = vmatprep.subr.bf16.mxu0 %v4152
        %4218 = vmatpush1.bf16.msra.mxu0 %v4151
        %4219 = vmatprep.subr.bf16.mxu0 %v4150
        %4220 = vmatpush1.bf16.msra.mxu0 %v4149
        %4221 = vmatprep.subr.bf16.mxu0 %v4148
        %4222 = vmatpush1.bf16.msra.mxu0 %v4147
        %4223 = vmatprep.subr.bf16.mxu0 %v4146
        %4224 = vmatpush1.bf16.msra.mxu0 %v4145
        %4225 = vmatprep.subr.bf16.mxu0 %v4176
        %4226 = vmatpush2.bf16.msra.mxu0 %v4175
        %4227 = vmatprep.subr.bf16.mxu0 %v4174
        %4228 = vmatpush2.bf16.msra.mxu0 %v4173
        %4229 = vmatprep.subr.bf16.mxu0 %v4172
        %4230 = vmatpush2.bf16.msra.mxu0 %v4171
        %4231 = vmatprep.subr.bf16.mxu0 %v4170
        %4232 = vmatpush2.bf16.msra.mxu0 %v4169
        %4233 = vmatprep.subr.bf16.mxu0 %v4168
        %4234 = vmatpush2.bf16.msra.mxu0 %v4167
        %4235 = vmatprep.subr.bf16.mxu0 %v4166
        %4236 = vmatpush2.bf16.msra.mxu0 %v4165
        %4237 = vmatprep.subr.bf16.mxu0 %v4164
        %4238 = vmatpush2.bf16.msra.mxu0 %v4163
        %4239 = vmatprep.subr.bf16.mxu0 %v4162
        %4240 = vmatpush2.bf16.msra.mxu0 %v4161
        %4241 = vmatprep.mubr.bf16.mxu0 %v4015
        %4242 = vmatmul.mubr.bf16.gmra.mxu0 %v4014
        %v4243 = vpop.f32.mrf.mxu0
        %v4244 = vadd.f32 0.0, %v4243
        %v4245 = vpop.f32.mrf.mxu0
        %v4246 = vadd.f32 0.0, %v4245
        %v4247 = vpop.f32.mrf.mxu0
        %v4248 = vpop.f32.mrf.mxu0
        %4249 = vdwg.mxu0
        %v4250 = vadd.f32 %v3962, %v4244
        %v4251 = vadd.f32 %v3964, %v4246
        %s4252 = scalar_lea.vmem %s7, 12
        %v4253 = vld [vmem:[%s4252] sm:$0xf]
        %v4255 = vsel %vm3406, %v4253, 0
        %4257 = vmatprep.subr.bf16.mxu0 0
        %4258 = vmatpush1.bf16.msra.mxu0 0
        %4259 = vmatprep.subr.bf16.mxu0 0
        %4260 = vmatpush1.bf16.msra.mxu0 0
        %4261 = vmatprep.subr.bf16.mxu0 0
        %4262 = vmatpush1.bf16.msra.mxu0 0
        %4263 = vmatprep.subr.bf16.mxu0 0
        %4264 = vmatpush1.bf16.msra.mxu0 0
        %4265 = vmatprep.subr.bf16.mxu0 0
        %4266 = vmatpush1.bf16.msra.mxu0 0
        %4267 = vmatprep.subr.bf16.mxu0 0
        %4268 = vmatpush1.bf16.msra.mxu0 0
        %4269 = vmatprep.subr.bf16.mxu0 0
        %4270 = vmatpush1.bf16.msra.mxu0 0
        %4271 = vmatprep.subr.bf16.mxu0 %v3404
        %4272 = vmatpush1.bf16.msra.mxu0 %v3403
        %4273 = vmatprep.subr.bf16.mxu0 0
        %4274 = vmatpush2.bf16.msra.mxu0 0
        %4275 = vmatprep.subr.bf16.mxu0 0
        %4276 = vmatpush2.bf16.msra.mxu0 0
        %4277 = vmatprep.subr.bf16.mxu0 0
        %4278 = vmatpush2.bf16.msra.mxu0 0
        %4279 = vmatprep.subr.bf16.mxu0 0
        %4280 = vmatpush2.bf16.msra.mxu0 0
        %4281 = vmatprep.subr.bf16.mxu0 0
        %4282 = vmatpush2.bf16.msra.mxu0 0
        %4283 = vmatprep.subr.bf16.mxu0 0
        %4284 = vmatpush2.bf16.msra.mxu0 0
        %4285 = vmatprep.subr.bf16.mxu0 0
        %4286 = vmatpush2.bf16.msra.mxu0 0
        %4287 = vmatprep.subr.bf16.mxu0 0
        %4288 = vmatpush2.bf16.msra.mxu0 0
        %4289 = vmatprep.mubr.bf16.mxu0 0
        %4290 = vmatmul.mubr.bf16.gmra.mxu0 %v4255
        %v4291 = vpop.f32.mrf.mxu0
        %v4292 = vadd.f32 0.0, %v4291
        %v4293 = vpop.f32.mrf.mxu0
        %v4294 = vadd.f32 0.0, %v4293
        %v4295 = vpop.f32.mrf.mxu0
        %v4296 = vpop.f32.mrf.mxu0
        %4297 = vdwg.mxu0
        %v4298 = vpack.c.bf16 %v4292, %v4292
        %v4299 = vpack.c.bf16 %v4294, %v4294
        %s4300 = scalar_lea.vmem [#allocation3], 768
        %v4301 = vld [vmem:[%s4300] sm:$0xff]
        %v4302 = vld [vmem:[%s4300 + $0x8] sm:$0xff]
        %v4303 = vld [vmem:[%s4300 + $0x10] sm:$0xff]
        %v4304 = vld [vmem:[%s4300 + $0x18] sm:$0xff]
        %v4305 = vld [vmem:[%s4300 + $0x20] sm:$0xff]
        %v4306 = vld [vmem:[%s4300 + $0x28] sm:$0xff]
        %v4307 = vld [vmem:[%s4300 + $0x30] sm:$0xff]
        %v4308 = vld [vmem:[%s4300 + $0x38] sm:$0xff]
        %v4309 = vld [vmem:[%s4300 + $0x40] sm:$0xff]
        %v4310 = vld [vmem:[%s4300 + $0x48] sm:$0xff]
        %v4311 = vld [vmem:[%s4300 + $0x50] sm:$0xff]
        %v4312 = vld [vmem:[%s4300 + $0x58] sm:$0xff]
        %v4313 = vld [vmem:[%s4300 + $0x60] sm:$0xff]
        %v4314 = vld [vmem:[%s4300 + $0x68] sm:$0xff]
        %v4315 = vld [vmem:[%s4300 + $0x70] sm:$0xff]
        %v4316 = vld [vmem:[%s4300 + $0x78] sm:$0xff]
        %v4317 = vld [vmem:[%s4300 + $0x80] sm:$0xff]
        %v4318 = vld [vmem:[%s4300 + $0x88] sm:$0xff]
        %v4319 = vld [vmem:[%s4300 + $0x90] sm:$0xff]
        %v4320 = vld [vmem:[%s4300 + $0x98] sm:$0xff]
        %v4321 = vld [vmem:[%s4300 + $0xa0] sm:$0xff]
        %v4322 = vld [vmem:[%s4300 + $0xa8] sm:$0xff]
        %v4323 = vld [vmem:[%s4300 + $0xb0] sm:$0xff]
        %v4324 = vld [vmem:[%s4300 + $0xb8] sm:$0xff]
        %v4325 = vld [vmem:[%s4300 + $0xc0] sm:$0xff]
        %v4326 = vld [vmem:[%s4300 + $0xc8] sm:$0xff]
        %v4327 = vld [vmem:[%s4300 + $0xd0] sm:$0xff]
        %v4328 = vld [vmem:[%s4300 + $0xd8] sm:$0xff]
        %v4329 = vld [vmem:[%s4300 + $0xe0] sm:$0xff]
        %v4330 = vld [vmem:[%s4300 + $0xe8] sm:$0xff]
        %v4331 = vld [vmem:[%s4300 + $0xf0] sm:$0xff]
        %v4332 = vld [vmem:[%s4300 + $0xf8] sm:$0xff]
        %v4365 = vunpack.c.l.b16 %v4301
        %v4366 = vunpack.c.h.b16 %v4301
        %v4367 = vunpack.c.l.b16 %v4302
        %v4368 = vunpack.c.h.b16 %v4302
        %v4369 = vunpack.c.l.b16 %v4303
        %v4370 = vunpack.c.h.b16 %v4303
        %v4371 = vunpack.c.l.b16 %v4304
        %v4372 = vunpack.c.h.b16 %v4304
        %v4373 = vunpack.c.l.b16 %v4305
        %v4374 = vunpack.c.h.b16 %v4305
        %v4375 = vunpack.c.l.b16 %v4306
        %v4376 = vunpack.c.h.b16 %v4306
        %v4377 = vunpack.c.l.b16 %v4307
        %v4378 = vunpack.c.h.b16 %v4307
        %v4379 = vunpack.c.l.b16 %v4308
        %v4380 = vunpack.c.h.b16 %v4308
        %v4381 = vunpack.c.l.b16 %v4309
        %v4382 = vunpack.c.h.b16 %v4309
        %v4383 = vunpack.c.l.b16 %v4310
        %v4384 = vunpack.c.h.b16 %v4310
        %v4385 = vunpack.c.l.b16 %v4311
        %v4386 = vunpack.c.h.b16 %v4311
        %v4387 = vunpack.c.l.b16 %v4312
        %v4388 = vunpack.c.h.b16 %v4312
        %v4389 = vunpack.c.l.b16 %v4313
        %v4390 = vunpack.c.h.b16 %v4313
        %v4391 = vunpack.c.l.b16 %v4314
        %v4392 = vunpack.c.h.b16 %v4314
        %v4393 = vunpack.c.l.b16 %v4315
        %v4394 = vunpack.c.h.b16 %v4315
        %v4395 = vunpack.c.l.b16 %v4316
        %v4396 = vunpack.c.h.b16 %v4316
        %v4397 = vunpack.c.l.b16 %v4317
        %v4398 = vunpack.c.h.b16 %v4317
        %v4399 = vunpack.c.l.b16 %v4318
        %v4400 = vunpack.c.h.b16 %v4318
        %v4401 = vunpack.c.l.b16 %v4319
        %v4402 = vunpack.c.h.b16 %v4319
        %v4403 = vunpack.c.l.b16 %v4320
        %v4404 = vunpack.c.h.b16 %v4320
        %v4405 = vunpack.c.l.b16 %v4321
        %v4406 = vunpack.c.h.b16 %v4321
        %v4407 = vunpack.c.l.b16 %v4322
        %v4408 = vunpack.c.h.b16 %v4322
        %v4409 = vunpack.c.l.b16 %v4323
        %v4410 = vunpack.c.h.b16 %v4323
        %v4411 = vunpack.c.l.b16 %v4324
        %v4412 = vunpack.c.h.b16 %v4324
        %v4413 = vunpack.c.l.b16 %v4325
        %v4414 = vunpack.c.h.b16 %v4325
        %v4415 = vunpack.c.l.b16 %v4326
        %v4416 = vunpack.c.h.b16 %v4326
        %v4417 = vunpack.c.l.b16 %v4327
        %v4418 = vunpack.c.h.b16 %v4327
        %v4419 = vunpack.c.l.b16 %v4328
        %v4420 = vunpack.c.h.b16 %v4328
        %v4421 = vunpack.c.l.b16 %v4329
        %v4422 = vunpack.c.h.b16 %v4329
        %v4423 = vunpack.c.l.b16 %v4330
        %v4424 = vunpack.c.h.b16 %v4330
        %v4425 = vunpack.c.l.b16 %v4331
        %v4426 = vunpack.c.h.b16 %v4331
        %v4427 = vunpack.c.l.b16 %v4332
        %v4428 = vunpack.c.h.b16 %v4332
        %v4429 = vpack.c.b16 %v4367, %v4365
        %v4430 = vpack.c.b16 %v4368, %v4366
        %v4431 = vpack.c.b16 %v4371, %v4369
        %v4432 = vpack.c.b16 %v4372, %v4370
        %v4433 = vpack.c.b16 %v4375, %v4373
        %v4434 = vpack.c.b16 %v4376, %v4374
        %v4435 = vpack.c.b16 %v4379, %v4377
        %v4436 = vpack.c.b16 %v4380, %v4378
        %v4437 = vpack.c.b16 %v4383, %v4381
        %v4438 = vpack.c.b16 %v4384, %v4382
        %v4439 = vpack.c.b16 %v4387, %v4385
        %v4440 = vpack.c.b16 %v4388, %v4386
        %v4441 = vpack.c.b16 %v4391, %v4389
        %v4442 = vpack.c.b16 %v4392, %v4390
        %v4443 = vpack.c.b16 %v4395, %v4393
        %v4444 = vpack.c.b16 %v4396, %v4394
        %v4445 = vpack.c.b16 %v4399, %v4397
        %v4446 = vpack.c.b16 %v4400, %v4398
        %v4447 = vpack.c.b16 %v4403, %v4401
        %v4448 = vpack.c.b16 %v4404, %v4402
        %v4449 = vpack.c.b16 %v4407, %v4405
        %v4450 = vpack.c.b16 %v4408, %v4406
        %v4451 = vpack.c.b16 %v4411, %v4409
        %v4452 = vpack.c.b16 %v4412, %v4410
        %v4453 = vpack.c.b16 %v4415, %v4413
        %v4454 = vpack.c.b16 %v4416, %v4414
        %v4455 = vpack.c.b16 %v4419, %v4417
        %v4456 = vpack.c.b16 %v4420, %v4418
        %v4457 = vpack.c.b16 %v4423, %v4421
        %v4458 = vpack.c.b16 %v4424, %v4422
        %v4459 = vpack.c.b16 %v4427, %v4425
        %v4460 = vpack.c.b16 %v4428, %v4426
        %4493 = vmatprep.subr.bf16.mxu0 %v4444
        %4494 = vmatpush1.bf16.msra.mxu0 %v4443
        %4495 = vmatprep.subr.bf16.mxu0 %v4442
        %4496 = vmatpush1.bf16.msra.mxu0 %v4441
        %4497 = vmatprep.subr.bf16.mxu0 %v4440
        %4498 = vmatpush1.bf16.msra.mxu0 %v4439
        %4499 = vmatprep.subr.bf16.mxu0 %v4438
        %4500 = vmatpush1.bf16.msra.mxu0 %v4437
        %4501 = vmatprep.subr.bf16.mxu0 %v4436
        %4502 = vmatpush1.bf16.msra.mxu0 %v4435
        %4503 = vmatprep.subr.bf16.mxu0 %v4434
        %4504 = vmatpush1.bf16.msra.mxu0 %v4433
        %4505 = vmatprep.subr.bf16.mxu0 %v4432
        %4506 = vmatpush1.bf16.msra.mxu0 %v4431
        %4507 = vmatprep.subr.bf16.mxu0 %v4430
        %4508 = vmatpush1.bf16.msra.mxu0 %v4429
        %4509 = vmatprep.subr.bf16.mxu0 %v4460
        %4510 = vmatpush2.bf16.msra.mxu0 %v4459
        %4511 = vmatprep.subr.bf16.mxu0 %v4458
        %4512 = vmatpush2.bf16.msra.mxu0 %v4457
        %4513 = vmatprep.subr.bf16.mxu0 %v4456
        %4514 = vmatpush2.bf16.msra.mxu0 %v4455
        %4515 = vmatprep.subr.bf16.mxu0 %v4454
        %4516 = vmatpush2.bf16.msra.mxu0 %v4453
        %4517 = vmatprep.subr.bf16.mxu0 %v4452
        %4518 = vmatpush2.bf16.msra.mxu0 %v4451
        %4519 = vmatprep.subr.bf16.mxu0 %v4450
        %4520 = vmatpush2.bf16.msra.mxu0 %v4449
        %4521 = vmatprep.subr.bf16.mxu0 %v4448
        %4522 = vmatpush2.bf16.msra.mxu0 %v4447
        %4523 = vmatprep.subr.bf16.mxu0 %v4446
        %4524 = vmatpush2.bf16.msra.mxu0 %v4445
        %4525 = vmatprep.mubr.bf16.mxu0 %v4299
        %4526 = vmatmul.mubr.bf16.gmra.mxu0 %v4298
        %v4527 = vpop.f32.mrf.mxu0
        %v4528 = vadd.f32 0.0, %v4527
        %v4529 = vpop.f32.mrf.mxu0
        %v4530 = vadd.f32 0.0, %v4529
        %v4531 = vpop.f32.mrf.mxu0
        %v4532 = vpop.f32.mrf.mxu0
        %4533 = vdwg.mxu0
        %v4534 = vadd.f32 %v4250, %v4528
        %v4535 = vadd.f32 %v4251, %v4530
        %v4536 = vld [vmem:[%s9] sm:$0x3]
        %v4538 = vlaneseq
        %v4539 = vshrl.u32 %v4538, 7
        %v4540 = vsub.s32 0, %v4539
        %v4541 = vrot.slane %v4536, %v4540
        %v4542 = vlaneseq
        %v4543 = vshrl.u32 %v4542, 7
        %v4544 = vsub.s32 1, %v4543
        %v4545 = vrot.slane %v4536, %v4544
        %v4548 = vadd.f32 %v4534, %v4541
        %v4549 = vadd.f32 %v4535, %v4545
        %vm4550 = vcmp.ge.f32.partialorder %v4548, 0.0
        %vm4551 = vcmp.ge.f32.partialorder %v4549, 0.0
        %v4552 = vmul.f32 %v4548, 0.2
        %v4553 = vmul.f32 %v4549, 0.2
        %v4554 = vsel %vm4550, %v4548, %v4552
        %v4555 = vsel %vm4551, %v4549, %v4553
        %v4556 = vpack.c.bf16 %v4554, %v4554
        %v4557 = vpack.c.bf16 %v4555, %v4555
        %v4558 = vld [vmem:[%s10] sm:$0x3]
        %vm4559 = vcmask 64512
        %v4561 = vsel %vm4559, %v4558, 0
        %vm4563 = vcmask 1043456
        %v4565 = vsel %vm4563, %v4556, 0
        %v4568 = vsel %vm4563, %v4557, 0
        %4570 = vmatprep.subr.bf16.mxu0 0
        %4571 = vmatpush1.bf16.msra.mxu0 0
        %4572 = vmatprep.subr.bf16.mxu0 0
        %4573 = vmatpush1.bf16.msra.mxu0 0
        %4574 = vmatprep.subr.bf16.mxu0 0
        %4575 = vmatpush1.bf16.msra.mxu0 0
        %4576 = vmatprep.subr.bf16.mxu0 0
        %4577 = vmatpush1.bf16.msra.mxu0 0
        %4578 = vmatprep.subr.bf16.mxu0 0
        %4579 = vmatpush1.bf16.msra.mxu0 0
        %4580 = vmatprep.subr.bf16.mxu0 0
        %4581 = vmatpush1.bf16.msra.mxu0 0
        %4582 = vmatprep.subr.bf16.mxu0 0
        %4583 = vmatpush1.bf16.msra.mxu0 0
        %4584 = vmatprep.subr.bf16.mxu0 %v4568
        %4585 = vmatpush1.bf16.msra.mxu0 %v4565
        %4586 = vmatprep.subr.bf16.mxu0 0
        %4587 = vmatpush2.bf16.msra.mxu0 0
        %4588 = vmatprep.subr.bf16.mxu0 0
        %4589 = vmatpush2.bf16.msra.mxu0 0
        %4590 = vmatprep.subr.bf16.mxu0 0
        %4591 = vmatpush2.bf16.msra.mxu0 0
        %4592 = vmatprep.subr.bf16.mxu0 0
        %4593 = vmatpush2.bf16.msra.mxu0 0
        %4594 = vmatprep.subr.bf16.mxu0 0
        %4595 = vmatpush2.bf16.msra.mxu0 0
        %4596 = vmatprep.subr.bf16.mxu0 0
        %4597 = vmatpush2.bf16.msra.mxu0 0
        %4598 = vmatprep.subr.bf16.mxu0 0
        %4599 = vmatpush2.bf16.msra.mxu0 0
        %4600 = vmatprep.subr.bf16.mxu0 0
        %4601 = vmatpush2.bf16.msra.mxu0 0
        %4602 = vmatprep.mubr.bf16.mxu0 0
        %4603 = vmatmul.mubr.bf16.gmra.mxu0 %v4561
        %v4604 = vpop.f32.mrf.mxu0
        %v4605 = vadd.f32 0.0, %v4604
        %v4606 = vpop.f32.mrf.mxu0
        %v4607 = vadd.f32 0.0, %v4606
        %v4608 = vpop.f32.mrf.mxu0
        %v4609 = vpop.f32.mrf.mxu0
        %4610 = vdwg.mxu0
        %v4611 = vpack.c.bf16 %v4605, %v4605
        %v4612 = vpack.c.bf16 %v4607, %v4607
        %v4613 = vld [vmem:[%s11] sm:$0xf]
        %v4614 = vld [vmem:[%s11 + $0x4] sm:$0xf]
        %v4615 = vld [vmem:[%s11 + $0x8] sm:$0xf]
        %v4616 = vld [vmem:[%s11 + $0xc] sm:$0xf]
        %v4617 = vld [vmem:[%s11 + $0x10] sm:$0xf]
        %v4618 = vld [vmem:[%s11 + $0x14] sm:$0xf]
        %v4619 = vld [vmem:[%s11 + $0x18] sm:$0xf]
        %v4620 = vld [vmem:[%s11 + $0x1c] sm:$0xf]
        %v4621 = vld [vmem:[%s11 + $0x20] sm:$0xf]
        %v4622 = vld [vmem:[%s11 + $0x24] sm:$0xf]
        %v4623 = vld [vmem:[%s11 + $0x28] sm:$0xf]
        %v4624 = vld [vmem:[%s11 + $0x2c] sm:$0xf]
        %v4625 = vld [vmem:[%s11 + $0x30] sm:$0xf]
        %v4626 = vld [vmem:[%s11 + $0x34] sm:$0xf]
        %v4627 = vld [vmem:[%s11 + $0x38] sm:$0xf]
        %v4628 = vld [vmem:[%s11 + $0x3c] sm:$0xf]
        %v4629 = vld [vmem:[%s11 + $0x40] sm:$0xf]
        %v4630 = vld [vmem:[%s11 + $0x44] sm:$0xf]
        %v4631 = vld [vmem:[%s11 + $0x48] sm:$0xf]
        %v4632 = vld [vmem:[%s11 + $0x4c] sm:$0xf]
        %v4633 = vld [vmem:[%s11 + $0x50] sm:$0xf]
        %v4634 = vld [vmem:[%s11 + $0x54] sm:$0xf]
        %v4635 = vld [vmem:[%s11 + $0x58] sm:$0xf]
        %v4636 = vld [vmem:[%s11 + $0x5c] sm:$0xf]
        %v4637 = vld [vmem:[%s11 + $0x60] sm:$0xf]
        %v4638 = vld [vmem:[%s11 + $0x64] sm:$0xf]
        %v4639 = vld [vmem:[%s11 + $0x68] sm:$0xf]
        %v4640 = vld [vmem:[%s11 + $0x6c] sm:$0xf]
        %v4641 = vld [vmem:[%s11 + $0x70] sm:$0xf]
        %v4642 = vld [vmem:[%s11 + $0x74] sm:$0xf]
        %v4643 = vld [vmem:[%s11 + $0x78] sm:$0xf]
        %v4644 = vld [vmem:[%s11 + $0x7c] sm:$0xf]
        %s4645 = scalar_lea.vmem %s10, 2
        %v4646 = vld [vmem:[%s4645] sm:$0x3]
        %v4648 = vsel %vm4559, %v4646, 0
        %4650 = vmatprep.subr.bf16.mxu0 0
        %4651 = vmatpush1.bf16.msra.mxu0 0
        %4652 = vmatprep.subr.bf16.mxu0 0
        %4653 = vmatpush1.bf16.msra.mxu0 0
        %4654 = vmatprep.subr.bf16.mxu0 0
        %4655 = vmatpush1.bf16.msra.mxu0 0
        %4656 = vmatprep.subr.bf16.mxu0 0
        %4657 = vmatpush1.bf16.msra.mxu0 0
        %4658 = vmatprep.subr.bf16.mxu0 0
        %4659 = vmatpush1.bf16.msra.mxu0 0
        %4660 = vmatprep.subr.bf16.mxu0 0
        %4661 = vmatpush1.bf16.msra.mxu0 0
        %4662 = vmatprep.subr.bf16.mxu0 0
        %4663 = vmatpush1.bf16.msra.mxu0 0
        %4664 = vmatprep.subr.bf16.mxu0 %v4568
        %4665 = vmatpush1.bf16.msra.mxu0 %v4565
        %4666 = vmatprep.subr.bf16.mxu0 0
        %4667 = vmatpush2.bf16.msra.mxu0 0
        %4668 = vmatprep.subr.bf16.mxu0 0
        %4669 = vmatpush2.bf16.msra.mxu0 0
        %4670 = vmatprep.subr.bf16.mxu0 0
        %4671 = vmatpush2.bf16.msra.mxu0 0
        %4672 = vmatprep.subr.bf16.mxu0 0
        %4673 = vmatpush2.bf16.msra.mxu0 0
        %4674 = vmatprep.subr.bf16.mxu0 0
        %4675 = vmatpush2.bf16.msra.mxu0 0
        %4676 = vmatprep.subr.bf16.mxu0 0
        %4677 = vmatpush2.bf16.msra.mxu0 0
        %4678 = vmatprep.subr.bf16.mxu0 0
        %4679 = vmatpush2.bf16.msra.mxu0 0
        %4680 = vmatprep.subr.bf16.mxu0 0
        %4681 = vmatpush2.bf16.msra.mxu0 0
        %4682 = vmatprep.mubr.bf16.mxu0 0
        %4683 = vmatmul.mubr.bf16.gmra.mxu0 %v4648
        %v4684 = vpop.f32.mrf.mxu0
        %v4685 = vadd.f32 0.0, %v4684
        %v4686 = vpop.f32.mrf.mxu0
        %v4687 = vadd.f32 0.0, %v4686
        %v4688 = vpop.f32.mrf.mxu0
        %v4689 = vpop.f32.mrf.mxu0
        %4690 = vdwg.mxu0
        %v4691 = vpack.c.bf16 %v4685, %v4685
        %v4692 = vpack.c.bf16 %v4687, %v4687
        %s4693 = scalar_lea.vmem %s11, 128
        %v4694 = vld [vmem:[%s4693] sm:$0xf]
        %v4695 = vld [vmem:[%s4693 + $0x4] sm:$0xf]
        %v4696 = vld [vmem:[%s4693 + $0x8] sm:$0xf]
        %v4697 = vld [vmem:[%s4693 + $0xc] sm:$0xf]
        %v4698 = vld [vmem:[%s4693 + $0x10] sm:$0xf]
        %v4699 = vld [vmem:[%s4693 + $0x14] sm:$0xf]
        %v4700 = vld [vmem:[%s4693 + $0x18] sm:$0xf]
        %v4701 = vld [vmem:[%s4693 + $0x1c] sm:$0xf]
        %v4702 = vld [vmem:[%s4693 + $0x20] sm:$0xf]
        %v4703 = vld [vmem:[%s4693 + $0x24] sm:$0xf]
        %v4704 = vld [vmem:[%s4693 + $0x28] sm:$0xf]
        %v4705 = vld [vmem:[%s4693 + $0x2c] sm:$0xf]
        %v4706 = vld [vmem:[%s4693 + $0x30] sm:$0xf]
        %v4707 = vld [vmem:[%s4693 + $0x34] sm:$0xf]
        %v4708 = vld [vmem:[%s4693 + $0x38] sm:$0xf]
        %v4709 = vld [vmem:[%s4693 + $0x3c] sm:$0xf]
        %v4710 = vld [vmem:[%s4693 + $0x40] sm:$0xf]
        %v4711 = vld [vmem:[%s4693 + $0x44] sm:$0xf]
        %v4712 = vld [vmem:[%s4693 + $0x48] sm:$0xf]
        %v4713 = vld [vmem:[%s4693 + $0x4c] sm:$0xf]
        %v4714 = vld [vmem:[%s4693 + $0x50] sm:$0xf]
        %v4715 = vld [vmem:[%s4693 + $0x54] sm:$0xf]
        %v4716 = vld [vmem:[%s4693 + $0x58] sm:$0xf]
        %v4717 = vld [vmem:[%s4693 + $0x5c] sm:$0xf]
        %v4718 = vld [vmem:[%s4693 + $0x60] sm:$0xf]
        %v4719 = vld [vmem:[%s4693 + $0x64] sm:$0xf]
        %v4720 = vld [vmem:[%s4693 + $0x68] sm:$0xf]
        %v4721 = vld [vmem:[%s4693 + $0x6c] sm:$0xf]
        %v4722 = vld [vmem:[%s4693 + $0x70] sm:$0xf]
        %v4723 = vld [vmem:[%s4693 + $0x74] sm:$0xf]
        %v4724 = vld [vmem:[%s4693 + $0x78] sm:$0xf]
        %v4725 = vld [vmem:[%s4693 + $0x7c] sm:$0xf]
        %v4758 = vunpack.c.l.b16 %v4694
        %v4759 = vunpack.c.l.b16 %v4695
        %v4760 = vunpack.c.l.b16 %v4696
        %v4761 = vunpack.c.l.b16 %v4697
        %v4762 = vunpack.c.l.b16 %v4698
        %v4763 = vunpack.c.l.b16 %v4699
        %v4764 = vunpack.c.l.b16 %v4700
        %v4765 = vunpack.c.l.b16 %v4701
        %v4766 = vunpack.c.l.b16 %v4702
        %v4767 = vunpack.c.l.b16 %v4703
        %v4768 = vunpack.c.l.b16 %v4704
        %v4769 = vunpack.c.l.b16 %v4705
        %v4770 = vunpack.c.l.b16 %v4706
        %v4771 = vunpack.c.l.b16 %v4707
        %v4772 = vunpack.c.l.b16 %v4708
        %v4773 = vunpack.c.l.b16 %v4709
        %v4774 = vunpack.c.l.b16 %v4710
        %v4775 = vunpack.c.l.b16 %v4711
        %v4776 = vunpack.c.l.b16 %v4712
        %v4777 = vunpack.c.l.b16 %v4713
        %v4778 = vunpack.c.l.b16 %v4714
        %v4779 = vunpack.c.l.b16 %v4715
        %v4780 = vunpack.c.l.b16 %v4716
        %v4781 = vunpack.c.l.b16 %v4717
        %v4782 = vunpack.c.l.b16 %v4718
        %v4783 = vunpack.c.l.b16 %v4719
        %v4784 = vunpack.c.l.b16 %v4720
        %v4785 = vunpack.c.l.b16 %v4721
        %v4786 = vunpack.c.l.b16 %v4722
        %v4787 = vunpack.c.l.b16 %v4723
        %v4788 = vunpack.c.l.b16 %v4724
        %v4789 = vunpack.c.l.b16 %v4725
        %v4790 = vpack.c.b16 %v4759, %v4758
        %v4791 = vpack.c.b16 %v4761, %v4760
        %v4792 = vpack.c.b16 %v4763, %v4762
        %v4793 = vpack.c.b16 %v4765, %v4764
        %v4794 = vpack.c.b16 %v4767, %v4766
        %v4795 = vpack.c.b16 %v4769, %v4768
        %v4796 = vpack.c.b16 %v4771, %v4770
        %v4797 = vpack.c.b16 %v4773, %v4772
        %v4798 = vpack.c.b16 %v4775, %v4774
        %v4799 = vpack.c.b16 %v4777, %v4776
        %v4800 = vpack.c.b16 %v4779, %v4778
        %v4801 = vpack.c.b16 %v4781, %v4780
        %v4802 = vpack.c.b16 %v4783, %v4782
        %v4803 = vpack.c.b16 %v4785, %v4784
        %v4804 = vpack.c.b16 %v4787, %v4786
        %v4805 = vpack.c.b16 %v4789, %v4788
        %4822 = vmatprep.subr.bf16.mxu0 0
        %4823 = vmatpush1.bf16.msra.mxu0 %v4797
        %4824 = vmatprep.subr.bf16.mxu0 0
        %4825 = vmatpush1.bf16.msra.mxu0 %v4796
        %4826 = vmatprep.subr.bf16.mxu0 0
        %4827 = vmatpush1.bf16.msra.mxu0 %v4795
        %4828 = vmatprep.subr.bf16.mxu0 0
        %4829 = vmatpush1.bf16.msra.mxu0 %v4794
        %4830 = vmatprep.subr.bf16.mxu0 0
        %4831 = vmatpush1.bf16.msra.mxu0 %v4793
        %4832 = vmatprep.subr.bf16.mxu0 0
        %4833 = vmatpush1.bf16.msra.mxu0 %v4792
        %4834 = vmatprep.subr.bf16.mxu0 0
        %4835 = vmatpush1.bf16.msra.mxu0 %v4791
        %4836 = vmatprep.subr.bf16.mxu0 0
        %4837 = vmatpush1.bf16.msra.mxu0 %v4790
        %4838 = vmatprep.subr.bf16.mxu0 0
        %4839 = vmatpush2.bf16.msra.mxu0 %v4805
        %4840 = vmatprep.subr.bf16.mxu0 0
        %4841 = vmatpush2.bf16.msra.mxu0 %v4804
        %4842 = vmatprep.subr.bf16.mxu0 0
        %4843 = vmatpush2.bf16.msra.mxu0 %v4803
        %4844 = vmatprep.subr.bf16.mxu0 0
        %4845 = vmatpush2.bf16.msra.mxu0 %v4802
        %4846 = vmatprep.subr.bf16.mxu0 0
        %4847 = vmatpush2.bf16.msra.mxu0 %v4801
        %4848 = vmatprep.subr.bf16.mxu0 0
        %4849 = vmatpush2.bf16.msra.mxu0 %v4800
        %4850 = vmatprep.subr.bf16.mxu0 0
        %4851 = vmatpush2.bf16.msra.mxu0 %v4799
        %4852 = vmatprep.subr.bf16.mxu0 0
        %4853 = vmatpush2.bf16.msra.mxu0 %v4798
        %4854 = vmatprep.mubr.bf16.mxu0 %v4692
        %4855 = vmatmul.mubr.bf16.gmra.mxu0 %v4691
        %v4856 = vpop.f32.mrf.mxu0
        %v4857 = vadd.f32 0.0, %v4856
        %v4858 = vpop.f32.mrf.mxu0
        %v4859 = vpop.f32.mrf.mxu0
        %v4860 = vpop.f32.mrf.mxu0
        %4861 = vdwg.mxu0
        %v4894 = vunpack.c.l.b16 %v4613
        %v4895 = vunpack.c.l.b16 %v4614
        %v4896 = vunpack.c.l.b16 %v4615
        %v4897 = vunpack.c.l.b16 %v4616
        %v4898 = vunpack.c.l.b16 %v4617
        %v4899 = vunpack.c.l.b16 %v4618
        %v4900 = vunpack.c.l.b16 %v4619
        %v4901 = vunpack.c.l.b16 %v4620
        %v4902 = vunpack.c.l.b16 %v4621
        %v4903 = vunpack.c.l.b16 %v4622
        %v4904 = vunpack.c.l.b16 %v4623
        %v4905 = vunpack.c.l.b16 %v4624
        %v4906 = vunpack.c.l.b16 %v4625
        %v4907 = vunpack.c.l.b16 %v4626
        %v4908 = vunpack.c.l.b16 %v4627
        %v4909 = vunpack.c.l.b16 %v4628
        %v4910 = vunpack.c.l.b16 %v4629
        %v4911 = vunpack.c.l.b16 %v4630
        %v4912 = vunpack.c.l.b16 %v4631
        %v4913 = vunpack.c.l.b16 %v4632
        %v4914 = vunpack.c.l.b16 %v4633
        %v4915 = vunpack.c.l.b16 %v4634
        %v4916 = vunpack.c.l.b16 %v4635
        %v4917 = vunpack.c.l.b16 %v4636
        %v4918 = vunpack.c.l.b16 %v4637
        %v4919 = vunpack.c.l.b16 %v4638
        %v4920 = vunpack.c.l.b16 %v4639
        %v4921 = vunpack.c.l.b16 %v4640
        %v4922 = vunpack.c.l.b16 %v4641
        %v4923 = vunpack.c.l.b16 %v4642
        %v4924 = vunpack.c.l.b16 %v4643
        %v4925 = vunpack.c.l.b16 %v4644
        %v4926 = vpack.c.b16 %v4895, %v4894
        %v4927 = vpack.c.b16 %v4897, %v4896
        %v4928 = vpack.c.b16 %v4899, %v4898
        %v4929 = vpack.c.b16 %v4901, %v4900
        %v4930 = vpack.c.b16 %v4903, %v4902
        %v4931 = vpack.c.b16 %v4905, %v4904
        %v4932 = vpack.c.b16 %v4907, %v4906
        %v4933 = vpack.c.b16 %v4909, %v4908
        %v4934 = vpack.c.b16 %v4911, %v4910
        %v4935 = vpack.c.b16 %v4913, %v4912
        %v4936 = vpack.c.b16 %v4915, %v4914
        %v4937 = vpack.c.b16 %v4917, %v4916
        %v4938 = vpack.c.b16 %v4919, %v4918
        %v4939 = vpack.c.b16 %v4921, %v4920
        %v4940 = vpack.c.b16 %v4923, %v4922
        %v4941 = vpack.c.b16 %v4925, %v4924
        %4958 = vmatprep.subr.bf16.mxu0 0
        %4959 = vmatpush1.bf16.msra.mxu0 %v4933
        %4960 = vmatprep.subr.bf16.mxu0 0
        %4961 = vmatpush1.bf16.msra.mxu0 %v4932
        %4962 = vmatprep.subr.bf16.mxu0 0
        %4963 = vmatpush1.bf16.msra.mxu0 %v4931
        %4964 = vmatprep.subr.bf16.mxu0 0
        %4965 = vmatpush1.bf16.msra.mxu0 %v4930
        %4966 = vmatprep.subr.bf16.mxu0 0
        %4967 = vmatpush1.bf16.msra.mxu0 %v4929
        %4968 = vmatprep.subr.bf16.mxu0 0
        %4969 = vmatpush1.bf16.msra.mxu0 %v4928
        %4970 = vmatprep.subr.bf16.mxu0 0
        %4971 = vmatpush1.bf16.msra.mxu0 %v4927
        %4972 = vmatprep.subr.bf16.mxu0 0
        %4973 = vmatpush1.bf16.msra.mxu0 %v4926
        %4974 = vmatprep.subr.bf16.mxu0 0
        %4975 = vmatpush2.bf16.msra.mxu0 %v4941
        %4976 = vmatprep.subr.bf16.mxu0 0
        %4977 = vmatpush2.bf16.msra.mxu0 %v4940
        %4978 = vmatprep.subr.bf16.mxu0 0
        %4979 = vmatpush2.bf16.msra.mxu0 %v4939
        %4980 = vmatprep.subr.bf16.mxu0 0
        %4981 = vmatpush2.bf16.msra.mxu0 %v4938
        %4982 = vmatprep.subr.bf16.mxu0 0
        %4983 = vmatpush2.bf16.msra.mxu0 %v4937
        %4984 = vmatprep.subr.bf16.mxu0 0
        %4985 = vmatpush2.bf16.msra.mxu0 %v4936
        %4986 = vmatprep.subr.bf16.mxu0 0
        %4987 = vmatpush2.bf16.msra.mxu0 %v4935
        %4988 = vmatprep.subr.bf16.mxu0 0
        %4989 = vmatpush2.bf16.msra.mxu0 %v4934
        %4990 = vmatprep.mubr.bf16.mxu0 %v4612
        %4991 = vmatmul.mubr.bf16.gmra.mxu0 %v4611
        %v4992 = vpop.f32.mrf.mxu0
        %v4993 = vadd.f32 %v4857, %v4992
        %v4994 = vpop.f32.mrf.mxu0
        %v4995 = vpop.f32.mrf.mxu0
        %v4996 = vpop.f32.mrf.mxu0
        %4997 = vdwg.mxu0
        %s4998 = scalar_lea.vmem %s10, 4
        %v4999 = vld [vmem:[%s4998] sm:$0x3]
        %v5001 = vsel %vm4559, %v4999, 0
        %5003 = vmatprep.subr.bf16.mxu0 0
        %5004 = vmatpush1.bf16.msra.mxu0 0
        %5005 = vmatprep.subr.bf16.mxu0 0
        %5006 = vmatpush1.bf16.msra.mxu0 0
        %5007 = vmatprep.subr.bf16.mxu0 0
        %5008 = vmatpush1.bf16.msra.mxu0 0
        %5009 = vmatprep.subr.bf16.mxu0 0
        %5010 = vmatpush1.bf16.msra.mxu0 0
        %5011 = vmatprep.subr.bf16.mxu0 0
        %5012 = vmatpush1.bf16.msra.mxu0 0
        %5013 = vmatprep.subr.bf16.mxu0 0
        %5014 = vmatpush1.bf16.msra.mxu0 0
        %5015 = vmatprep.subr.bf16.mxu0 0
        %5016 = vmatpush1.bf16.msra.mxu0 0
        %5017 = vmatprep.subr.bf16.mxu0 %v4568
        %5018 = vmatpush1.bf16.msra.mxu0 %v4565
        %5019 = vmatprep.subr.bf16.mxu0 0
        %5020 = vmatpush2.bf16.msra.mxu0 0
        %5021 = vmatprep.subr.bf16.mxu0 0
        %5022 = vmatpush2.bf16.msra.mxu0 0
        %5023 = vmatprep.subr.bf16.mxu0 0
        %5024 = vmatpush2.bf16.msra.mxu0 0
        %5025 = vmatprep.subr.bf16.mxu0 0
        %5026 = vmatpush2.bf16.msra.mxu0 0
        %5027 = vmatprep.subr.bf16.mxu0 0
        %5028 = vmatpush2.bf16.msra.mxu0 0
        %5029 = vmatprep.subr.bf16.mxu0 0
        %5030 = vmatpush2.bf16.msra.mxu0 0
        %5031 = vmatprep.subr.bf16.mxu0 0
        %5032 = vmatpush2.bf16.msra.mxu0 0
        %5033 = vmatprep.subr.bf16.mxu0 0
        %5034 = vmatpush2.bf16.msra.mxu0 0
        %5035 = vmatprep.mubr.bf16.mxu0 0
        %5036 = vmatmul.mubr.bf16.gmra.mxu0 %v5001
        %v5037 = vpop.f32.mrf.mxu0
        %v5038 = vadd.f32 0.0, %v5037
        %v5039 = vpop.f32.mrf.mxu0
        %v5040 = vadd.f32 0.0, %v5039
        %v5041 = vpop.f32.mrf.mxu0
        %v5042 = vpop.f32.mrf.mxu0
        %5043 = vdwg.mxu0
        %v5044 = vpack.c.bf16 %v5038, %v5038
        %v5045 = vpack.c.bf16 %v5040, %v5040
        %s5046 = scalar_lea.vmem %s11, 256
        %v5047 = vld [vmem:[%s5046] sm:$0xf]
        %v5048 = vld [vmem:[%s5046 + $0x4] sm:$0xf]
        %v5049 = vld [vmem:[%s5046 + $0x8] sm:$0xf]
        %v5050 = vld [vmem:[%s5046 + $0xc] sm:$0xf]
        %v5051 = vld [vmem:[%s5046 + $0x10] sm:$0xf]
        %v5052 = vld [vmem:[%s5046 + $0x14] sm:$0xf]
        %v5053 = vld [vmem:[%s5046 + $0x18] sm:$0xf]
        %v5054 = vld [vmem:[%s5046 + $0x1c] sm:$0xf]
        %v5055 = vld [vmem:[%s5046 + $0x20] sm:$0xf]
        %v5056 = vld [vmem:[%s5046 + $0x24] sm:$0xf]
        %v5057 = vld [vmem:[%s5046 + $0x28] sm:$0xf]
        %v5058 = vld [vmem:[%s5046 + $0x2c] sm:$0xf]
        %v5059 = vld [vmem:[%s5046 + $0x30] sm:$0xf]
        %v5060 = vld [vmem:[%s5046 + $0x34] sm:$0xf]
        %v5061 = vld [vmem:[%s5046 + $0x38] sm:$0xf]
        %v5062 = vld [vmem:[%s5046 + $0x3c] sm:$0xf]
        %v5063 = vld [vmem:[%s5046 + $0x40] sm:$0xf]
        %v5064 = vld [vmem:[%s5046 + $0x44] sm:$0xf]
        %v5065 = vld [vmem:[%s5046 + $0x48] sm:$0xf]
        %v5066 = vld [vmem:[%s5046 + $0x4c] sm:$0xf]
        %v5067 = vld [vmem:[%s5046 + $0x50] sm:$0xf]
        %v5068 = vld [vmem:[%s5046 + $0x54] sm:$0xf]
        %v5069 = vld [vmem:[%s5046 + $0x58] sm:$0xf]
        %v5070 = vld [vmem:[%s5046 + $0x5c] sm:$0xf]
        %v5071 = vld [vmem:[%s5046 + $0x60] sm:$0xf]
        %v5072 = vld [vmem:[%s5046 + $0x64] sm:$0xf]
        %v5073 = vld [vmem:[%s5046 + $0x68] sm:$0xf]
        %v5074 = vld [vmem:[%s5046 + $0x6c] sm:$0xf]
        %v5075 = vld [vmem:[%s5046 + $0x70] sm:$0xf]
        %v5076 = vld [vmem:[%s5046 + $0x74] sm:$0xf]
        %v5077 = vld [vmem:[%s5046 + $0x78] sm:$0xf]
        %v5078 = vld [vmem:[%s5046 + $0x7c] sm:$0xf]
        %v5111 = vunpack.c.l.b16 %v5047
        %v5112 = vunpack.c.l.b16 %v5048
        %v5113 = vunpack.c.l.b16 %v5049
        %v5114 = vunpack.c.l.b16 %v5050
        %v5115 = vunpack.c.l.b16 %v5051
        %v5116 = vunpack.c.l.b16 %v5052
        %v5117 = vunpack.c.l.b16 %v5053
        %v5118 = vunpack.c.l.b16 %v5054
        %v5119 = vunpack.c.l.b16 %v5055
        %v5120 = vunpack.c.l.b16 %v5056
        %v5121 = vunpack.c.l.b16 %v5057
        %v5122 = vunpack.c.l.b16 %v5058
        %v5123 = vunpack.c.l.b16 %v5059
        %v5124 = vunpack.c.l.b16 %v5060
        %v5125 = vunpack.c.l.b16 %v5061
        %v5126 = vunpack.c.l.b16 %v5062
        %v5127 = vunpack.c.l.b16 %v5063
        %v5128 = vunpack.c.l.b16 %v5064
        %v5129 = vunpack.c.l.b16 %v5065
        %v5130 = vunpack.c.l.b16 %v5066
        %v5131 = vunpack.c.l.b16 %v5067
        %v5132 = vunpack.c.l.b16 %v5068
        %v5133 = vunpack.c.l.b16 %v5069
        %v5134 = vunpack.c.l.b16 %v5070
        %v5135 = vunpack.c.l.b16 %v5071
        %v5136 = vunpack.c.l.b16 %v5072
        %v5137 = vunpack.c.l.b16 %v5073
        %v5138 = vunpack.c.l.b16 %v5074
        %v5139 = vunpack.c.l.b16 %v5075
        %v5140 = vunpack.c.l.b16 %v5076
        %v5141 = vunpack.c.l.b16 %v5077
        %v5142 = vunpack.c.l.b16 %v5078
        %v5143 = vpack.c.b16 %v5112, %v5111
        %v5144 = vpack.c.b16 %v5114, %v5113
        %v5145 = vpack.c.b16 %v5116, %v5115
        %v5146 = vpack.c.b16 %v5118, %v5117
        %v5147 = vpack.c.b16 %v5120, %v5119
        %v5148 = vpack.c.b16 %v5122, %v5121
        %v5149 = vpack.c.b16 %v5124, %v5123
        %v5150 = vpack.c.b16 %v5126, %v5125
        %v5151 = vpack.c.b16 %v5128, %v5127
        %v5152 = vpack.c.b16 %v5130, %v5129
        %v5153 = vpack.c.b16 %v5132, %v5131
        %v5154 = vpack.c.b16 %v5134, %v5133
        %v5155 = vpack.c.b16 %v5136, %v5135
        %v5156 = vpack.c.b16 %v5138, %v5137
        %v5157 = vpack.c.b16 %v5140, %v5139
        %v5158 = vpack.c.b16 %v5142, %v5141
        %5175 = vmatprep.subr.bf16.mxu0 0
        %5176 = vmatpush1.bf16.msra.mxu0 %v5150
        %5177 = vmatprep.subr.bf16.mxu0 0
        %5178 = vmatpush1.bf16.msra.mxu0 %v5149
        %5179 = vmatprep.subr.bf16.mxu0 0
        %5180 = vmatpush1.bf16.msra.mxu0 %v5148
        %5181 = vmatprep.subr.bf16.mxu0 0
        %5182 = vmatpush1.bf16.msra.mxu0 %v5147
        %5183 = vmatprep.subr.bf16.mxu0 0
        %5184 = vmatpush1.bf16.msra.mxu0 %v5146
        %5185 = vmatprep.subr.bf16.mxu0 0
        %5186 = vmatpush1.bf16.msra.mxu0 %v5145
        %5187 = vmatprep.subr.bf16.mxu0 0
        %5188 = vmatpush1.bf16.msra.mxu0 %v5144
        %5189 = vmatprep.subr.bf16.mxu0 0
        %5190 = vmatpush1.bf16.msra.mxu0 %v5143
        %5191 = vmatprep.subr.bf16.mxu0 0
        %5192 = vmatpush2.bf16.msra.mxu0 %v5158
        %5193 = vmatprep.subr.bf16.mxu0 0
        %5194 = vmatpush2.bf16.msra.mxu0 %v5157
        %5195 = vmatprep.subr.bf16.mxu0 0
        %5196 = vmatpush2.bf16.msra.mxu0 %v5156
        %5197 = vmatprep.subr.bf16.mxu0 0
        %5198 = vmatpush2.bf16.msra.mxu0 %v5155
        %5199 = vmatprep.subr.bf16.mxu0 0
        %5200 = vmatpush2.bf16.msra.mxu0 %v5154
        %5201 = vmatprep.subr.bf16.mxu0 0
        %5202 = vmatpush2.bf16.msra.mxu0 %v5153
        %5203 = vmatprep.subr.bf16.mxu0 0
        %5204 = vmatpush2.bf16.msra.mxu0 %v5152
        %5205 = vmatprep.subr.bf16.mxu0 0
        %5206 = vmatpush2.bf16.msra.mxu0 %v5151
        %5207 = vmatprep.mubr.bf16.mxu0 %v5045
        %5208 = vmatmul.mubr.bf16.gmra.mxu0 %v5044
        %v5209 = vpop.f32.mrf.mxu0
        %v5210 = vadd.f32 0.0, %v5209
        %v5211 = vpop.f32.mrf.mxu0
        %v5212 = vpop.f32.mrf.mxu0
        %v5213 = vpop.f32.mrf.mxu0
        %5214 = vdwg.mxu0
        %v5215 = vadd.f32 %v4993, %v5210
        %s5216 = scalar_lea.vmem %s10, 6
        %v5217 = vld [vmem:[%s5216] sm:$0x3]
        %v5219 = vsel %vm4559, %v5217, 0
        %5221 = vmatprep.subr.bf16.mxu0 0
        %5222 = vmatpush1.bf16.msra.mxu0 0
        %5223 = vmatprep.subr.bf16.mxu0 0
        %5224 = vmatpush1.bf16.msra.mxu0 0
        %5225 = vmatprep.subr.bf16.mxu0 0
        %5226 = vmatpush1.bf16.msra.mxu0 0
        %5227 = vmatprep.subr.bf16.mxu0 0
        %5228 = vmatpush1.bf16.msra.mxu0 0
        %5229 = vmatprep.subr.bf16.mxu0 0
        %5230 = vmatpush1.bf16.msra.mxu0 0
        %5231 = vmatprep.subr.bf16.mxu0 0
        %5232 = vmatpush1.bf16.msra.mxu0 0
        %5233 = vmatprep.subr.bf16.mxu0 0
        %5234 = vmatpush1.bf16.msra.mxu0 0
        %5235 = vmatprep.subr.bf16.mxu0 %v4568
        %5236 = vmatpush1.bf16.msra.mxu0 %v4565
        %5237 = vmatprep.subr.bf16.mxu0 0
        %5238 = vmatpush2.bf16.msra.mxu0 0
        %5239 = vmatprep.subr.bf16.mxu0 0
        %5240 = vmatpush2.bf16.msra.mxu0 0
        %5241 = vmatprep.subr.bf16.mxu0 0
        %5242 = vmatpush2.bf16.msra.mxu0 0
        %5243 = vmatprep.subr.bf16.mxu0 0
        %5244 = vmatpush2.bf16.msra.mxu0 0
        %5245 = vmatprep.subr.bf16.mxu0 0
        %5246 = vmatpush2.bf16.msra.mxu0 0
        %5247 = vmatprep.subr.bf16.mxu0 0
        %5248 = vmatpush2.bf16.msra.mxu0 0
        %5249 = vmatprep.subr.bf16.mxu0 0
        %5250 = vmatpush2.bf16.msra.mxu0 0
        %5251 = vmatprep.subr.bf16.mxu0 0
        %5252 = vmatpush2.bf16.msra.mxu0 0
        %5253 = vmatprep.mubr.bf16.mxu0 0
        %5254 = vmatmul.mubr.bf16.gmra.mxu0 %v5219
        %v5255 = vpop.f32.mrf.mxu0
        %v5256 = vadd.f32 0.0, %v5255
        %v5257 = vpop.f32.mrf.mxu0
        %v5258 = vadd.f32 0.0, %v5257
        %v5259 = vpop.f32.mrf.mxu0
        %v5260 = vpop.f32.mrf.mxu0
        %5261 = vdwg.mxu0
        %v5262 = vpack.c.bf16 %v5256, %v5256
        %v5263 = vpack.c.bf16 %v5258, %v5258
        %s5264 = scalar_lea.vmem %s11, 384
        %v5265 = vld [vmem:[%s5264] sm:$0xf]
        %v5266 = vld [vmem:[%s5264 + $0x4] sm:$0xf]
        %v5267 = vld [vmem:[%s5264 + $0x8] sm:$0xf]
        %v5268 = vld [vmem:[%s5264 + $0xc] sm:$0xf]
        %v5269 = vld [vmem:[%s5264 + $0x10] sm:$0xf]
        %v5270 = vld [vmem:[%s5264 + $0x14] sm:$0xf]
        %v5271 = vld [vmem:[%s5264 + $0x18] sm:$0xf]
        %v5272 = vld [vmem:[%s5264 + $0x1c] sm:$0xf]
        %v5273 = vld [vmem:[%s5264 + $0x20] sm:$0xf]
        %v5274 = vld [vmem:[%s5264 + $0x24] sm:$0xf]
        %v5275 = vld [vmem:[%s5264 + $0x28] sm:$0xf]
        %v5276 = vld [vmem:[%s5264 + $0x2c] sm:$0xf]
        %v5277 = vld [vmem:[%s5264 + $0x30] sm:$0xf]
        %v5278 = vld [vmem:[%s5264 + $0x34] sm:$0xf]
        %v5279 = vld [vmem:[%s5264 + $0x38] sm:$0xf]
        %v5280 = vld [vmem:[%s5264 + $0x3c] sm:$0xf]
        %v5281 = vld [vmem:[%s5264 + $0x40] sm:$0xf]
        %v5282 = vld [vmem:[%s5264 + $0x44] sm:$0xf]
        %v5283 = vld [vmem:[%s5264 + $0x48] sm:$0xf]
        %v5284 = vld [vmem:[%s5264 + $0x4c] sm:$0xf]
        %v5285 = vld [vmem:[%s5264 + $0x50] sm:$0xf]
        %v5286 = vld [vmem:[%s5264 + $0x54] sm:$0xf]
        %v5287 = vld [vmem:[%s5264 + $0x58] sm:$0xf]
        %v5288 = vld [vmem:[%s5264 + $0x5c] sm:$0xf]
        %v5289 = vld [vmem:[%s5264 + $0x60] sm:$0xf]
        %v5290 = vld [vmem:[%s5264 + $0x64] sm:$0xf]
        %v5291 = vld [vmem:[%s5264 + $0x68] sm:$0xf]
        %v5292 = vld [vmem:[%s5264 + $0x6c] sm:$0xf]
        %v5293 = vld [vmem:[%s5264 + $0x70] sm:$0xf]
        %v5294 = vld [vmem:[%s5264 + $0x74] sm:$0xf]
        %v5295 = vld [vmem:[%s5264 + $0x78] sm:$0xf]
        %v5296 = vld [vmem:[%s5264 + $0x7c] sm:$0xf]
        %v5329 = vunpack.c.l.b16 %v5265
        %v5330 = vunpack.c.l.b16 %v5266
        %v5331 = vunpack.c.l.b16 %v5267
        %v5332 = vunpack.c.l.b16 %v5268
        %v5333 = vunpack.c.l.b16 %v5269
        %v5334 = vunpack.c.l.b16 %v5270
        %v5335 = vunpack.c.l.b16 %v5271
        %v5336 = vunpack.c.l.b16 %v5272
        %v5337 = vunpack.c.l.b16 %v5273
        %v5338 = vunpack.c.l.b16 %v5274
        %v5339 = vunpack.c.l.b16 %v5275
        %v5340 = vunpack.c.l.b16 %v5276
        %v5341 = vunpack.c.l.b16 %v5277
        %v5342 = vunpack.c.l.b16 %v5278
        %v5343 = vunpack.c.l.b16 %v5279
        %v5344 = vunpack.c.l.b16 %v5280
        %v5345 = vunpack.c.l.b16 %v5281
        %v5346 = vunpack.c.l.b16 %v5282
        %v5347 = vunpack.c.l.b16 %v5283
        %v5348 = vunpack.c.l.b16 %v5284
        %v5349 = vunpack.c.l.b16 %v5285
        %v5350 = vunpack.c.l.b16 %v5286
        %v5351 = vunpack.c.l.b16 %v5287
        %v5352 = vunpack.c.l.b16 %v5288
        %v5353 = vunpack.c.l.b16 %v5289
        %v5354 = vunpack.c.l.b16 %v5290
        %v5355 = vunpack.c.l.b16 %v5291
        %v5356 = vunpack.c.l.b16 %v5292
        %v5357 = vunpack.c.l.b16 %v5293
        %v5358 = vunpack.c.l.b16 %v5294
        %v5359 = vunpack.c.l.b16 %v5295
        %v5360 = vunpack.c.l.b16 %v5296
        %v5361 = vpack.c.b16 %v5330, %v5329
        %v5362 = vpack.c.b16 %v5332, %v5331
        %v5363 = vpack.c.b16 %v5334, %v5333
        %v5364 = vpack.c.b16 %v5336, %v5335
        %v5365 = vpack.c.b16 %v5338, %v5337
        %v5366 = vpack.c.b16 %v5340, %v5339
        %v5367 = vpack.c.b16 %v5342, %v5341
        %v5368 = vpack.c.b16 %v5344, %v5343
        %v5369 = vpack.c.b16 %v5346, %v5345
        %v5370 = vpack.c.b16 %v5348, %v5347
        %v5371 = vpack.c.b16 %v5350, %v5349
        %v5372 = vpack.c.b16 %v5352, %v5351
        %v5373 = vpack.c.b16 %v5354, %v5353
        %v5374 = vpack.c.b16 %v5356, %v5355
        %v5375 = vpack.c.b16 %v5358, %v5357
        %v5376 = vpack.c.b16 %v5360, %v5359
        %5393 = vmatprep.subr.bf16.mxu0 0
        %5394 = vmatpush1.bf16.msra.mxu0 %v5368
        %5395 = vmatprep.subr.bf16.mxu0 0
        %5396 = vmatpush1.bf16.msra.mxu0 %v5367
        %5397 = vmatprep.subr.bf16.mxu0 0
        %5398 = vmatpush1.bf16.msra.mxu0 %v5366
        %5399 = vmatprep.subr.bf16.mxu0 0
        %5400 = vmatpush1.bf16.msra.mxu0 %v5365
        %5401 = vmatprep.subr.bf16.mxu0 0
        %5402 = vmatpush1.bf16.msra.mxu0 %v5364
        %5403 = vmatprep.subr.bf16.mxu0 0
        %5404 = vmatpush1.bf16.msra.mxu0 %v5363
        %5405 = vmatprep.subr.bf16.mxu0 0
        %5406 = vmatpush1.bf16.msra.mxu0 %v5362
        %5407 = vmatprep.subr.bf16.mxu0 0
        %5408 = vmatpush1.bf16.msra.mxu0 %v5361
        %5409 = vmatprep.subr.bf16.mxu0 0
        %5410 = vmatpush2.bf16.msra.mxu0 %v5376
        %5411 = vmatprep.subr.bf16.mxu0 0
        %5412 = vmatpush2.bf16.msra.mxu0 %v5375
        %5413 = vmatprep.subr.bf16.mxu0 0
        %5414 = vmatpush2.bf16.msra.mxu0 %v5374
        %5415 = vmatprep.subr.bf16.mxu0 0
        %5416 = vmatpush2.bf16.msra.mxu0 %v5373
        %5417 = vmatprep.subr.bf16.mxu0 0
        %5418 = vmatpush2.bf16.msra.mxu0 %v5372
        %5419 = vmatprep.subr.bf16.mxu0 0
        %5420 = vmatpush2.bf16.msra.mxu0 %v5371
        %5421 = vmatprep.subr.bf16.mxu0 0
        %5422 = vmatpush2.bf16.msra.mxu0 %v5370
        %5423 = vmatprep.subr.bf16.mxu0 0
        %5424 = vmatpush2.bf16.msra.mxu0 %v5369
        %5425 = vmatprep.mubr.bf16.mxu0 %v5263
        %5426 = vmatmul.mubr.bf16.gmra.mxu0 %v5262
        %v5427 = vpop.f32.mrf.mxu0
        %v5428 = vadd.f32 0.0, %v5427
        %v5429 = vpop.f32.mrf.mxu0
        %v5430 = vpop.f32.mrf.mxu0
        %v5431 = vpop.f32.mrf.mxu0
        %5432 = vdwg.mxu0
        %v5433 = vadd.f32 %v5215, %v5428
        %v5434 = vld [vmem:[%s12] sm:$0x1]
        %v5436 = vlaneseq
        %v5437 = vshrl.u32 %v5436, 7
        %v5438 = vsub.s32 0, %v5437
        %v5439 = vrot.slane %v5434, %v5438
        %v5441 = vadd.f32 %v5433, %v5439
        %vm5442 = vcmp.ge.f32.partialorder %v5441, 0.0
        %v5443 = vmul.f32 %v5441, 0.2
        %v5444 = vsel %vm5442, %v5441, %v5443
        %v5445 = vld [vmem:[%s788] sm:$0x1]
        %v5446 = vld [vmem:[%s14] sm:$0x3]
        %v5447 = vld [vmem:[%s15] sm:$0x1]
        %vm5448 = vcmask 31744
        %v5450 = vsel %vm5448, %v5445, 0
        %vm5452 = vcmask 1041408
        %v5454 = vsel %vm5452, %v5446, 0
        %5456 = vmatprep.subr.bf16.mxu0 0
        %5457 = vmatpush1.bf16.msra.mxu0 0
        %5458 = vmatprep.subr.bf16.mxu0 0
        %5459 = vmatpush1.bf16.msra.mxu0 0
        %5460 = vmatprep.subr.bf16.mxu0 0
        %5461 = vmatpush1.bf16.msra.mxu0 0
        %5462 = vmatprep.subr.bf16.mxu0 0
        %5463 = vmatpush1.bf16.msra.mxu0 0
        %5464 = vmatprep.subr.bf16.mxu0 0
        %5465 = vmatpush1.bf16.msra.mxu0 0
        %5466 = vmatprep.subr.bf16.mxu0 0
        %5467 = vmatpush1.bf16.msra.mxu0 0
        %5468 = vmatprep.subr.bf16.mxu0 0
        %5469 = vmatpush1.bf16.msra.mxu0 0
        %5470 = vmatprep.subr.bf16.mxu0 0
        %5471 = vmatpush1.bf16.msra.mxu0 %v5454
        %5472 = vmatprep.subr.bf16.mxu0 0
        %5473 = vmatpush2.bf16.msra.mxu0 0
        %5474 = vmatprep.subr.bf16.mxu0 0
        %5475 = vmatpush2.bf16.msra.mxu0 0
        %5476 = vmatprep.subr.bf16.mxu0 0
        %5477 = vmatpush2.bf16.msra.mxu0 0
        %5478 = vmatprep.subr.bf16.mxu0 0
        %5479 = vmatpush2.bf16.msra.mxu0 0
        %5480 = vmatprep.subr.bf16.mxu0 0
        %5481 = vmatpush2.bf16.msra.mxu0 0
        %5482 = vmatprep.subr.bf16.mxu0 0
        %5483 = vmatpush2.bf16.msra.mxu0 0
        %5484 = vmatprep.subr.bf16.mxu0 0
        %5485 = vmatpush2.bf16.msra.mxu0 0
        %5486 = vmatprep.subr.bf16.mxu0 0
        %5487 = vmatpush2.bf16.msra.mxu0 0
        %5488 = vmatprep.mubr.bf16.mxu0 0
        %5489 = vmatmul.mubr.bf16.gmra.mxu0 %v5450
        %v5490 = vpop.f32.mrf.mxu0
        %v5491 = vadd.f32 %v5447, %v5490
        %v5492 = vpop.f32.mrf.mxu0
        %v5493 = vpop.f32.mrf.mxu0
        %v5494 = vpop.f32.mrf.mxu0
        %5495 = vdwg.mxu0
        %vm5496 = vcmp.ge.f32.partialorder %v5491, 0.0
        %v5497 = vmul.f32 %v5491, 0.2
        %v5498 = vsel %vm5496, %v5491, %v5497
        %v5499 = vpack.c.bf16 %v5498, %v5498
        %v5500 = vld [vmem:[%s16] sm:$0xf]
        %v5501 = vld [vmem:[%s16 + $0x4] sm:$0xf]
        %v5502 = vld [vmem:[%s16 + $0x8] sm:$0xf]
        %v5503 = vld [vmem:[%s16 + $0xc] sm:$0xf]
        %v5504 = vld [vmem:[%s16 + $0x10] sm:$0xf]
        %v5505 = vld [vmem:[%s16 + $0x14] sm:$0xf]
        %v5506 = vld [vmem:[%s16 + $0x18] sm:$0xf]
        %v5507 = vld [vmem:[%s16 + $0x1c] sm:$0xf]
        %v5508 = vld [vmem:[%s16 + $0x20] sm:$0xf]
        %v5509 = vld [vmem:[%s16 + $0x24] sm:$0xf]
        %v5510 = vld [vmem:[%s16 + $0x28] sm:$0xf]
        %v5511 = vld [vmem:[%s16 + $0x2c] sm:$0xf]
        %v5512 = vld [vmem:[%s16 + $0x30] sm:$0xf]
        %v5513 = vld [vmem:[%s16 + $0x34] sm:$0xf]
        %v5514 = vld [vmem:[%s16 + $0x38] sm:$0xf]
        %v5515 = vld [vmem:[%s16 + $0x3c] sm:$0xf]
        %v5516 = vld [vmem:[%s17] sm:$0x1]
        %v5533 = vunpack.c.l.b16 %v5500
        %v5534 = vunpack.c.l.b16 %v5501
        %v5535 = vunpack.c.l.b16 %v5502
        %v5536 = vunpack.c.l.b16 %v5503
        %v5537 = vunpack.c.l.b16 %v5504
        %v5538 = vunpack.c.l.b16 %v5505
        %v5539 = vunpack.c.l.b16 %v5506
        %v5540 = vunpack.c.l.b16 %v5507
        %v5541 = vunpack.c.l.b16 %v5508
        %v5542 = vunpack.c.l.b16 %v5509
        %v5543 = vunpack.c.l.b16 %v5510
        %v5544 = vunpack.c.l.b16 %v5511
        %v5545 = vunpack.c.l.b16 %v5512
        %v5546 = vunpack.c.l.b16 %v5513
        %v5547 = vunpack.c.l.b16 %v5514
        %v5548 = vunpack.c.l.b16 %v5515
        %v5549 = vpack.c.b16 %v5534, %v5533
        %v5550 = vpack.c.b16 %v5536, %v5535
        %v5551 = vpack.c.b16 %v5538, %v5537
        %v5552 = vpack.c.b16 %v5540, %v5539
        %v5553 = vpack.c.b16 %v5542, %v5541
        %v5554 = vpack.c.b16 %v5544, %v5543
        %v5555 = vpack.c.b16 %v5546, %v5545
        %v5556 = vpack.c.b16 %v5548, %v5547
        %5565 = vmatprep.subr.bf16.mxu0 0
        %5566 = vmatpush1.bf16.msra.mxu0 %v5556
        %5567 = vmatprep.subr.bf16.mxu0 0
        %5568 = vmatpush1.bf16.msra.mxu0 %v5555
        %5569 = vmatprep.subr.bf16.mxu0 0
        %5570 = vmatpush1.bf16.msra.mxu0 %v5554
        %5571 = vmatprep.subr.bf16.mxu0 0
        %5572 = vmatpush1.bf16.msra.mxu0 %v5553
        %5573 = vmatprep.subr.bf16.mxu0 0
        %5574 = vmatpush1.bf16.msra.mxu0 %v5552
        %5575 = vmatprep.subr.bf16.mxu0 0
        %5576 = vmatpush1.bf16.msra.mxu0 %v5551
        %5577 = vmatprep.subr.bf16.mxu0 0
        %5578 = vmatpush1.bf16.msra.mxu0 %v5550
        %5579 = vmatprep.subr.bf16.mxu0 0
        %5580 = vmatpush1.bf16.msra.mxu0 %v5549
        %5581 = vmatprep.subr.bf16.mxu0 0
        %5582 = vmatpush2.bf16.msra.mxu0 0
        %5583 = vmatprep.subr.bf16.mxu0 0
        %5584 = vmatpush2.bf16.msra.mxu0 0
        %5585 = vmatprep.subr.bf16.mxu0 0
        %5586 = vmatpush2.bf16.msra.mxu0 0
        %5587 = vmatprep.subr.bf16.mxu0 0
        %5588 = vmatpush2.bf16.msra.mxu0 0
        %5589 = vmatprep.subr.bf16.mxu0 0
        %5590 = vmatpush2.bf16.msra.mxu0 0
        %5591 = vmatprep.subr.bf16.mxu0 0
        %5592 = vmatpush2.bf16.msra.mxu0 0
        %5593 = vmatprep.subr.bf16.mxu0 0
        %5594 = vmatpush2.bf16.msra.mxu0 0
        %5595 = vmatprep.subr.bf16.mxu0 0
        %5596 = vmatpush2.bf16.msra.mxu0 0
        %5597 = vmatprep.mubr.bf16.mxu0 0
        %5598 = vmatmul.mubr.bf16.gmra.mxu0 %v5499
        %v5599 = vpop.f32.mrf.mxu0
        %v5600 = vadd.f32 %v5516, %v5599
        %v5601 = vpop.f32.mrf.mxu0
        %v5602 = vpop.f32.mrf.mxu0
        %v5603 = vpop.f32.mrf.mxu0
        %5604 = vdwg.mxu0
        %vm5605 = vcmp.ge.f32.partialorder %v5600, 0.0
        %v5606 = vmul.f32 %v5600, 0.2
        %v5607 = vsel %vm5605, %v5600, %v5606
        %v5608 = vpack.c.bf16 %v5607, %v5607
        %v5609 = vld [vmem:[%s19] sm:$0xf]
        %v5610 = vld [vmem:[%s19 + $0x4] sm:$0xf]
        %v5611 = vld [vmem:[%s19 + $0x8] sm:$0xf]
        %v5612 = vld [vmem:[%s19 + $0xc] sm:$0xf]
        %v5613 = vld [vmem:[%s19 + $0x10] sm:$0xf]
        %v5614 = vld [vmem:[%s19 + $0x14] sm:$0xf]
        %v5615 = vld [vmem:[%s19 + $0x18] sm:$0xf]
        %v5616 = vld [vmem:[%s19 + $0x1c] sm:$0xf]
        %v5617 = vld [vmem:[%s20] sm:$0x1]
        %v5626 = vunpack.c.l.b16 %v5609
        %v5627 = vunpack.c.l.b16 %v5610
        %v5628 = vunpack.c.l.b16 %v5611
        %v5629 = vunpack.c.l.b16 %v5612
        %v5630 = vunpack.c.l.b16 %v5613
        %v5631 = vunpack.c.l.b16 %v5614
        %v5632 = vunpack.c.l.b16 %v5615
        %v5633 = vunpack.c.l.b16 %v5616
        %v5634 = vpack.c.b16 %v5627, %v5626
        %v5635 = vpack.c.b16 %v5629, %v5628
        %v5636 = vpack.c.b16 %v5631, %v5630
        %v5637 = vpack.c.b16 %v5633, %v5632
        %v5643 = vsel %vm855, %v5608, 0
        %5645 = vmatprep.subr.bf16.mxu0 0
        %5646 = vmatpush1.bf16.msra.mxu0 0
        %5647 = vmatprep.subr.bf16.mxu0 0
        %5648 = vmatpush1.bf16.msra.mxu0 0
        %5649 = vmatprep.subr.bf16.mxu0 0
        %5650 = vmatpush1.bf16.msra.mxu0 0
        %5651 = vmatprep.subr.bf16.mxu0 0
        %5652 = vmatpush1.bf16.msra.mxu0 0
        %5653 = vmatprep.subr.bf16.mxu0 0
        %5654 = vmatpush1.bf16.msra.mxu0 %v5637
        %5655 = vmatprep.subr.bf16.mxu0 0
        %5656 = vmatpush1.bf16.msra.mxu0 %v5636
        %5657 = vmatprep.subr.bf16.mxu0 0
        %5658 = vmatpush1.bf16.msra.mxu0 %v5635
        %5659 = vmatprep.subr.bf16.mxu0 0
        %5660 = vmatpush1.bf16.msra.mxu0 %v5634
        %5661 = vmatprep.subr.bf16.mxu0 0
        %5662 = vmatpush2.bf16.msra.mxu0 0
        %5663 = vmatprep.subr.bf16.mxu0 0
        %5664 = vmatpush2.bf16.msra.mxu0 0
        %5665 = vmatprep.subr.bf16.mxu0 0
        %5666 = vmatpush2.bf16.msra.mxu0 0
        %5667 = vmatprep.subr.bf16.mxu0 0
        %5668 = vmatpush2.bf16.msra.mxu0 0
        %5669 = vmatprep.subr.bf16.mxu0 0
        %5670 = vmatpush2.bf16.msra.mxu0 0
        %5671 = vmatprep.subr.bf16.mxu0 0
        %5672 = vmatpush2.bf16.msra.mxu0 0
        %5673 = vmatprep.subr.bf16.mxu0 0
        %5674 = vmatpush2.bf16.msra.mxu0 0
        %5675 = vmatprep.subr.bf16.mxu0 0
        %5676 = vmatpush2.bf16.msra.mxu0 0
        %5677 = vmatprep.mubr.bf16.mxu0 0
        %5678 = vmatmul.mubr.bf16.gmra.mxu0 %v5643
        %v5679 = vpop.f32.mrf.mxu0
        %v5680 = vadd.f32 %v5617, %v5679
        %v5681 = vpop.f32.mrf.mxu0
        %v5682 = vpop.f32.mrf.mxu0
        %v5683 = vpop.f32.mrf.mxu0
        %5684 = vdwg.mxu0
        %v5685 = vpack.c.bf16 %v5444, %v5444
        %v5686 = vld [vmem:[%s18] sm:$0xf]
        %v5687 = vld [vmem:[%s18 + $0x4] sm:$0xf]
        %v5688 = vld [vmem:[%s18 + $0x8] sm:$0xf]
        %v5689 = vld [vmem:[%s18 + $0xc] sm:$0xf]
        %v5690 = vld [vmem:[%s18 + $0x10] sm:$0xf]
        %v5691 = vld [vmem:[%s18 + $0x14] sm:$0xf]
        %v5692 = vld [vmem:[%s18 + $0x18] sm:$0xf]
        %v5693 = vld [vmem:[%s18 + $0x1c] sm:$0xf]
        %v5694 = vld [vmem:[%s18 + $0x20] sm:$0xf]
        %v5695 = vld [vmem:[%s18 + $0x24] sm:$0xf]
        %v5696 = vld [vmem:[%s18 + $0x28] sm:$0xf]
        %v5697 = vld [vmem:[%s18 + $0x2c] sm:$0xf]
        %v5710 = vunpack.c.l.b16 %v5686
        %v5711 = vunpack.c.l.b16 %v5687
        %v5712 = vunpack.c.l.b16 %v5688
        %v5713 = vunpack.c.l.b16 %v5689
        %v5714 = vunpack.c.l.b16 %v5690
        %v5715 = vunpack.c.l.b16 %v5691
        %v5716 = vunpack.c.l.b16 %v5692
        %v5717 = vunpack.c.l.b16 %v5693
        %v5718 = vunpack.c.l.b16 %v5694
        %v5719 = vunpack.c.l.b16 %v5695
        %v5720 = vunpack.c.l.b16 %v5696
        %v5721 = vunpack.c.l.b16 %v5697
        %v5722 = vpack.c.b16 %v5711, %v5710
        %v5723 = vpack.c.b16 %v5713, %v5712
        %v5724 = vpack.c.b16 %v5715, %v5714
        %v5725 = vpack.c.b16 %v5717, %v5716
        %v5726 = vpack.c.b16 %v5719, %v5718
        %v5727 = vpack.c.b16 %v5721, %v5720
        %vm5734 = vcmask 785408
        %v5736 = vsel %vm5734, %v5685, 0
        %5738 = vmatprep.subr.bf16.mxu0 0
        %5739 = vmatpush1.bf16.msra.mxu0 0
        %5740 = vmatprep.subr.bf16.mxu0 0
        %5741 = vmatpush1.bf16.msra.mxu0 0
        %5742 = vmatprep.subr.bf16.mxu0 0
        %5743 = vmatpush1.bf16.msra.mxu0 %v5727
        %5744 = vmatprep.subr.bf16.mxu0 0
        %5745 = vmatpush1.bf16.msra.mxu0 %v5726
        %5746 = vmatprep.subr.bf16.mxu0 0
        %5747 = vmatpush1.bf16.msra.mxu0 %v5725
        %5748 = vmatprep.subr.bf16.mxu0 0
        %5749 = vmatpush1.bf16.msra.mxu0 %v5724
        %5750 = vmatprep.subr.bf16.mxu0 0
        %5751 = vmatpush1.bf16.msra.mxu0 %v5723
        %5752 = vmatprep.subr.bf16.mxu0 0
        %5753 = vmatpush1.bf16.msra.mxu0 %v5722
        %5754 = vmatprep.subr.bf16.mxu0 0
        %5755 = vmatpush2.bf16.msra.mxu0 0
        %5756 = vmatprep.subr.bf16.mxu0 0
        %5757 = vmatpush2.bf16.msra.mxu0 0
        %5758 = vmatprep.subr.bf16.mxu0 0
        %5759 = vmatpush2.bf16.msra.mxu0 0
        %5760 = vmatprep.subr.bf16.mxu0 0
        %5761 = vmatpush2.bf16.msra.mxu0 0
        %5762 = vmatprep.subr.bf16.mxu0 0
        %5763 = vmatpush2.bf16.msra.mxu0 0
        %5764 = vmatprep.subr.bf16.mxu0 0
        %5765 = vmatpush2.bf16.msra.mxu0 0
        %5766 = vmatprep.subr.bf16.mxu0 0
        %5767 = vmatpush2.bf16.msra.mxu0 0
        %5768 = vmatprep.subr.bf16.mxu0 0
        %5769 = vmatpush2.bf16.msra.mxu0 0
        %5770 = vmatprep.mubr.bf16.mxu0 0
        %5771 = vmatmul.mubr.bf16.gmra.mxu0 %v5736
        %v5772 = vpop.f32.mrf.mxu0
        %v5773 = vadd.f32 0.0, %v5772
        %v5774 = vpop.f32.mrf.mxu0
        %v5775 = vpop.f32.mrf.mxu0
        %v5776 = vpop.f32.mrf.mxu0
        %5777 = vdwg.mxu0
        %v5778 = vadd.f32 %v5680, %v5773
        %s5779 = scalar_lea.vmem %s18, 48
        %v5780 = vld [vmem:[%s5779] sm:$0xf]
        %v5781 = vld [vmem:[%s5779 + $0x4] sm:$0xf]
        %v5782 = vld [vmem:[%s5779 + $0x8] sm:$0xf]
        %v5783 = vld [vmem:[%s5779 + $0xc] sm:$0xf]
        %v5784 = vld [vmem:[%s5779 + $0x10] sm:$0xf]
        %v5785 = vld [vmem:[%s5779 + $0x14] sm:$0xf]
        %v5786 = vld [vmem:[%s5779 + $0x18] sm:$0xf]
        %v5787 = vld [vmem:[%s5779 + $0x1c] sm:$0xf]
        %v5788 = vld [vmem:[%s5779 + $0x20] sm:$0xf]
        %v5789 = vld [vmem:[%s5779 + $0x24] sm:$0xf]
        %v5790 = vld [vmem:[%s5779 + $0x28] sm:$0xf]
        %v5791 = vld [vmem:[%s5779 + $0x2c] sm:$0xf]
        %v5792 = vshrl.u32 %v5685, 16
        %v5806 = vunpack.c.l.b16 %v5780
        %v5807 = vunpack.c.l.b16 %v5781
        %v5808 = vunpack.c.l.b16 %v5782
        %v5809 = vunpack.c.l.b16 %v5783
        %v5810 = vunpack.c.l.b16 %v5784
        %v5811 = vunpack.c.l.b16 %v5785
        %v5812 = vunpack.c.l.b16 %v5786
        %v5813 = vunpack.c.l.b16 %v5787
        %v5814 = vunpack.c.l.b16 %v5788
        %v5815 = vunpack.c.l.b16 %v5789
        %v5816 = vunpack.c.l.b16 %v5790
        %v5817 = vunpack.c.l.b16 %v5791
        %v5818 = vpack.c.b16 %v5807, %v5806
        %v5819 = vpack.c.b16 %v5809, %v5808
        %v5820 = vpack.c.b16 %v5811, %v5810
        %v5821 = vpack.c.b16 %v5813, %v5812
        %v5822 = vpack.c.b16 %v5815, %v5814
        %v5823 = vpack.c.b16 %v5817, %v5816
        %v5831 = vsel %vm5734, %v5792, 0
        %5833 = vmatprep.subr.bf16.mxu0 0
        %5834 = vmatpush1.bf16.msra.mxu0 0
        %5835 = vmatprep.subr.bf16.mxu0 0
        %5836 = vmatpush1.bf16.msra.mxu0 0
        %5837 = vmatprep.subr.bf16.mxu0 0
        %5838 = vmatpush1.bf16.msra.mxu0 %v5823
        %5839 = vmatprep.subr.bf16.mxu0 0
        %5840 = vmatpush1.bf16.msra.mxu0 %v5822
        %5841 = vmatprep.subr.bf16.mxu0 0
        %5842 = vmatpush1.bf16.msra.mxu0 %v5821
        %5843 = vmatprep.subr.bf16.mxu0 0
        %5844 = vmatpush1.bf16.msra.mxu0 %v5820
        %5845 = vmatprep.subr.bf16.mxu0 0
        %5846 = vmatpush1.bf16.msra.mxu0 %v5819
        %5847 = vmatprep.subr.bf16.mxu0 0
        %5848 = vmatpush1.bf16.msra.mxu0 %v5818
        %5849 = vmatprep.subr.bf16.mxu0 0
        %5850 = vmatpush2.bf16.msra.mxu0 0
        %5851 = vmatprep.subr.bf16.mxu0 0
        %5852 = vmatpush2.bf16.msra.mxu0 0
        %5853 = vmatprep.subr.bf16.mxu0 0
        %5854 = vmatpush2.bf16.msra.mxu0 0
        %5855 = vmatprep.subr.bf16.mxu0 0
        %5856 = vmatpush2.bf16.msra.mxu0 0
        %5857 = vmatprep.subr.bf16.mxu0 0
        %5858 = vmatpush2.bf16.msra.mxu0 0
        %5859 = vmatprep.subr.bf16.mxu0 0
        %5860 = vmatpush2.bf16.msra.mxu0 0
        %5861 = vmatprep.subr.bf16.mxu0 0
        %5862 = vmatpush2.bf16.msra.mxu0 0
        %5863 = vmatprep.subr.bf16.mxu0 0
        %5864 = vmatpush2.bf16.msra.mxu0 0
        %5865 = vmatprep.mubr.bf16.mxu0 0
        %5866 = vmatmul.mubr.bf16.gmra.mxu0 %v5831
        %v5867 = vpop.f32.mrf.mxu0
        %v5868 = vadd.f32 0.0, %v5867
        %v5869 = vpop.f32.mrf.mxu0
        %v5870 = vpop.f32.mrf.mxu0
        %v5871 = vpop.f32.mrf.mxu0
        %5872 = vdwg.mxu0
        %v5873 = vadd.f32 %v5778, %v5868
        %s5874 = scalar_lea.vmem %s18, 96
        %v5875 = vld [vmem:[%s5874] sm:$0xf]
        %v5876 = vld [vmem:[%s5874 + $0x4] sm:$0xf]
        %v5877 = vld [vmem:[%s5874 + $0x8] sm:$0xf]
        %v5878 = vld [vmem:[%s5874 + $0xc] sm:$0xf]
        %v5879 = vld [vmem:[%s5874 + $0x10] sm:$0xf]
        %v5880 = vld [vmem:[%s5874 + $0x14] sm:$0xf]
        %v5881 = vld [vmem:[%s5874 + $0x18] sm:$0xf]
        %v5882 = vld [vmem:[%s5874 + $0x1c] sm:$0xf]
        %v5883 = vld [vmem:[%s5874 + $0x20] sm:$0xf]
        %v5884 = vld [vmem:[%s5874 + $0x24] sm:$0xf]
        %v5885 = vld [vmem:[%s5874 + $0x28] sm:$0xf]
        %v5886 = vld [vmem:[%s5874 + $0x2c] sm:$0xf]
        %v5888 = vrot.slane %v5685, 1
        %v5901 = vunpack.c.l.b16 %v5875
        %v5902 = vunpack.c.l.b16 %v5876
        %v5903 = vunpack.c.l.b16 %v5877
        %v5904 = vunpack.c.l.b16 %v5878
        %v5905 = vunpack.c.l.b16 %v5879
        %v5906 = vunpack.c.l.b16 %v5880
        %v5907 = vunpack.c.l.b16 %v5881
        %v5908 = vunpack.c.l.b16 %v5882
        %v5909 = vunpack.c.l.b16 %v5883
        %v5910 = vunpack.c.l.b16 %v5884
        %v5911 = vunpack.c.l.b16 %v5885
        %v5912 = vunpack.c.l.b16 %v5886
        %v5913 = vpack.c.b16 %v5902, %v5901
        %v5914 = vpack.c.b16 %v5904, %v5903
        %v5915 = vpack.c.b16 %v5906, %v5905
        %v5916 = vpack.c.b16 %v5908, %v5907
        %v5917 = vpack.c.b16 %v5910, %v5909
        %v5918 = vpack.c.b16 %v5912, %v5911
        %v5926 = vsel %vm5734, %v5888, 0
        %5928 = vmatprep.subr.bf16.mxu0 0
        %5929 = vmatpush1.bf16.msra.mxu0 0
        %5930 = vmatprep.subr.bf16.mxu0 0
        %5931 = vmatpush1.bf16.msra.mxu0 0
        %5932 = vmatprep.subr.bf16.mxu0 0
        %5933 = vmatpush1.bf16.msra.mxu0 %v5918
        %5934 = vmatprep.subr.bf16.mxu0 0
        %5935 = vmatpush1.bf16.msra.mxu0 %v5917
        %5936 = vmatprep.subr.bf16.mxu0 0
        %5937 = vmatpush1.bf16.msra.mxu0 %v5916
        %5938 = vmatprep.subr.bf16.mxu0 0
        %5939 = vmatpush1.bf16.msra.mxu0 %v5915
        %5940 = vmatprep.subr.bf16.mxu0 0
        %5941 = vmatpush1.bf16.msra.mxu0 %v5914
        %5942 = vmatprep.subr.bf16.mxu0 0
        %5943 = vmatpush1.bf16.msra.mxu0 %v5913
        %5944 = vmatprep.subr.bf16.mxu0 0
        %5945 = vmatpush2.bf16.msra.mxu0 0
        %5946 = vmatprep.subr.bf16.mxu0 0
        %5947 = vmatpush2.bf16.msra.mxu0 0
        %5948 = vmatprep.subr.bf16.mxu0 0
        %5949 = vmatpush2.bf16.msra.mxu0 0
        %5950 = vmatprep.subr.bf16.mxu0 0
        %5951 = vmatpush2.bf16.msra.mxu0 0
        %5952 = vmatprep.subr.bf16.mxu0 0
        %5953 = vmatpush2.bf16.msra.mxu0 0
        %5954 = vmatprep.subr.bf16.mxu0 0
        %5955 = vmatpush2.bf16.msra.mxu0 0
        %5956 = vmatprep.subr.bf16.mxu0 0
        %5957 = vmatpush2.bf16.msra.mxu0 0
        %5958 = vmatprep.subr.bf16.mxu0 0
        %5959 = vmatpush2.bf16.msra.mxu0 0
        %5960 = vmatprep.mubr.bf16.mxu0 0
        %5961 = vmatmul.mubr.bf16.gmra.mxu0 %v5926
        %v5962 = vpop.f32.mrf.mxu0
        %v5963 = vadd.f32 0.0, %v5962
        %v5964 = vpop.f32.mrf.mxu0
        %v5965 = vpop.f32.mrf.mxu0
        %v5966 = vpop.f32.mrf.mxu0
        %5967 = vdwg.mxu0
        %v5968 = vadd.f32 %v5873, %v5963
        %vm5969 = vcmp.ge.f32.partialorder %v5968, 0.0
        %v5970 = vmul.f32 %v5968, 0.2
        %v5971 = vsel %vm5969, %v5968, %v5970
        %v5972 = vpack.c.bf16 %v5971, %v5971
        %v5973 = vld [vmem:[%s21] sm:$0xf]
        %v5974 = vld [vmem:[%s21 + $0x4] sm:$0xf]
        %v5975 = vld [vmem:[%s21 + $0x8] sm:$0xf]
        %v5976 = vld [vmem:[%s21 + $0xc] sm:$0xf]
        %v5977 = vld [vmem:[%s21 + $0x10] sm:$0xf]
        %v5978 = vld [vmem:[%s21 + $0x14] sm:$0xf]
        %v5979 = vld [vmem:[%s21 + $0x18] sm:$0xf]
        %v5980 = vld [vmem:[%s21 + $0x1c] sm:$0xf]
        %v5981 = vld [vmem:[%s21 + $0x20] sm:$0xf]
        %v5982 = vld [vmem:[%s21 + $0x24] sm:$0xf]
        %v5983 = vld [vmem:[%s21 + $0x28] sm:$0xf]
        %v5984 = vld [vmem:[%s21 + $0x2c] sm:$0xf]
        %v5985 = vld [vmem:[%s21 + $0x30] sm:$0xf]
        %v5986 = vld [vmem:[%s21 + $0x34] sm:$0xf]
        %v5987 = vld [vmem:[%s21 + $0x38] sm:$0xf]
        %v5988 = vld [vmem:[%s21 + $0x3c] sm:$0xf]
        %v5989 = vld [vmem:[%s22] sm:$0x1]
        %v6006 = vunpack.c.l.b16 %v5973
        %v6007 = vunpack.c.l.b16 %v5974
        %v6008 = vunpack.c.l.b16 %v5975
        %v6009 = vunpack.c.l.b16 %v5976
        %v6010 = vunpack.c.l.b16 %v5977
        %v6011 = vunpack.c.l.b16 %v5978
        %v6012 = vunpack.c.l.b16 %v5979
        %v6013 = vunpack.c.l.b16 %v5980
        %v6014 = vunpack.c.l.b16 %v5981
        %v6015 = vunpack.c.l.b16 %v5982
        %v6016 = vunpack.c.l.b16 %v5983
        %v6017 = vunpack.c.l.b16 %v5984
        %v6018 = vunpack.c.l.b16 %v5985
        %v6019 = vunpack.c.l.b16 %v5986
        %v6020 = vunpack.c.l.b16 %v5987
        %v6021 = vunpack.c.l.b16 %v5988
        %v6022 = vpack.c.b16 %v6007, %v6006
        %v6023 = vpack.c.b16 %v6009, %v6008
        %v6024 = vpack.c.b16 %v6011, %v6010
        %v6025 = vpack.c.b16 %v6013, %v6012
        %v6026 = vpack.c.b16 %v6015, %v6014
        %v6027 = vpack.c.b16 %v6017, %v6016
        %v6028 = vpack.c.b16 %v6019, %v6018
        %v6029 = vpack.c.b16 %v6021, %v6020
        %6038 = vmatprep.subr.bf16.mxu0 0
        %6039 = vmatpush1.bf16.msra.mxu0 %v6029
        %6040 = vmatprep.subr.bf16.mxu0 0
        %6041 = vmatpush1.bf16.msra.mxu0 %v6028
        %6042 = vmatprep.subr.bf16.mxu0 0
        %6043 = vmatpush1.bf16.msra.mxu0 %v6027
        %6044 = vmatprep.subr.bf16.mxu0 0
        %6045 = vmatpush1.bf16.msra.mxu0 %v6026
        %6046 = vmatprep.subr.bf16.mxu0 0
        %6047 = vmatpush1.bf16.msra.mxu0 %v6025
        %6048 = vmatprep.subr.bf16.mxu0 0
        %6049 = vmatpush1.bf16.msra.mxu0 %v6024
        %6050 = vmatprep.subr.bf16.mxu0 0
        %6051 = vmatpush1.bf16.msra.mxu0 %v6023
        %6052 = vmatprep.subr.bf16.mxu0 0
        %6053 = vmatpush1.bf16.msra.mxu0 %v6022
        %6054 = vmatprep.subr.bf16.mxu0 0
        %6055 = vmatpush2.bf16.msra.mxu0 0
        %6056 = vmatprep.subr.bf16.mxu0 0
        %6057 = vmatpush2.bf16.msra.mxu0 0
        %6058 = vmatprep.subr.bf16.mxu0 0
        %6059 = vmatpush2.bf16.msra.mxu0 0
        %6060 = vmatprep.subr.bf16.mxu0 0
        %6061 = vmatpush2.bf16.msra.mxu0 0
        %6062 = vmatprep.subr.bf16.mxu0 0
        %6063 = vmatpush2.bf16.msra.mxu0 0
        %6064 = vmatprep.subr.bf16.mxu0 0
        %6065 = vmatpush2.bf16.msra.mxu0 0
        %6066 = vmatprep.subr.bf16.mxu0 0
        %6067 = vmatpush2.bf16.msra.mxu0 0
        %6068 = vmatprep.subr.bf16.mxu0 0
        %6069 = vmatpush2.bf16.msra.mxu0 0
        %6070 = vmatprep.mubr.bf16.mxu0 0
        %6071 = vmatmul.mubr.bf16.gmra.mxu0 %v5972
        %v6072 = vpop.f32.mrf.mxu0
        %v6073 = vadd.f32 %v5989, %v6072
        %v6074 = vpop.f32.mrf.mxu0
        %v6075 = vpop.f32.mrf.mxu0
        %v6076 = vpop.f32.mrf.mxu0
        %6077 = vdwg.mxu0
        %vm6078 = vcmp.ge.f32.partialorder %v6073, 0.0
        %v6079 = vmul.f32 %v6073, 0.2
        %v6080 = vsel %vm6078, %v6073, %v6079
        %v6081 = vpack.c.bf16 %v6080, %v6080
        %v6082 = vld [vmem:[%s23] sm:$0xf]
        %v6083 = vld [vmem:[%s23 + $0x4] sm:$0xf]
        %v6084 = vld [vmem:[%s23 + $0x8] sm:$0xf]
        %v6085 = vld [vmem:[%s23 + $0xc] sm:$0xf]
        %v6086 = vld [vmem:[#allocation2] sm:$0x1]
        %v6091 = vunpack.c.l.b16 %v6082
        %v6092 = vunpack.c.l.b16 %v6083
        %v6093 = vunpack.c.l.b16 %v6084
        %v6094 = vunpack.c.l.b16 %v6085
        %v6095 = vpack.c.b16 %v6092, %v6091
        %v6096 = vpack.c.b16 %v6094, %v6093
        %v6100 = vsel %vm2207, %v6081, 0
        %6102 = vmatprep.subr.bf16.mxu0 0
        %6103 = vmatpush1.bf16.msra.mxu0 0
        %6104 = vmatprep.subr.bf16.mxu0 0
        %6105 = vmatpush1.bf16.msra.mxu0 0
        %6106 = vmatprep.subr.bf16.mxu0 0
        %6107 = vmatpush1.bf16.msra.mxu0 0
        %6108 = vmatprep.subr.bf16.mxu0 0
        %6109 = vmatpush1.bf16.msra.mxu0 0
        %6110 = vmatprep.subr.bf16.mxu0 0
        %6111 = vmatpush1.bf16.msra.mxu0 0
        %6112 = vmatprep.subr.bf16.mxu0 0
        %6113 = vmatpush1.bf16.msra.mxu0 0
        %6114 = vmatprep.subr.bf16.mxu0 0
        %6115 = vmatpush1.bf16.msra.mxu0 %v6096
        %6116 = vmatprep.subr.bf16.mxu0 0
        %6117 = vmatpush1.bf16.msra.mxu0 %v6095
        %6118 = vmatprep.subr.bf16.mxu0 0
        %6119 = vmatpush2.bf16.msra.mxu0 0
        %6120 = vmatprep.subr.bf16.mxu0 0
        %6121 = vmatpush2.bf16.msra.mxu0 0
        %6122 = vmatprep.subr.bf16.mxu0 0
        %6123 = vmatpush2.bf16.msra.mxu0 0
        %6124 = vmatprep.subr.bf16.mxu0 0
        %6125 = vmatpush2.bf16.msra.mxu0 0
        %6126 = vmatprep.subr.bf16.mxu0 0
        %6127 = vmatpush2.bf16.msra.mxu0 0
        %6128 = vmatprep.subr.bf16.mxu0 0
        %6129 = vmatpush2.bf16.msra.mxu0 0
        %6130 = vmatprep.subr.bf16.mxu0 0
        %6131 = vmatpush2.bf16.msra.mxu0 0
        %6132 = vmatprep.subr.bf16.mxu0 0
        %6133 = vmatpush2.bf16.msra.mxu0 0
        %6134 = vmatprep.mubr.bf16.mxu0 0
        %6135 = vmatmul.mubr.bf16.gmra.mxu0 %v6100
        %v6136 = vpop.f32.mrf.mxu0
        %v6137 = vadd.f32 %v6086, %v6136
        %v6138 = vpop.f32.mrf.mxu0
        %v6139 = vpop.f32.mrf.mxu0
        %v6140 = vpop.f32.mrf.mxu0
        %6141 = vdwg.mxu0
        %v6142 = vsub.f32 0.0, %v6137
        %v6143 = vmul.f32 %v6142, 1.442695
        %v6144 = vpow.pop %v6143
        %v6145 = vadd.f32 %v6144, 1.0
        %v6146 = vrcp.pop %v6145
        %v6147 = vmul.f32 1.0, %v6146
        %vm6148 = vcmask 0
        %6149 = vst.msk [vmem:[%s791] sm:$0x1] %vm6148, %v6147
        %p6150 = scmp.lt.s32.totalorder %s39, 1
        %s6151 = scalar_select %p6150, %s39, 1
        %s6152 = scalar_lea.vmem %s25, %s6151
        // Predicated region
        $region125: #{multi_disc_forward.1} parent=119 // pred_check
          %p6153 = pneg %p592
        $region126: #{multi_disc_forward.1} parent=119 // pred_check_branch
          %6155 = sbr.rel (%p6153) target = $region128
        $region127: #{multi_disc_forward.1} parent=119 // pred_region
          _
        $region128: #{multi_disc_forward.1} parent=119 // pred_fallthru
          _
      $region120: #{multi_disc_forward.1} parent=5 // pred_fallthru
        _
      %p6156 = scmp.le.s32.totalorder 2, %s34
      // Predicated region
      $region129: #{multi_disc_forward.1} parent=5 // pred_check
        %p6157 = pneg %p6156
      $region130: #{multi_disc_forward.1} parent=5 // pred_check_branch
        %6159 = sbr.rel (%p6157) target = $region132
      $region131: #{multi_disc_forward.1} parent=5 // pred_region
        %s6160 = ssub.s32 %s34, 2
        // Predicated region
        $region133: #{multi_disc_forward.1} parent=131 // pred_check
          %p6161 = pneg %p598
        $region134: #{multi_disc_forward.1} parent=131 // pred_check_branch
          %6163 = sbr.rel (%p6161) target = $region136
        $region135: #{multi_disc_forward.1} parent=131 // pred_region
          %p6164 = scmp.lt.s32.totalorder %s40, 1
          %s6165 = scalar_select %p6164, %s40, 1
          %s6166 = scalar_lea.vmem %s25, %s6165
        $region136: #{multi_disc_forward.1} parent=131 // pred_fallthru
          _
      $region132: #{multi_disc_forward.1} parent=5 // pred_fallthru
        _
    $region6: #{multi_disc_forward.1} parent=1 // loop_footer
      %s38 = sadd.s32 1, %s34
    $region7: #{multi_disc_forward.1} parent=1 // loop_footer_branch
      %33 = sbr.rel target = $region3
    $region8: #{multi_disc_forward.1} parent=1 // loop_exit
      _
    %6167 = vsyncpa [#allocation4], 1
    %s6168 = scalar_lea.sflag [#allocation4], 1
    %6169 = vsyncpa %s6168, 1

</llo_original>
